<compile_context>
chip_gen: v5e
topology: v5e:2x2
jax: 0.10.0
libtpu: 0.0.40
codegen_flags: <defaults>
</compile_context>

<pallas_src>
import functools

import jax
import jax.numpy as jnp
from jax.experimental import pallas as pl
from jax.experimental.pallas import tpu as pltpu


def _zero_halo(ref, H, W, C):
    """Zero only the 1-pixel halo ring of a (H+2, W+2, C) scratch ref."""
    ref[0:1, :, :] = jnp.zeros((1, W + 2, C), jnp.float32)
    ref[H + 1:H + 2, :, :] = jnp.zeros((1, W + 2, C), jnp.float32)
    ref[:, 0:1, :] = jnp.zeros((H + 2, 1, C), jnp.float32)
    ref[:, W + 1:W + 2, :] = jnp.zeros((H + 2, 1, C), jnp.float32)


def _im2col(ref, H, W, C):
    """Gather the 9 shifted 3x3 taps from a padded (H+2, W+2, C) ref into one
    (H*W, 9*C) matrix. Column order (tap-major, channel-minor) matches the
    HWIO weight reshape done in the wrapper."""
    taps = [ref[dh:dh + H, dw:dw + W, :] for dh in range(3) for dw in range(3)]
    return jnp.concatenate(taps, axis=-1).reshape(H * W, 9 * C)


def _residual_block_kernel(x_ref, w1_ref, w2_ref, sb_ref, out_ref,
                           xpad_ref, mid_ref, *, H, W, Cin, Cout, mxu_dtype):
    """One batch element per grid step.

    x_ref   : (1, H, W, Cin)       unpadded input tile (f32)
    w1_ref  : (9*Cin, Cout)        conv1 weights, (kh,kw,cin)-flattened HWIO
    w2_ref  : (9*Cout, Cout)       conv2 weights
    sb_ref  : (4, Cout)            rows: [s1, b1, s2, b2] folded BN affine (f32)
    out_ref : (1, H, W, Cout)
    xpad_ref: (H+2, W+2, Cin)      VMEM scratch, zero-padded input
    mid_ref : (H+2, W+2, Cout)     VMEM scratch, zero-padded intermediate
    """
    x = x_ref[0]                                       # (H, W, Cin) f32

    # Stage zero-padded input in VMEM. Interior is fully overwritten, so only
    # the halo ring is zeroed (cheap), every step (megacore-safe).
    _zero_halo(xpad_ref, H, W, Cin)
    xpad_ref[1:H + 1, 1:W + 1, :] = x
    _zero_halo(mid_ref, H, W, Cout)

    s1, b1 = sb_ref[0:1, :], sb_ref[1:2, :]
    s2, b2 = sb_ref[2:3, :], sb_ref[3:4, :]

    # ---- conv1: single im2col matmul (one MXU push, K = 9*Cin) ----
    p1 = _im2col(xpad_ref, H, W, Cin).astype(mxu_dtype)
    acc1 = jnp.dot(p1, w1_ref[...], preferred_element_type=jnp.float32)
    out1 = jnp.maximum(acc1 * s1 + b1, 0.0)            # BN1 + ReLU (f32)
    mid_ref[1:H + 1, 1:W + 1, :] = out1.reshape(H, W, Cout)

    # ---- conv2: single im2col matmul fed by slices of the scratch ----
    p2 = _im2col(mid_ref, H, W, Cout).astype(mxu_dtype)
    acc2 = jnp.dot(p2, w2_ref[...], preferred_element_type=jnp.float32)
    out2 = acc2 * s2 + b2                              # BN2 (f32)

    # ---- residual add (identity path, stride=1) + ReLU ----
    out = jnp.maximum(out2 + x.reshape(H * W, Cin), 0.0)
    out_ref[0] = out.reshape(H, W, Cout)


def _fold_bn(gamma, beta, mean, var, eps=1e-5):
    scale = gamma / jnp.sqrt(var + eps)
    shift = beta - mean * scale
    return scale, shift


def residual_block(x_nchw, w1_oihw, bn1_params, w2_oihw, bn2_params,
                   *, mxu_dtype=jnp.bfloat16):
    """Forward pass of ResidualBlock(stride=1). Inputs follow PyTorch layouts."""
    x_nhwc = jnp.transpose(x_nchw, (0, 2, 3, 1)).astype(jnp.float32)
    N, H, W, Cin = x_nhwc.shape
    Cout = w1_oihw.shape[0]
    assert Cin == Cout, "stride=1 path requires in_channels == out_channels"

    # OIHW -> HWIO -> (9*Cin, Cout): (kh, kw, cin) folded into the contraction
    # dim to match the in-kernel im2col column order. MXU operands in bf16.
    w1 = jnp.transpose(w1_oihw, (2, 3, 1, 0)).reshape(9 * Cin, Cout).astype(mxu_dtype)
    w2 = jnp.transpose(w2_oihw, (2, 3, 1, 0)).reshape(9 * Cout, Cout).astype(mxu_dtype)

    s1, b1 = _fold_bn(*bn1_params)
    s2, b2 = _fold_bn(*bn2_params)
    sb = jnp.stack([s1, b1, s2, b2], axis=0).astype(jnp.float32)   # (4, Cout)

    kernel = functools.partial(_residual_block_kernel, H=H, W=W,
                               Cin=Cin, Cout=Cout, mxu_dtype=mxu_dtype)

    out_nhwc = pl.pallas_call(
        kernel,
        out_shape=jax.ShapeDtypeStruct((N, H, W, Cout), jnp.float32),
        grid_spec=pltpu.PrefetchScalarGridSpec(
            num_scalar_prefetch=0,
            grid=(N,),
            in_specs=[
                pl.BlockSpec((1, H, W, Cin), lambda n: (n, 0, 0, 0)),
                pl.BlockSpec((9 * Cin, Cout), lambda n: (0, 0)),
                pl.BlockSpec((9 * Cout, Cout), lambda n: (0, 0)),
                pl.BlockSpec((4, Cout), lambda n: (0, 0)),
            ],
            out_specs=pl.BlockSpec((1, H, W, Cout), lambda n: (n, 0, 0, 0)),
            scratch_shapes=[
                pltpu.VMEM((H + 2, W + 2, Cin), jnp.float32),
                pltpu.VMEM((H + 2, W + 2, Cout), jnp.float32),
            ],
        ),
        compiler_params=pltpu.CompilerParams(
            dimension_semantics=("parallel",)),
    )(x_nhwc, w1, w2, sb)

    return jnp.transpose(out_nhwc, (0, 3, 1, 2))   # back to NCHW


def _reference(x_nchw, w1_oihw, bn1_params, w2_oihw, bn2_params):
    """Pure-JAX reference matching the PyTorch forward (eval-mode BN)."""
    dn = ("NHWC", "HWIO", "NHWC")
    x = jnp.transpose(x_nchw, (0, 2, 3, 1)).astype(jnp.float32)
    w1 = jnp.transpose(w1_oihw, (2, 3, 1, 0)).astype(jnp.float32)
    w2 = jnp.transpose(w2_oihw, (2, 3, 1, 0)).astype(jnp.float32)
    s1, b1 = _fold_bn(*bn1_params)
    s2, b2 = _fold_bn(*bn2_params)
    o = jax.lax.conv_general_dilated(x, w1, (1, 1), "SAME", dimension_numbers=dn)
    o = jnp.maximum(o * s1 + b1, 0.0)
    o = jax.lax.conv_general_dilated(o, w2, (1, 1), "SAME", dimension_numbers=dn)
    o = o * s2 + b2
    o = jnp.maximum(o + x, 0.0)
    return jnp.transpose(o, (0, 3, 1, 2))


if __name__ == "__main__":
    key = jax.random.PRNGKey(0)
    k_x, k_w1, k_w2 = jax.random.split(key, 3)

    N, C, H, W = 2, 4, 16, 16         # in_channels = out_channels = 4, stride = 1
    x = jax.random.normal(k_x, (N, C, H, W), jnp.float32)

    # Conv weights (PyTorch OIHW), deterministic.
    w1 = 0.1 * jax.random.normal(k_w1, (C, C, 3, 3), jnp.float32)
    w2 = 0.1 * jax.random.normal(k_w2, (C, C, 3, 3), jnp.float32)

    # BatchNorm2d params (gamma, beta, running_mean, running_var), deterministic.
    ar = jnp.arange(C, dtype=jnp.float32)
    bn1 = (1.0 + 0.10 * ar, 0.05 * ar, 0.02 * ar, 1.0 + 0.03 * ar)
    bn2 = (1.0 - 0.05 * ar, -0.02 * ar, 0.01 * ar, 1.0 + 0.07 * ar)

    ref = _reference(x, w1, bn1, w2, bn2)

    # Exact-path check (f32 MXU operands): tight tolerance.
    out_f32 = jax.block_until_ready(
        residual_block(x, w1, bn1, w2, bn2, mxu_dtype=jnp.float32))
    assert out_f32.shape == (N, C, H, W)
    assert jnp.allclose(out_f32, ref, atol=1e-4, rtol=1e-4), (
        float(jnp.max(jnp.abs(out_f32 - ref))))

    # Fast-path check (bf16 MXU operands, f32 accumulate/epilogue): loosened tol.
    out_bf16 = jax.block_until_ready(
        residual_block(x, w1, bn1, w2, bn2, mxu_dtype=jnp.bfloat16))
    assert out_bf16.shape == (N, C, H, W)
    assert jnp.allclose(out_bf16, ref, atol=5e-2, rtol=5e-2), (
        float(jnp.max(jnp.abs(out_bf16 - ref))))

    print("KERNEL_OK")
</pallas_src>

<mosaic_0001>
module attributes {stable_mosaic.version = 11 : i64} {
  func.func @_residual_block_kernel(%arg0: i32, %arg1: memref<1x16x16x4xf32, #tpu.memory_space<vmem>>, %arg2: memref<36x4xf32, #tpu.memory_space<vmem>>, %arg3: memref<36x4xf32, #tpu.memory_space<vmem>>, %arg4: memref<4x4xf32, #tpu.memory_space<vmem>>, %arg5: memref<1x16x16x4xf32, #tpu.memory_space<vmem>>, %arg6: memref<18x18x4xf32, #tpu.memory_space<vmem>>, %arg7: memref<18x18x4xf32, #tpu.memory_space<vmem>>) attributes {dimension_semantics = [#tpu.dimension_semantics<parallel>], iteration_bounds = array<i64: 2>, scalar_prefetch = 0 : i64, scratch_operands = 2 : i64, tpu.core_type = #tpu.core_type<tc>, window_params = [{transform_indices = @transform_0, window_bounds = array<i64: 1, 16, 16, 4>}, {pipeline_mode = #tpu.pipeline_mode<synchronous>, transform_indices = @transform_1, window_bounds = array<i64: 36, 4>}, {pipeline_mode = #tpu.pipeline_mode<synchronous>, transform_indices = @transform_2, window_bounds = array<i64: 36, 4>}, {pipeline_mode = #tpu.pipeline_mode<synchronous>, transform_indices = @transform_3, window_bounds = array<i64: 4, 4>}, {transform_indices = @transform_4, window_bounds = array<i64: 1, 16, 16, 4>}]} {
    %c0 = arith.constant 0 : index
    %c0_0 = arith.constant 0 : index
    %c0_1 = arith.constant 0 : index
    %c0_2 = arith.constant 0 : index
    %0 = vector.load %arg1[%c0, %c0_0, %c0_1, %c0_2] : memref<1x16x16x4xf32, #tpu.memory_space<vmem>>, vector<1x16x16x4xf32>
    %1 = vector.shape_cast %0 : vector<1x16x16x4xf32> to vector<16x16x4xf32>
    %cst = arith.constant 0.000000e+00 : f32
    %2 = vector.broadcast %cst : f32 to vector<1x18x4xf32>
    %c0_3 = arith.constant 0 : index
    %c0_4 = arith.constant 0 : index
    %c0_5 = arith.constant 0 : index
    %3 = vector.load %arg6[%c0_3, %c0_4, %c0_5] : memref<18x18x4xf32, #tpu.memory_space<vmem>>, vector<1x18x4xf32>
    tpu.vector_store %arg6[%c0_3, %c0_4, %c0_5], %2 {strides = array<i32>} : memref<18x18x4xf32, #tpu.memory_space<vmem>>, vector<1x18x4xf32>,
    %cst_6 = arith.constant 0.000000e+00 : f32
    %4 = vector.broadcast %cst_6 : f32 to vector<1x18x4xf32>
    %c17 = arith.constant 17 : index
    %c0_7 = arith.constant 0 : index
    %c0_8 = arith.constant 0 : index
    %5 = vector.load %arg6[%c17, %c0_7, %c0_8] : memref<18x18x4xf32, #tpu.memory_space<vmem>>, vector<1x18x4xf32>
    tpu.vector_store %arg6[%c17, %c0_7, %c0_8], %4 {strides = array<i32>} : memref<18x18x4xf32, #tpu.memory_space<vmem>>, vector<1x18x4xf32>,
    %cst_9 = arith.constant 0.000000e+00 : f32
    %6 = vector.broadcast %cst_9 : f32 to vector<18x1x4xf32>
    %c0_10 = arith.constant 0 : index
    %c0_11 = arith.constant 0 : index
    %c0_12 = arith.constant 0 : index
    %7 = vector.load %arg6[%c0_10, %c0_11, %c0_12] : memref<18x18x4xf32, #tpu.memory_space<vmem>>, vector<18x1x4xf32>
    tpu.vector_store %arg6[%c0_10, %c0_11, %c0_12], %6 {strides = array<i32>} : memref<18x18x4xf32, #tpu.memory_space<vmem>>, vector<18x1x4xf32>,
    %cst_13 = arith.constant 0.000000e+00 : f32
    %8 = vector.broadcast %cst_13 : f32 to vector<18x1x4xf32>
    %c0_14 = arith.constant 0 : index
    %c17_15 = arith.constant 17 : index
    %c0_16 = arith.constant 0 : index
    %9 = vector.load %arg6[%c0_14, %c17_15, %c0_16] : memref<18x18x4xf32, #tpu.memory_space<vmem>>, vector<18x1x4xf32>
    tpu.vector_store %arg6[%c0_14, %c17_15, %c0_16], %8 {strides = array<i32>} : memref<18x18x4xf32, #tpu.memory_space<vmem>>, vector<18x1x4xf32>,
    %c1 = arith.constant 1 : index
    %c1_17 = arith.constant 1 : index
    %c0_18 = arith.constant 0 : index
    %10 = vector.load %arg6[%c1, %c1_17, %c0_18] : memref<18x18x4xf32, #tpu.memory_space<vmem>>, vector<16x16x4xf32>
    tpu.vector_store %arg6[%c1, %c1_17, %c0_18], %1 {strides = array<i32>} : memref<18x18x4xf32, #tpu.memory_space<vmem>>, vector<16x16x4xf32>,
    %cst_19 = arith.constant 0.000000e+00 : f32
    %11 = vector.broadcast %cst_19 : f32 to vector<1x18x4xf32>
    %c0_20 = arith.constant 0 : index
    %c0_21 = arith.constant 0 : index
    %c0_22 = arith.constant 0 : index
    %12 = vector.load %arg7[%c0_20, %c0_21, %c0_22] : memref<18x18x4xf32, #tpu.memory_space<vmem>>, vector<1x18x4xf32>
    tpu.vector_store %arg7[%c0_20, %c0_21, %c0_22], %11 {strides = array<i32>} : memref<18x18x4xf32, #tpu.memory_space<vmem>>, vector<1x18x4xf32>,
    %cst_23 = arith.constant 0.000000e+00 : f32
    %13 = vector.broadcast %cst_23 : f32 to vector<1x18x4xf32>
    %c17_24 = arith.constant 17 : index
    %c0_25 = arith.constant 0 : index
    %c0_26 = arith.constant 0 : index
    %14 = vector.load %arg7[%c17_24, %c0_25, %c0_26] : memref<18x18x4xf32, #tpu.memory_space<vmem>>, vector<1x18x4xf32>
    tpu.vector_store %arg7[%c17_24, %c0_25, %c0_26], %13 {strides = array<i32>} : memref<18x18x4xf32, #tpu.memory_space<vmem>>, vector<1x18x4xf32>,
    %cst_27 = arith.constant 0.000000e+00 : f32
    %15 = vector.broadcast %cst_27 : f32 to vector<18x1x4xf32>
    %c0_28 = arith.constant 0 : index
    %c0_29 = arith.constant 0 : index
    %c0_30 = arith.constant 0 : index
    %16 = vector.load %arg7[%c0_28, %c0_29, %c0_30] : memref<18x18x4xf32, #tpu.memory_space<vmem>>, vector<18x1x4xf32>
    tpu.vector_store %arg7[%c0_28, %c0_29, %c0_30], %15 {strides = array<i32>} : memref<18x18x4xf32, #tpu.memory_space<vmem>>, vector<18x1x4xf32>,
    %cst_31 = arith.constant 0.000000e+00 : f32
    %17 = vector.broadcast %cst_31 : f32 to vector<18x1x4xf32>
    %c0_32 = arith.constant 0 : index
    %c17_33 = arith.constant 17 : index
    %c0_34 = arith.constant 0 : index
    %18 = vector.load %arg7[%c0_32, %c17_33, %c0_34] : memref<18x18x4xf32, #tpu.memory_space<vmem>>, vector<18x1x4xf32>
    tpu.vector_store %arg7[%c0_32, %c17_33, %c0_34], %17 {strides = array<i32>} : memref<18x18x4xf32, #tpu.memory_space<vmem>>, vector<18x1x4xf32>,
    %c0_35 = arith.constant 0 : index
    %c0_36 = arith.constant 0 : index
    %19 = vector.load %arg4[%c0_35, %c0_36] : memref<4x4xf32, #tpu.memory_space<vmem>>, vector<1x4xf32>
    %c1_37 = arith.constant 1 : index
    %c0_38 = arith.constant 0 : index
    %20 = vector.load %arg4[%c1_37, %c0_38] : memref<4x4xf32, #tpu.memory_space<vmem>>, vector<1x4xf32>
    %c2 = arith.constant 2 : index
    %c0_39 = arith.constant 0 : index
    %21 = vector.load %arg4[%c2, %c0_39] : memref<4x4xf32, #tpu.memory_space<vmem>>, vector<1x4xf32>
    %c3 = arith.constant 3 : index
    %c0_40 = arith.constant 0 : index
    %22 = vector.load %arg4[%c3, %c0_40] : memref<4x4xf32, #tpu.memory_space<vmem>>, vector<1x4xf32>
    %c0_41 = arith.constant 0 : index
    %c0_42 = arith.constant 0 : index
    %c0_43 = arith.constant 0 : index
    %23 = vector.load %arg6[%c0_41, %c0_42, %c0_43] : memref<18x18x4xf32, #tpu.memory_space<vmem>>, vector<16x16x4xf32>
    %c0_44 = arith.constant 0 : index
    %c1_45 = arith.constant 1 : index
    %c0_46 = arith.constant 0 : index
    %24 = vector.load %arg6[%c0_44, %c1_45, %c0_46] : memref<18x18x4xf32, #tpu.memory_space<vmem>>, vector<16x16x4xf32>
    %c0_47 = arith.constant 0 : index
    %c2_48 = arith.constant 2 : index
    %c0_49 = arith.constant 0 : index
    %25 = vector.load %arg6[%c0_47, %c2_48, %c0_49] : memref<18x18x4xf32, #tpu.memory_space<vmem>>, vector<16x16x4xf32>
    %c1_50 = arith.constant 1 : index
    %c0_51 = arith.constant 0 : index
    %c0_52 = arith.constant 0 : index
    %26 = vector.load %arg6[%c1_50, %c0_51, %c0_52] : memref<18x18x4xf32, #tpu.memory_space<vmem>>, vector<16x16x4xf32>
    %c1_53 = arith.constant 1 : index
    %c1_54 = arith.constant 1 : index
    %c0_55 = arith.constant 0 : index
    %27 = vector.load %arg6[%c1_53, %c1_54, %c0_55] : memref<18x18x4xf32, #tpu.memory_space<vmem>>, vector<16x16x4xf32>
    %c1_56 = arith.constant 1 : index
    %c2_57 = arith.constant 2 : index
    %c0_58 = arith.constant 0 : index
    %28 = vector.load %arg6[%c1_56, %c2_57, %c0_58] : memref<18x18x4xf32, #tpu.memory_space<vmem>>, vector<16x16x4xf32>
    %c2_59 = arith.constant 2 : index
    %c0_60 = arith.constant 0 : index
    %c0_61 = arith.constant 0 : index
    %29 = vector.load %arg6[%c2_59, %c0_60, %c0_61] : memref<18x18x4xf32, #tpu.memory_space<vmem>>, vector<16x16x4xf32>
    %c2_62 = arith.constant 2 : index
    %c1_63 = arith.constant 1 : index
    %c0_64 = arith.constant 0 : index
    %30 = vector.load %arg6[%c2_62, %c1_63, %c0_64] : memref<18x18x4xf32, #tpu.memory_space<vmem>>, vector<16x16x4xf32>
    %c2_65 = arith.constant 2 : index
    %c2_66 = arith.constant 2 : index
    %c0_67 = arith.constant 0 : index
    %31 = vector.load %arg6[%c2_65, %c2_66, %c0_67] : memref<18x18x4xf32, #tpu.memory_space<vmem>>, vector<16x16x4xf32>
    %32 = tpu.concatenate %23, %24, %25, %26, %27, %28, %29, %30, %31 in 2 : vector<16x16x4xf32>, vector<16x16x4xf32>, vector<16x16x4xf32>, vector<16x16x4xf32>, vector<16x16x4xf32>, vector<16x16x4xf32>, vector<16x16x4xf32>, vector<16x16x4xf32>, vector<16x16x4xf32> -> vector<16x16x36xf32>
    %33 = vector.shape_cast %32 : vector<16x16x36xf32> to vector<256x36xf32>
    %c0_68 = arith.constant 0 : index
    %c0_69 = arith.constant 0 : index
    %34 = vector.load %arg2[%c0_68, %c0_69] : memref<36x4xf32, #tpu.memory_space<vmem>>, vector<36x4xf32>
    %cst_70 = arith.constant dense<0.000000e+00> : vector<256x4xf32>
    %35 = tpu.matmul %33, %34, %cst_70 {dimension_numbers = #tpu.dot_dimension_numbers<[1], [0], [0], [1], [0, 0, 1, 1], [], []>} : vector<256x36xf32>, vector<36x4xf32>, vector<256x4xf32> -> vector<256x4xf32>
    %36 = vector.broadcast %19 : vector<1x4xf32> to vector<256x4xf32>
    %37 = arith.mulf %35, %36 : vector<256x4xf32>
    %38 = vector.broadcast %20 : vector<1x4xf32> to vector<256x4xf32>
    %39 = arith.addf %37, %38 : vector<256x4xf32>
    %cst_71 = arith.constant 0.000000e+00 : f32
    %40 = vector.broadcast %cst_71 : f32 to vector<256x4xf32>
    %41 = arith.maximumf %39, %40 : vector<256x4xf32>
    %42 = vector.shape_cast %41 : vector<256x4xf32> to vector<16x16x4xf32>
    %c1_72 = arith.constant 1 : index
    %c1_73 = arith.constant 1 : index
    %c0_74 = arith.constant 0 : index
    %43 = vector.load %arg7[%c1_72, %c1_73, %c0_74] : memref<18x18x4xf32, #tpu.memory_space<vmem>>, vector<16x16x4xf32>
    tpu.vector_store %arg7[%c1_72, %c1_73, %c0_74], %42 {strides = array<i32>} : memref<18x18x4xf32, #tpu.memory_space<vmem>>, vector<16x16x4xf32>,
    %c0_75 = arith.constant 0 : index
    %c0_76 = arith.constant 0 : index
    %c0_77 = arith.constant 0 : index
    %44 = vector.load %arg7[%c0_75, %c0_76, %c0_77] : memref<18x18x4xf32, #tpu.memory_space<vmem>>, vector<16x16x4xf32>
    %c0_78 = arith.constant 0 : index
    %c1_79 = arith.constant 1 : index
    %c0_80 = arith.constant 0 : index
    %45 = vector.load %arg7[%c0_78, %c1_79, %c0_80] : memref<18x18x4xf32, #tpu.memory_space<vmem>>, vector<16x16x4xf32>
    %c0_81 = arith.constant 0 : index
    %c2_82 = arith.constant 2 : index
    %c0_83 = arith.constant 0 : index
    %46 = vector.load %arg7[%c0_81, %c2_82, %c0_83] : memref<18x18x4xf32, #tpu.memory_space<vmem>>, vector<16x16x4xf32>
    %c1_84 = arith.constant 1 : index
    %c0_85 = arith.constant 0 : index
    %c0_86 = arith.constant 0 : index
    %47 = vector.load %arg7[%c1_84, %c0_85, %c0_86] : memref<18x18x4xf32, #tpu.memory_space<vmem>>, vector<16x16x4xf32>
    %c1_87 = arith.constant 1 : index
    %c1_88 = arith.constant 1 : index
    %c0_89 = arith.constant 0 : index
    %48 = vector.load %arg7[%c1_87, %c1_88, %c0_89] : memref<18x18x4xf32, #tpu.memory_space<vmem>>, vector<16x16x4xf32>
    %c1_90 = arith.constant 1 : index
    %c2_91 = arith.constant 2 : index
    %c0_92 = arith.constant 0 : index
    %49 = vector.load %arg7[%c1_90, %c2_91, %c0_92] : memref<18x18x4xf32, #tpu.memory_space<vmem>>, vector<16x16x4xf32>
    %c2_93 = arith.constant 2 : index
    %c0_94 = arith.constant 0 : index
    %c0_95 = arith.constant 0 : index
    %50 = vector.load %arg7[%c2_93, %c0_94, %c0_95] : memref<18x18x4xf32, #tpu.memory_space<vmem>>, vector<16x16x4xf32>
    %c2_96 = arith.constant 2 : index
    %c1_97 = arith.constant 1 : index
    %c0_98 = arith.constant 0 : index
    %51 = vector.load %arg7[%c2_96, %c1_97, %c0_98] : memref<18x18x4xf32, #tpu.memory_space<vmem>>, vector<16x16x4xf32>
    %c2_99 = arith.constant 2 : index
    %c2_100 = arith.constant 2 : index
    %c0_101 = arith.constant 0 : index
    %52 = vector.load %arg7[%c2_99, %c2_100, %c0_101] : memref<18x18x4xf32, #tpu.memory_space<vmem>>, vector<16x16x4xf32>
    %53 = tpu.concatenate %44, %45, %46, %47, %48, %49, %50, %51, %52 in 2 : vector<16x16x4xf32>, vector<16x16x4xf32>, vector<16x16x4xf32>, vector<16x16x4xf32>, vector<16x16x4xf32>, vector<16x16x4xf32>, vector<16x16x4xf32>, vector<16x16x4xf32>, vector<16x16x4xf32> -> vector<16x16x36xf32>
    %54 = vector.shape_cast %53 : vector<16x16x36xf32> to vector<256x36xf32>
    %c0_102 = arith.constant 0 : index
    %c0_103 = arith.constant 0 : index
    %55 = vector.load %arg3[%c0_102, %c0_103] : memref<36x4xf32, #tpu.memory_space<vmem>>, vector<36x4xf32>
    %cst_104 = arith.constant dense<0.000000e+00> : vector<256x4xf32>
    %56 = tpu.matmul %54, %55, %cst_104 {dimension_numbers = #tpu.dot_dimension_numbers<[1], [0], [0], [1], [0, 0, 1, 1], [], []>} : vector<256x36xf32>, vector<36x4xf32>, vector<256x4xf32> -> vector<256x4xf32>
    %57 = vector.broadcast %21 : vector<1x4xf32> to vector<256x4xf32>
    %58 = arith.mulf %56, %57 : vector<256x4xf32>
    %59 = vector.broadcast %22 : vector<1x4xf32> to vector<256x4xf32>
    %60 = arith.addf %58, %59 : vector<256x4xf32>
    %61 = vector.shape_cast %1 : vector<16x16x4xf32> to vector<256x4xf32>
    %62 = arith.addf %60, %61 : vector<256x4xf32>
    %cst_105 = arith.constant 0.000000e+00 : f32
    %63 = vector.broadcast %cst_105 : f32 to vector<256x4xf32>
    %64 = arith.maximumf %62, %63 : vector<256x4xf32>
    %65 = vector.shape_cast %64 : vector<256x4xf32> to vector<16x16x4xf32>
    %c0_106 = arith.constant 0 : index
    %c0_107 = arith.constant 0 : index
    %c0_108 = arith.constant 0 : index
    %c0_109 = arith.constant 0 : index
    %66 = vector.load %arg5[%c0_106, %c0_107, %c0_108, %c0_109] : memref<1x16x16x4xf32, #tpu.memory_space<vmem>>, vector<1x16x16x4xf32>
    %67 = vector.shape_cast %66 : vector<1x16x16x4xf32> to vector<16x16x4xf32>
    %68 = vector.shape_cast %65 : vector<16x16x4xf32> to vector<1x16x16x4xf32>
    tpu.vector_store %arg5[%c0_106, %c0_107, %c0_108, %c0_109], %68 {strides = array<i32>} : memref<1x16x16x4xf32, #tpu.memory_space<vmem>>, vector<1x16x16x4xf32>,
    return
  }
  func.func @transform_0(%arg0: i32) -> (i32, i32, i32, i32) {
    %c0_i32 = arith.constant 0 : i32
    %c0_i32_0 = arith.constant 0 : i32
    %c0_i32_1 = arith.constant 0 : i32
    %c0_i32_2 = arith.constant 0 : i32
    return %arg0, %c0_i32, %c0_i32_0, %c0_i32_1 : i32, i32, i32, i32
  }
  func.func @transform_1(%arg0: i32) -> (i32, i32) {
    %c0_i32 = arith.constant 0 : i32
    %c0_i32_0 = arith.constant 0 : i32
    %c0_i32_1 = arith.constant 0 : i32
    return %c0_i32, %c0_i32_0 : i32, i32
  }
  func.func @transform_2(%arg0: i32) -> (i32, i32) {
    %c0_i32 = arith.constant 0 : i32
    %c0_i32_0 = arith.constant 0 : i32
    %c0_i32_1 = arith.constant 0 : i32
    return %c0_i32, %c0_i32_0 : i32, i32
  }
  func.func @transform_3(%arg0: i32) -> (i32, i32) {
    %c0_i32 = arith.constant 0 : i32
    %c0_i32_0 = arith.constant 0 : i32
    %c0_i32_1 = arith.constant 0 : i32
    return %c0_i32, %c0_i32_0 : i32, i32
  }
  func.func @transform_4(%arg0: i32) -> (i32, i32, i32, i32) {
    %c0_i32 = arith.constant 0 : i32
    %c0_i32_0 = arith.constant 0 : i32
    %c0_i32_1 = arith.constant 0 : i32
    %c0_i32_2 = arith.constant 0 : i32
    return %arg0, %c0_i32, %c0_i32_0, %c0_i32_1 : i32, i32, i32, i32
  }
}

</mosaic_0001>

<llo_original>
// kernel: tpu_custom_call.1
$region0: #{tpu_custom_call.1}
  #allocation0 [shape = 'u32[]', space=smem, size = 0x4, offset = 0x4, fixed_abs, tag = 'smem constant byte address 0x4 - core index']
  #allocation1 [shape = 'u32[72,128]{1,0:T(1,128)}', space=vmem, size = 0x9000, scoped, tag = 'internal scratch']
  #allocation2 [shape = 'f32[18,18,4]{2,1,0:T(8,128)}', space=vmem, size = 0x36000, scoped, tag = 'scratch operand']
  #allocation3 [shape = 'f32[18,18,4]{2,1,0:T(8,128)}', space=vmem, size = 0x36000, scoped, tag = 'scratch operand']
  %s0 = inlined_call_operand.vmem [shape: f32[2,16,16,4], index: 0, kind: input, shape index: {}]
  %s1 = inlined_call_operand.vmem [shape: f32[36,4], index: 1, kind: input, shape index: {}]
  %s2 = inlined_call_operand.vmem [shape: f32[36,4], index: 2, kind: input, shape index: {}]
  %s3 = inlined_call_operand.vmem [shape: f32[4,4], index: 3, kind: input, shape index: {}]
  %s4 = inlined_call_operand.vmem [shape: f32[2,16,16,4], index: 4, kind: output, shape index: {}]
  %s5 = sld [smem:[#allocation0]]
  $region49: #{tpu_custom_call.1} parent=0
    _
  %s7 = ssub.s32 1, %s5
  %s8 = scalar_select 0, %s7, %s5
  loop: start=0, step=1, limit=4
  $region2: #{tpu_custom_call.1} parent=0 // loop_pre_header
    _
  $region3: #{tpu_custom_call.1} parent=0 // loop_header
    %s10 = sphi 0, %s14
    %p11 = scmp.ge.s32.totalorder %s10, 4
    %s20 = sphi 0, %s22
    %s23 = sphi 0, %s20
    %s24 = sphi 0, %s23
    %s40 = sphi 0, %s24
    %s44 = sphi 0, %s44
    %s46 = sphi 0, %s44
    %s47 = sphi 0, %s46
    %s61 = sphi 0, %s47
    %s65 = sphi 0, %s65
    %s67 = sphi 0, %s65
    %s68 = sphi 0, %s67
    %s82 = sphi 0, %s68
    %s86 = sphi 0, %s86
    %s88 = sphi 0, %s86
    %s89 = sphi 0, %s88
    %s103 = sphi 0, %s89
    %s109 = sphi 0, %s111
    %s112 = sphi 0, %s109
    %s113 = sphi 0, %s112
    %s129 = sphi 0, %s113
  $region4: #{tpu_custom_call.1} parent=0 // loop_header_branch
    %13 = sbr.rel (%p11) target = $region8
  $region5: #{tpu_custom_call.1} parent=0 // loop_body
    %s15 = ssub.s32 %s10, 1
    %s16 = ssub.s32 %s10, 2
    %s17 = sadd.s32 %s10, 1
    %s18 = ssub.s32 %s10, %s17
    %p19 = scmp.eq.s32.totalorder %s18, 0
    %s21 = sadd.s32 %s20, 1
    %s22 = scalar_select %p19, %s20, %s21
    %p25 = pneg %p19
    %p26 = scmp.eq.s32.totalorder %s10, 1
    %p27 = por %p25, %p26
    %p28 = scmp.ne.s32.totalorder %s20, %s23
    %p29 = scmp.eq.s32.totalorder %s10, 0
    %p30 = por %p28, %p29
    %p31 = scmp.ne.s32.totalorder %s20, %s23
    %p32 = scmp.eq.s32.totalorder %s15, 1
    %p33 = por %p31, %p32
    %p34 = scmp.ne.s32.totalorder %s23, %s24
    %p35 = scmp.eq.s32.totalorder %s15, 0
    %p36 = por %p34, %p35
    %p37 = scmp.ne.s32.totalorder %s23, %s24
    %p38 = scmp.eq.s32.totalorder %s16, 1
    %p39 = por %p37, %p38
    %p41 = scmp.ne.s32.totalorder %s24, %s40
    %p42 = scmp.eq.s32.totalorder %s16, 0
    %p43 = por %p41, %p42
    %s45 = sadd.s32 %s44, 1
    %p48 = scmp.eq.s32.totalorder %s10, 1
    %p49 = scmp.ne.s32.totalorder %s44, %s46
    %p50 = scmp.eq.s32.totalorder %s10, 0
    %p51 = por %p49, %p50
    %p52 = scmp.ne.s32.totalorder %s44, %s46
    %p53 = scmp.eq.s32.totalorder %s15, 1
    %p54 = por %p52, %p53
    %p55 = scmp.ne.s32.totalorder %s46, %s47
    %p56 = scmp.eq.s32.totalorder %s15, 0
    %p57 = por %p55, %p56
    %p58 = scmp.ne.s32.totalorder %s46, %s47
    %p59 = scmp.eq.s32.totalorder %s16, 1
    %p60 = por %p58, %p59
    %p62 = scmp.ne.s32.totalorder %s47, %s61
    %p63 = scmp.eq.s32.totalorder %s16, 0
    %p64 = por %p62, %p63
    %s66 = sadd.s32 %s65, 1
    %p69 = scmp.eq.s32.totalorder %s10, 1
    %p70 = scmp.ne.s32.totalorder %s65, %s67
    %p71 = scmp.eq.s32.totalorder %s10, 0
    %p72 = por %p70, %p71
    %p73 = scmp.ne.s32.totalorder %s65, %s67
    %p74 = scmp.eq.s32.totalorder %s15, 1
    %p75 = por %p73, %p74
    %p76 = scmp.ne.s32.totalorder %s67, %s68
    %p77 = scmp.eq.s32.totalorder %s15, 0
    %p78 = por %p76, %p77
    %p79 = scmp.ne.s32.totalorder %s67, %s68
    %p80 = scmp.eq.s32.totalorder %s16, 1
    %p81 = por %p79, %p80
    %p83 = scmp.ne.s32.totalorder %s68, %s82
    %p84 = scmp.eq.s32.totalorder %s16, 0
    %p85 = por %p83, %p84
    %s87 = sadd.s32 %s86, 1
    %p90 = scmp.eq.s32.totalorder %s10, 1
    %p91 = scmp.ne.s32.totalorder %s86, %s88
    %p92 = scmp.eq.s32.totalorder %s10, 0
    %p93 = por %p91, %p92
    %p94 = scmp.ne.s32.totalorder %s86, %s88
    %p95 = scmp.eq.s32.totalorder %s15, 1
    %p96 = por %p94, %p95
    %p97 = scmp.ne.s32.totalorder %s88, %s89
    %p98 = scmp.eq.s32.totalorder %s15, 0
    %p99 = por %p97, %p98
    %p100 = scmp.ne.s32.totalorder %s88, %s89
    %p101 = scmp.eq.s32.totalorder %s16, 1
    %p102 = por %p100, %p101
    %p104 = scmp.ne.s32.totalorder %s89, %s103
    %p105 = scmp.eq.s32.totalorder %s16, 0
    %p106 = por %p104, %p105
    %s107 = ssub.s32 %s10, %s17
    %p108 = scmp.eq.s32.totalorder %s107, 0
    %s110 = sadd.s32 %s109, 1
    %s111 = scalar_select %p108, %s109, %s110
    %p114 = pneg %p108
    %p115 = scmp.eq.s32.totalorder %s10, 1
    %p116 = por %p114, %p115
    %p117 = scmp.ne.s32.totalorder %s109, %s112
    %p118 = scmp.eq.s32.totalorder %s10, 0
    %p119 = por %p117, %p118
    %p120 = scmp.ne.s32.totalorder %s109, %s112
    %p121 = scmp.eq.s32.totalorder %s15, 1
    %p122 = por %p120, %p121
    %p123 = scmp.ne.s32.totalorder %s112, %s113
    %p124 = scmp.eq.s32.totalorder %s15, 0
    %p125 = por %p123, %p124
    %p126 = scmp.ne.s32.totalorder %s112, %s113
    %p127 = scmp.eq.s32.totalorder %s16, 1
    %p128 = por %p126, %p127
    %p130 = scmp.ne.s32.totalorder %s113, %s129
    %p131 = scmp.eq.s32.totalorder %s16, 0
    %p132 = por %p130, %p131
    %p133 = scmp.le.s32.totalorder 1, %s10
    %p134 = scmp.lt.s32.totalorder %s10, 3
    %p135 = pnand %p133, %p134
    %p136 = pneg %p135
    // Predicated region
    $region9: #{tpu_custom_call.1} parent=5 // pred_check
      _
    $region10: #{tpu_custom_call.1} parent=5 // pred_check_branch
      %138 = sbr.rel (%p135) target = $region12
    $region11: #{tpu_custom_call.1} parent=5 // pred_region
      %s139 = ssub.s32 %s10, 1
      // Predicated region
      $region13: #{tpu_custom_call.1} parent=11 // pred_check
        %p140 = pneg %p57
      $region14: #{tpu_custom_call.1} parent=11 // pred_check_branch
        %142 = sbr.rel (%p140) target = $region16
      $region15: #{tpu_custom_call.1} parent=11 // pred_region
        _
      $region16: #{tpu_custom_call.1} parent=11 // pred_fallthru
        _
      // Predicated region
      $region17: #{tpu_custom_call.1} parent=11 // pred_check
        %p143 = pneg %p78
      $region18: #{tpu_custom_call.1} parent=11 // pred_check_branch
        %145 = sbr.rel (%p143) target = $region20
      $region19: #{tpu_custom_call.1} parent=11 // pred_region
        _
      $region20: #{tpu_custom_call.1} parent=11 // pred_fallthru
        _
      // Predicated region
      $region21: #{tpu_custom_call.1} parent=11 // pred_check
        %p146 = pneg %p99
      $region22: #{tpu_custom_call.1} parent=11 // pred_check_branch
        %148 = sbr.rel (%p146) target = $region24
      $region23: #{tpu_custom_call.1} parent=11 // pred_region
        _
      $region24: #{tpu_custom_call.1} parent=11 // pred_fallthru
        _
    $region12: #{tpu_custom_call.1} parent=5 // pred_fallthru
      _
    %p149 = scmp.lt.s32.totalorder %s10, 2
    // Predicated region
    $region25: #{tpu_custom_call.1} parent=5 // pred_check
      %p150 = pneg %p149
    $region26: #{tpu_custom_call.1} parent=5 // pred_check_branch
      %152 = sbr.rel (%p150) target = $region28
    $region27: #{tpu_custom_call.1} parent=5 // pred_region
      // Predicated region
      $region29: #{tpu_custom_call.1} parent=27 // pred_check
        %p153 = pneg %p30
      $region30: #{tpu_custom_call.1} parent=27 // pred_check_branch
        %155 = sbr.rel (%p153) target = $region32
      $region31: #{tpu_custom_call.1} parent=27 // pred_region
        %p156 = scmp.lt.s32.totalorder %s10, 1
        %s157 = scalar_select %p156, %s10, 1
        %s158 = smul.addr %s157, 32
        %s159 = smul.addr %s158, 8
        %s160 = scalar_lea.vmem %s0, %s159
      $region32: #{tpu_custom_call.1} parent=27 // pred_fallthru
        _
    $region28: #{tpu_custom_call.1} parent=5 // pred_fallthru
      _
    %p161 = scmp.le.s32.totalorder 1, %s10
    %p162 = scmp.lt.s32.totalorder %s10, 3
    %p163 = pnand %p161, %p162
    %p164 = pneg %p163
    // Predicated region
    $region33: #{tpu_custom_call.1} parent=5 // pred_check
      _
    $region34: #{tpu_custom_call.1} parent=5 // pred_check_branch
      %166 = sbr.rel (%p163) target = $region36
    $region35: #{tpu_custom_call.1} parent=5 // pred_region
      %s167 = ssub.s32 %s10, 1
      %p168 = scmp.lt.s32.totalorder %s15, 1
      %s169 = scalar_select %p168, %s15, 1
      %s170 = smul.addr %s169, 32
      %s171 = smul.addr %s170, 8
      %s172 = scalar_lea.vmem %s0, %s171
      %p173 = pneg %p36
      %p174 = pneg %p33
      %p175 = pneg %p57
      %p176 = pneg %p54
      %p177 = pneg %p78
      %p178 = pneg %p75
      %p179 = pneg %p99
      %p180 = pneg %p96
      %p181 = pneg %p125
      %p182 = pneg %p122
      %p183 = scmp.lt.s32.totalorder %s15, 1
      %s184 = scalar_select %p183, %s15, 1
      %s185 = smul.addr %s184, 32
      %s186 = smul.addr %s185, 8
      %s187 = scalar_lea.vmem %s4, %s186
      %p188 = scmp.lt.s32.totalorder %s15, 1
      %s189 = scalar_select %p188, %s15, 1
      %s190 = smul.addr %s189, 32
      %s191 = smul.addr %s190, 8
      %s192 = scalar_lea.vmem %s0, %s191
      %p193 = scmp.lt.s32.totalorder %s15, 1
      %s194 = scalar_select %p193, %s15, 1
      %s195 = smul.addr %s194, 32
      %s196 = smul.addr %s195, 8
      %s197 = scalar_lea.vmem %s4, %s196
      %v198 = vld [vmem:[%s192] sm:$0xff]
      %v199 = vld [vmem:[%s192 + $0x8] sm:$0xff]
      %v200 = vld [vmem:[%s192 + $0x10] sm:$0xff]
      %v201 = vld [vmem:[%s192 + $0x18] sm:$0xff]
      %v202 = vld [vmem:[%s192 + $0x20] sm:$0xff]
      %v203 = vld [vmem:[%s192 + $0x28] sm:$0xff]
      %v204 = vld [vmem:[%s192 + $0x30] sm:$0xff]
      %v205 = vld [vmem:[%s192 + $0x38] sm:$0xff]
      %v206 = vld [vmem:[%s192 + $0x40] sm:$0xff]
      %v207 = vld [vmem:[%s192 + $0x48] sm:$0xff]
      %v208 = vld [vmem:[%s192 + $0x50] sm:$0xff]
      %v209 = vld [vmem:[%s192 + $0x58] sm:$0xff]
      %v210 = vld [vmem:[%s192 + $0x60] sm:$0xff]
      %v211 = vld [vmem:[%s192 + $0x68] sm:$0xff]
      %v212 = vld [vmem:[%s192 + $0x70] sm:$0xff]
      %v213 = vld [vmem:[%s192 + $0x78] sm:$0xff]
      %v214 = vld [vmem:[%s192 + $0x80] sm:$0xff]
      %v215 = vld [vmem:[%s192 + $0x88] sm:$0xff]
      %v216 = vld [vmem:[%s192 + $0x90] sm:$0xff]
      %v217 = vld [vmem:[%s192 + $0x98] sm:$0xff]
      %v218 = vld [vmem:[%s192 + $0xa0] sm:$0xff]
      %v219 = vld [vmem:[%s192 + $0xa8] sm:$0xff]
      %v220 = vld [vmem:[%s192 + $0xb0] sm:$0xff]
      %v221 = vld [vmem:[%s192 + $0xb8] sm:$0xff]
      %v222 = vld [vmem:[%s192 + $0xc0] sm:$0xff]
      %v223 = vld [vmem:[%s192 + $0xc8] sm:$0xff]
      %v224 = vld [vmem:[%s192 + $0xd0] sm:$0xff]
      %v225 = vld [vmem:[%s192 + $0xd8] sm:$0xff]
      %v226 = vld [vmem:[%s192 + $0xe0] sm:$0xff]
      %v227 = vld [vmem:[%s192 + $0xe8] sm:$0xff]
      %v228 = vld [vmem:[%s192 + $0xf0] sm:$0xff]
      %v229 = vld [vmem:[%s192 + $0xf8] sm:$0xff]
      %vm230 = vcmask 31744
      %231 = vst.msk [vmem:[#allocation2] sm:$0xff] %vm230, 0.0
      %232 = vst.msk [vmem:[#allocation2 + $0x8] sm:$0xff] %vm230, 0.0
      %vm233 = vcmask 25600
      %234 = vst.msk [vmem:[#allocation2 + $0x10] sm:$0x3] %vm233, 0.0
      %s235 = scalar_lea.vmem [#allocation2], 408
      %236 = vst.msk [vmem:[%s235] sm:$0xff] %vm230, 0.0
      %237 = vst.msk [vmem:[%s235 + $0x8] sm:$0xff] %vm230, 0.0
      %238 = vst.msk [vmem:[%s235 + $0x10] sm:$0x3] %vm233, 0.0
      %vm239 = vcmask 24576
      %240 = vst.msk [vmem:[#allocation2] sm:$0x1] %vm239, 0.0
      %241 = vst.msk [vmem:[#allocation2 + $0x18] sm:$0x1] %vm239, 0.0
      %242 = vst.msk [vmem:[#allocation2 + $0x30] sm:$0x1] %vm239, 0.0
      %243 = vst.msk [vmem:[#allocation2 + $0x48] sm:$0x1] %vm239, 0.0
      %244 = vst.msk [vmem:[#allocation2 + $0x60] sm:$0x1] %vm239, 0.0
      %245 = vst.msk [vmem:[#allocation2 + $0x78] sm:$0x1] %vm239, 0.0
      %246 = vst.msk [vmem:[#allocation2 + $0x90] sm:$0x1] %vm239, 0.0
      %247 = vst.msk [vmem:[#allocation2 + $0xa8] sm:$0x1] %vm239, 0.0
      %248 = vst.msk [vmem:[#allocation2 + $0xc0] sm:$0x1] %vm239, 0.0
      %249 = vst.msk [vmem:[#allocation2 + $0xd8] sm:$0x1] %vm239, 0.0
      %250 = vst.msk [vmem:[#allocation2 + $0xf0] sm:$0x1] %vm239, 0.0
      %251 = vst.msk [vmem:[#allocation2 + $0x108] sm:$0x1] %vm239, 0.0
      %252 = vst.msk [vmem:[#allocation2 + $0x120] sm:$0x1] %vm239, 0.0
      %253 = vst.msk [vmem:[#allocation2 + $0x138] sm:$0x1] %vm239, 0.0
      %254 = vst.msk [vmem:[#allocation2 + $0x150] sm:$0x1] %vm239, 0.0
      %255 = vst.msk [vmem:[#allocation2 + $0x168] sm:$0x1] %vm239, 0.0
      %256 = vst.msk [vmem:[#allocation2 + $0x180] sm:$0x1] %vm239, 0.0
      %257 = vst.msk [vmem:[#allocation2 + $0x198] sm:$0x1] %vm239, 0.0
      %258 = vst.msk [vmem:[#allocation2 + $0x11] sm:$0x1] %vm239, 0.0
      %259 = vst.msk [vmem:[#allocation2 + $0x29] sm:$0x1] %vm239, 0.0
      %260 = vst.msk [vmem:[#allocation2 + $0x41] sm:$0x1] %vm239, 0.0
      %261 = vst.msk [vmem:[#allocation2 + $0x59] sm:$0x1] %vm239, 0.0
      %262 = vst.msk [vmem:[#allocation2 + $0x71] sm:$0x1] %vm239, 0.0
      %263 = vst.msk [vmem:[#allocation2 + $0x89] sm:$0x1] %vm239, 0.0
      %264 = vst.msk [vmem:[#allocation2 + $0xa1] sm:$0x1] %vm239, 0.0
      %265 = vst.msk [vmem:[#allocation2 + $0xb9] sm:$0x1] %vm239, 0.0
      %266 = vst.msk [vmem:[#allocation2 + $0xd1] sm:$0x1] %vm239, 0.0
      %267 = vst.msk [vmem:[#allocation2 + $0xe9] sm:$0x1] %vm239, 0.0
      %268 = vst.msk [vmem:[#allocation2 + $0x101] sm:$0x1] %vm239, 0.0
      %269 = vst.msk [vmem:[#allocation2 + $0x119] sm:$0x1] %vm239, 0.0
      %270 = vst.msk [vmem:[#allocation2 + $0x131] sm:$0x1] %vm239, 0.0
      %271 = vst.msk [vmem:[#allocation2 + $0x149] sm:$0x1] %vm239, 0.0
      %272 = vst.msk [vmem:[#allocation2 + $0x161] sm:$0x1] %vm239, 0.0
      %273 = vst.msk [vmem:[#allocation2 + $0x179] sm:$0x1] %vm239, 0.0
      %274 = vst.msk [vmem:[#allocation2 + $0x191] sm:$0x1] %vm239, 0.0
      %275 = vst.msk [vmem:[#allocation2 + $0x1a9] sm:$0x1] %vm239, 0.0
      %s276 = scalar_lea.vmem [#allocation2], 24
      %277 = vst.msk [vmem:[%s276 + $0x1] sm:$0xff] %vm230, %v198
      %278 = vst.msk [vmem:[%s276 + $0x9] sm:$0xff] %vm230, %v199
      %279 = vst.msk [vmem:[%s276 + $0x19] sm:$0xff] %vm230, %v200
      %280 = vst.msk [vmem:[%s276 + $0x21] sm:$0xff] %vm230, %v201
      %281 = vst.msk [vmem:[%s276 + $0x31] sm:$0xff] %vm230, %v202
      %282 = vst.msk [vmem:[%s276 + $0x39] sm:$0xff] %vm230, %v203
      %283 = vst.msk [vmem:[%s276 + $0x49] sm:$0xff] %vm230, %v204
      %284 = vst.msk [vmem:[%s276 + $0x51] sm:$0xff] %vm230, %v205
      %285 = vst.msk [vmem:[%s276 + $0x61] sm:$0xff] %vm230, %v206
      %286 = vst.msk [vmem:[%s276 + $0x69] sm:$0xff] %vm230, %v207
      %287 = vst.msk [vmem:[%s276 + $0x79] sm:$0xff] %vm230, %v208
      %288 = vst.msk [vmem:[%s276 + $0x81] sm:$0xff] %vm230, %v209
      %289 = vst.msk [vmem:[%s276 + $0x91] sm:$0xff] %vm230, %v210
      %290 = vst.msk [vmem:[%s276 + $0x99] sm:$0xff] %vm230, %v211
      %291 = vst.msk [vmem:[%s276 + $0xa9] sm:$0xff] %vm230, %v212
      %292 = vst.msk [vmem:[%s276 + $0xb1] sm:$0xff] %vm230, %v213
      %293 = vst.msk [vmem:[%s276 + $0xc1] sm:$0xff] %vm230, %v214
      %294 = vst.msk [vmem:[%s276 + $0xc9] sm:$0xff] %vm230, %v215
      %295 = vst.msk [vmem:[%s276 + $0xd9] sm:$0xff] %vm230, %v216
      %296 = vst.msk [vmem:[%s276 + $0xe1] sm:$0xff] %vm230, %v217
      %297 = vst.msk [vmem:[%s276 + $0xf1] sm:$0xff] %vm230, %v218
      %298 = vst.msk [vmem:[%s276 + $0xf9] sm:$0xff] %vm230, %v219
      %299 = vst.msk [vmem:[%s276 + $0x109] sm:$0xff] %vm230, %v220
      %300 = vst.msk [vmem:[%s276 + $0x111] sm:$0xff] %vm230, %v221
      %301 = vst.msk [vmem:[%s276 + $0x121] sm:$0xff] %vm230, %v222
      %302 = vst.msk [vmem:[%s276 + $0x129] sm:$0xff] %vm230, %v223
      %303 = vst.msk [vmem:[%s276 + $0x139] sm:$0xff] %vm230, %v224
      %304 = vst.msk [vmem:[%s276 + $0x141] sm:$0xff] %vm230, %v225
      %305 = vst.msk [vmem:[%s276 + $0x151] sm:$0xff] %vm230, %v226
      %306 = vst.msk [vmem:[%s276 + $0x159] sm:$0xff] %vm230, %v227
      %307 = vst.msk [vmem:[%s276 + $0x169] sm:$0xff] %vm230, %v228
      %308 = vst.msk [vmem:[%s276 + $0x171] sm:$0xff] %vm230, %v229
      %309 = vst.msk [vmem:[#allocation3] sm:$0xff] %vm230, 0.0
      %310 = vst.msk [vmem:[#allocation3 + $0x8] sm:$0xff] %vm230, 0.0
      %311 = vst.msk [vmem:[#allocation3 + $0x10] sm:$0x3] %vm233, 0.0
      %s312 = scalar_lea.vmem [#allocation3], 408
      %313 = vst.msk [vmem:[%s312] sm:$0xff] %vm230, 0.0
      %314 = vst.msk [vmem:[%s312 + $0x8] sm:$0xff] %vm230, 0.0
      %315 = vst.msk [vmem:[%s312 + $0x10] sm:$0x3] %vm233, 0.0
      %316 = vst.msk [vmem:[#allocation3] sm:$0x1] %vm239, 0.0
      %317 = vst.msk [vmem:[#allocation3 + $0x18] sm:$0x1] %vm239, 0.0
      %318 = vst.msk [vmem:[#allocation3 + $0x30] sm:$0x1] %vm239, 0.0
      %319 = vst.msk [vmem:[#allocation3 + $0x48] sm:$0x1] %vm239, 0.0
      %320 = vst.msk [vmem:[#allocation3 + $0x60] sm:$0x1] %vm239, 0.0
      %321 = vst.msk [vmem:[#allocation3 + $0x78] sm:$0x1] %vm239, 0.0
      %322 = vst.msk [vmem:[#allocation3 + $0x90] sm:$0x1] %vm239, 0.0
      %323 = vst.msk [vmem:[#allocation3 + $0xa8] sm:$0x1] %vm239, 0.0
      %324 = vst.msk [vmem:[#allocation3 + $0xc0] sm:$0x1] %vm239, 0.0
      %325 = vst.msk [vmem:[#allocation3 + $0xd8] sm:$0x1] %vm239, 0.0
      %326 = vst.msk [vmem:[#allocation3 + $0xf0] sm:$0x1] %vm239, 0.0
      %327 = vst.msk [vmem:[#allocation3 + $0x108] sm:$0x1] %vm239, 0.0
      %328 = vst.msk [vmem:[#allocation3 + $0x120] sm:$0x1] %vm239, 0.0
      %329 = vst.msk [vmem:[#allocation3 + $0x138] sm:$0x1] %vm239, 0.0
      %330 = vst.msk [vmem:[#allocation3 + $0x150] sm:$0x1] %vm239, 0.0
      %331 = vst.msk [vmem:[#allocation3 + $0x168] sm:$0x1] %vm239, 0.0
      %332 = vst.msk [vmem:[#allocation3 + $0x180] sm:$0x1] %vm239, 0.0
      %333 = vst.msk [vmem:[#allocation3 + $0x198] sm:$0x1] %vm239, 0.0
      %334 = vst.msk [vmem:[#allocation3 + $0x11] sm:$0x1] %vm239, 0.0
      %335 = vst.msk [vmem:[#allocation3 + $0x29] sm:$0x1] %vm239, 0.0
      %336 = vst.msk [vmem:[#allocation3 + $0x41] sm:$0x1] %vm239, 0.0
      %337 = vst.msk [vmem:[#allocation3 + $0x59] sm:$0x1] %vm239, 0.0
      %338 = vst.msk [vmem:[#allocation3 + $0x71] sm:$0x1] %vm239, 0.0
      %339 = vst.msk [vmem:[#allocation3 + $0x89] sm:$0x1] %vm239, 0.0
      %340 = vst.msk [vmem:[#allocation3 + $0xa1] sm:$0x1] %vm239, 0.0
      %341 = vst.msk [vmem:[#allocation3 + $0xb9] sm:$0x1] %vm239, 0.0
      %342 = vst.msk [vmem:[#allocation3 + $0xd1] sm:$0x1] %vm239, 0.0
      %343 = vst.msk [vmem:[#allocation3 + $0xe9] sm:$0x1] %vm239, 0.0
      %344 = vst.msk [vmem:[#allocation3 + $0x101] sm:$0x1] %vm239, 0.0
      %345 = vst.msk [vmem:[#allocation3 + $0x119] sm:$0x1] %vm239, 0.0
      %346 = vst.msk [vmem:[#allocation3 + $0x131] sm:$0x1] %vm239, 0.0
      %347 = vst.msk [vmem:[#allocation3 + $0x149] sm:$0x1] %vm239, 0.0
      %348 = vst.msk [vmem:[#allocation3 + $0x161] sm:$0x1] %vm239, 0.0
      %349 = vst.msk [vmem:[#allocation3 + $0x179] sm:$0x1] %vm239, 0.0
      %350 = vst.msk [vmem:[#allocation3 + $0x191] sm:$0x1] %vm239, 0.0
      %351 = vst.msk [vmem:[#allocation3 + $0x1a9] sm:$0x1] %vm239, 0.0
      %v352 = vld [vmem:[%s3] sm:$0x1]
      %v353 = vld [vmem:[%s3 + $0x1] sm:$0x1]
      %v354 = vld [vmem:[%s3 + $0x2] sm:$0x1]
      %v355 = vld [vmem:[%s3 + $0x3] sm:$0x1]
      %v356 = vld [vmem:[#allocation2] sm:$0xff]
      %v357 = vld [vmem:[#allocation2 + $0x8] sm:$0xff]
      %v358 = vld [vmem:[#allocation2 + $0x18] sm:$0xff]
      %v359 = vld [vmem:[#allocation2 + $0x20] sm:$0xff]
      %v360 = vld [vmem:[#allocation2 + $0x30] sm:$0xff]
      %v361 = vld [vmem:[#allocation2 + $0x38] sm:$0xff]
      %v362 = vld [vmem:[#allocation2 + $0x48] sm:$0xff]
      %v363 = vld [vmem:[#allocation2 + $0x50] sm:$0xff]
      %v364 = vld [vmem:[#allocation2 + $0x60] sm:$0xff]
      %v365 = vld [vmem:[#allocation2 + $0x68] sm:$0xff]
      %v366 = vld [vmem:[#allocation2 + $0x78] sm:$0xff]
      %v367 = vld [vmem:[#allocation2 + $0x80] sm:$0xff]
      %v368 = vld [vmem:[#allocation2 + $0x90] sm:$0xff]
      %v369 = vld [vmem:[#allocation2 + $0x98] sm:$0xff]
      %v370 = vld [vmem:[#allocation2 + $0xa8] sm:$0xff]
      %v371 = vld [vmem:[#allocation2 + $0xb0] sm:$0xff]
      %v372 = vld [vmem:[#allocation2 + $0xc0] sm:$0xff]
      %v373 = vld [vmem:[#allocation2 + $0xc8] sm:$0xff]
      %v374 = vld [vmem:[#allocation2 + $0xd8] sm:$0xff]
      %v375 = vld [vmem:[#allocation2 + $0xe0] sm:$0xff]
      %v376 = vld [vmem:[#allocation2 + $0xf0] sm:$0xff]
      %v377 = vld [vmem:[#allocation2 + $0xf8] sm:$0xff]
      %v378 = vld [vmem:[#allocation2 + $0x108] sm:$0xff]
      %v379 = vld [vmem:[#allocation2 + $0x110] sm:$0xff]
      %v380 = vld [vmem:[#allocation2 + $0x120] sm:$0xff]
      %v381 = vld [vmem:[#allocation2 + $0x128] sm:$0xff]
      %v382 = vld [vmem:[#allocation2 + $0x138] sm:$0xff]
      %v383 = vld [vmem:[#allocation2 + $0x140] sm:$0xff]
      %v384 = vld [vmem:[#allocation2 + $0x150] sm:$0xff]
      %v385 = vld [vmem:[#allocation2 + $0x158] sm:$0xff]
      %v386 = vld [vmem:[#allocation2 + $0x168] sm:$0xff]
      %v387 = vld [vmem:[#allocation2 + $0x170] sm:$0xff]
      %v388 = vld [vmem:[#allocation2 + $0x1] sm:$0xff]
      %v389 = vld [vmem:[#allocation2 + $0x9] sm:$0xff]
      %v390 = vld [vmem:[#allocation2 + $0x19] sm:$0xff]
      %v391 = vld [vmem:[#allocation2 + $0x21] sm:$0xff]
      %v392 = vld [vmem:[#allocation2 + $0x31] sm:$0xff]
      %v393 = vld [vmem:[#allocation2 + $0x39] sm:$0xff]
      %v394 = vld [vmem:[#allocation2 + $0x49] sm:$0xff]
      %v395 = vld [vmem:[#allocation2 + $0x51] sm:$0xff]
      %v396 = vld [vmem:[#allocation2 + $0x61] sm:$0xff]
      %v397 = vld [vmem:[#allocation2 + $0x69] sm:$0xff]
      %v398 = vld [vmem:[#allocation2 + $0x79] sm:$0xff]
      %v399 = vld [vmem:[#allocation2 + $0x81] sm:$0xff]
      %v400 = vld [vmem:[#allocation2 + $0x91] sm:$0xff]
      %v401 = vld [vmem:[#allocation2 + $0x99] sm:$0xff]
      %v402 = vld [vmem:[#allocation2 + $0xa9] sm:$0xff]
      %v403 = vld [vmem:[#allocation2 + $0xb1] sm:$0xff]
      %v404 = vld [vmem:[#allocation2 + $0xc1] sm:$0xff]
      %v405 = vld [vmem:[#allocation2 + $0xc9] sm:$0xff]
      %v406 = vld [vmem:[#allocation2 + $0xd9] sm:$0xff]
      %v407 = vld [vmem:[#allocation2 + $0xe1] sm:$0xff]
      %v408 = vld [vmem:[#allocation2 + $0xf1] sm:$0xff]
      %v409 = vld [vmem:[#allocation2 + $0xf9] sm:$0xff]
      %v410 = vld [vmem:[#allocation2 + $0x109] sm:$0xff]
      %v411 = vld [vmem:[#allocation2 + $0x111] sm:$0xff]
      %v412 = vld [vmem:[#allocation2 + $0x121] sm:$0xff]
      %v413 = vld [vmem:[#allocation2 + $0x129] sm:$0xff]
      %v414 = vld [vmem:[#allocation2 + $0x139] sm:$0xff]
      %v415 = vld [vmem:[#allocation2 + $0x141] sm:$0xff]
      %v416 = vld [vmem:[#allocation2 + $0x151] sm:$0xff]
      %v417 = vld [vmem:[#allocation2 + $0x159] sm:$0xff]
      %v418 = vld [vmem:[#allocation2 + $0x169] sm:$0xff]
      %v419 = vld [vmem:[#allocation2 + $0x171] sm:$0xff]
      %v420 = vld [vmem:[#allocation2 + $0x2] sm:$0xff]
      %v421 = vld [vmem:[#allocation2 + $0xa] sm:$0xff]
      %v422 = vld [vmem:[#allocation2 + $0x1a] sm:$0xff]
      %v423 = vld [vmem:[#allocation2 + $0x22] sm:$0xff]
      %v424 = vld [vmem:[#allocation2 + $0x32] sm:$0xff]
      %v425 = vld [vmem:[#allocation2 + $0x3a] sm:$0xff]
      %v426 = vld [vmem:[#allocation2 + $0x4a] sm:$0xff]
      %v427 = vld [vmem:[#allocation2 + $0x52] sm:$0xff]
      %v428 = vld [vmem:[#allocation2 + $0x62] sm:$0xff]
      %v429 = vld [vmem:[#allocation2 + $0x6a] sm:$0xff]
      %v430 = vld [vmem:[#allocation2 + $0x7a] sm:$0xff]
      %v431 = vld [vmem:[#allocation2 + $0x82] sm:$0xff]
      %v432 = vld [vmem:[#allocation2 + $0x92] sm:$0xff]
      %v433 = vld [vmem:[#allocation2 + $0x9a] sm:$0xff]
      %v434 = vld [vmem:[#allocation2 + $0xaa] sm:$0xff]
      %v435 = vld [vmem:[#allocation2 + $0xb2] sm:$0xff]
      %v436 = vld [vmem:[#allocation2 + $0xc2] sm:$0xff]
      %v437 = vld [vmem:[#allocation2 + $0xca] sm:$0xff]
      %v438 = vld [vmem:[#allocation2 + $0xda] sm:$0xff]
      %v439 = vld [vmem:[#allocation2 + $0xe2] sm:$0xff]
      %v440 = vld [vmem:[#allocation2 + $0xf2] sm:$0xff]
      %v441 = vld [vmem:[#allocation2 + $0xfa] sm:$0xff]
      %v442 = vld [vmem:[#allocation2 + $0x10a] sm:$0xff]
      %v443 = vld [vmem:[#allocation2 + $0x112] sm:$0xff]
      %v444 = vld [vmem:[#allocation2 + $0x122] sm:$0xff]
      %v445 = vld [vmem:[#allocation2 + $0x12a] sm:$0xff]
      %v446 = vld [vmem:[#allocation2 + $0x13a] sm:$0xff]
      %v447 = vld [vmem:[#allocation2 + $0x142] sm:$0xff]
      %v448 = vld [vmem:[#allocation2 + $0x152] sm:$0xff]
      %v449 = vld [vmem:[#allocation2 + $0x15a] sm:$0xff]
      %v450 = vld [vmem:[#allocation2 + $0x16a] sm:$0xff]
      %v451 = vld [vmem:[#allocation2 + $0x172] sm:$0xff]
      %v452 = vld [vmem:[%s276] sm:$0xff]
      %v453 = vld [vmem:[%s276 + $0x8] sm:$0xff]
      %v454 = vld [vmem:[%s276 + $0x18] sm:$0xff]
      %v455 = vld [vmem:[%s276 + $0x20] sm:$0xff]
      %v456 = vld [vmem:[%s276 + $0x30] sm:$0xff]
      %v457 = vld [vmem:[%s276 + $0x38] sm:$0xff]
      %v458 = vld [vmem:[%s276 + $0x48] sm:$0xff]
      %v459 = vld [vmem:[%s276 + $0x50] sm:$0xff]
      %v460 = vld [vmem:[%s276 + $0x60] sm:$0xff]
      %v461 = vld [vmem:[%s276 + $0x68] sm:$0xff]
      %v462 = vld [vmem:[%s276 + $0x78] sm:$0xff]
      %v463 = vld [vmem:[%s276 + $0x80] sm:$0xff]
      %v464 = vld [vmem:[%s276 + $0x90] sm:$0xff]
      %v465 = vld [vmem:[%s276 + $0x98] sm:$0xff]
      %v466 = vld [vmem:[%s276 + $0xa8] sm:$0xff]
      %v467 = vld [vmem:[%s276 + $0xb0] sm:$0xff]
      %v468 = vld [vmem:[%s276 + $0xc0] sm:$0xff]
      %v469 = vld [vmem:[%s276 + $0xc8] sm:$0xff]
      %v470 = vld [vmem:[%s276 + $0xd8] sm:$0xff]
      %v471 = vld [vmem:[%s276 + $0xe0] sm:$0xff]
      %v472 = vld [vmem:[%s276 + $0xf0] sm:$0xff]
      %v473 = vld [vmem:[%s276 + $0xf8] sm:$0xff]
      %v474 = vld [vmem:[%s276 + $0x108] sm:$0xff]
      %v475 = vld [vmem:[%s276 + $0x110] sm:$0xff]
      %v476 = vld [vmem:[%s276 + $0x120] sm:$0xff]
      %v477 = vld [vmem:[%s276 + $0x128] sm:$0xff]
      %v478 = vld [vmem:[%s276 + $0x138] sm:$0xff]
      %v479 = vld [vmem:[%s276 + $0x140] sm:$0xff]
      %v480 = vld [vmem:[%s276 + $0x150] sm:$0xff]
      %v481 = vld [vmem:[%s276 + $0x158] sm:$0xff]
      %v482 = vld [vmem:[%s276 + $0x168] sm:$0xff]
      %v483 = vld [vmem:[%s276 + $0x170] sm:$0xff]
      %v484 = vld [vmem:[%s276 + $0x1] sm:$0xff]
      %v485 = vld [vmem:[%s276 + $0x9] sm:$0xff]
      %v486 = vld [vmem:[%s276 + $0x19] sm:$0xff]
      %v487 = vld [vmem:[%s276 + $0x21] sm:$0xff]
      %v488 = vld [vmem:[%s276 + $0x31] sm:$0xff]
      %v489 = vld [vmem:[%s276 + $0x39] sm:$0xff]
      %v490 = vld [vmem:[%s276 + $0x49] sm:$0xff]
      %v491 = vld [vmem:[%s276 + $0x51] sm:$0xff]
      %v492 = vld [vmem:[%s276 + $0x61] sm:$0xff]
      %v493 = vld [vmem:[%s276 + $0x69] sm:$0xff]
      %v494 = vld [vmem:[%s276 + $0x79] sm:$0xff]
      %v495 = vld [vmem:[%s276 + $0x81] sm:$0xff]
      %v496 = vld [vmem:[%s276 + $0x91] sm:$0xff]
      %v497 = vld [vmem:[%s276 + $0x99] sm:$0xff]
      %v498 = vld [vmem:[%s276 + $0xa9] sm:$0xff]
      %v499 = vld [vmem:[%s276 + $0xb1] sm:$0xff]
      %v500 = vld [vmem:[%s276 + $0xc1] sm:$0xff]
      %v501 = vld [vmem:[%s276 + $0xc9] sm:$0xff]
      %v502 = vld [vmem:[%s276 + $0xd9] sm:$0xff]
      %v503 = vld [vmem:[%s276 + $0xe1] sm:$0xff]
      %v504 = vld [vmem:[%s276 + $0xf1] sm:$0xff]
      %v505 = vld [vmem:[%s276 + $0xf9] sm:$0xff]
      %v506 = vld [vmem:[%s276 + $0x109] sm:$0xff]
      %v507 = vld [vmem:[%s276 + $0x111] sm:$0xff]
      %v508 = vld [vmem:[%s276 + $0x121] sm:$0xff]
      %v509 = vld [vmem:[%s276 + $0x129] sm:$0xff]
      %v510 = vld [vmem:[%s276 + $0x139] sm:$0xff]
      %v511 = vld [vmem:[%s276 + $0x141] sm:$0xff]
      %v512 = vld [vmem:[%s276 + $0x151] sm:$0xff]
      %v513 = vld [vmem:[%s276 + $0x159] sm:$0xff]
      %v514 = vld [vmem:[%s276 + $0x169] sm:$0xff]
      %v515 = vld [vmem:[%s276 + $0x171] sm:$0xff]
      %v516 = vld [vmem:[%s276 + $0x2] sm:$0xff]
      %v517 = vld [vmem:[%s276 + $0xa] sm:$0xff]
      %v518 = vld [vmem:[%s276 + $0x1a] sm:$0xff]
      %v519 = vld [vmem:[%s276 + $0x22] sm:$0xff]
      %v520 = vld [vmem:[%s276 + $0x32] sm:$0xff]
      %v521 = vld [vmem:[%s276 + $0x3a] sm:$0xff]
      %v522 = vld [vmem:[%s276 + $0x4a] sm:$0xff]
      %v523 = vld [vmem:[%s276 + $0x52] sm:$0xff]
      %v524 = vld [vmem:[%s276 + $0x62] sm:$0xff]
      %v525 = vld [vmem:[%s276 + $0x6a] sm:$0xff]
      %v526 = vld [vmem:[%s276 + $0x7a] sm:$0xff]
      %v527 = vld [vmem:[%s276 + $0x82] sm:$0xff]
      %v528 = vld [vmem:[%s276 + $0x92] sm:$0xff]
      %v529 = vld [vmem:[%s276 + $0x9a] sm:$0xff]
      %v530 = vld [vmem:[%s276 + $0xaa] sm:$0xff]
      %v531 = vld [vmem:[%s276 + $0xb2] sm:$0xff]
      %v532 = vld [vmem:[%s276 + $0xc2] sm:$0xff]
      %v533 = vld [vmem:[%s276 + $0xca] sm:$0xff]
      %v534 = vld [vmem:[%s276 + $0xda] sm:$0xff]
      %v535 = vld [vmem:[%s276 + $0xe2] sm:$0xff]
      %v536 = vld [vmem:[%s276 + $0xf2] sm:$0xff]
      %v537 = vld [vmem:[%s276 + $0xfa] sm:$0xff]
      %v538 = vld [vmem:[%s276 + $0x10a] sm:$0xff]
      %v539 = vld [vmem:[%s276 + $0x112] sm:$0xff]
      %v540 = vld [vmem:[%s276 + $0x122] sm:$0xff]
      %v541 = vld [vmem:[%s276 + $0x12a] sm:$0xff]
      %v542 = vld [vmem:[%s276 + $0x13a] sm:$0xff]
      %v543 = vld [vmem:[%s276 + $0x142] sm:$0xff]
      %v544 = vld [vmem:[%s276 + $0x152] sm:$0xff]
      %v545 = vld [vmem:[%s276 + $0x15a] sm:$0xff]
      %v546 = vld [vmem:[%s276 + $0x16a] sm:$0xff]
      %v547 = vld [vmem:[%s276 + $0x172] sm:$0xff]
      %s548 = scalar_lea.vmem [#allocation2], 48
      %v549 = vld [vmem:[%s548] sm:$0xff]
      %v550 = vld [vmem:[%s548 + $0x8] sm:$0xff]
      %v551 = vld [vmem:[%s548 + $0x18] sm:$0xff]
      %v552 = vld [vmem:[%s548 + $0x20] sm:$0xff]
      %v553 = vld [vmem:[%s548 + $0x30] sm:$0xff]
      %v554 = vld [vmem:[%s548 + $0x38] sm:$0xff]
      %v555 = vld [vmem:[%s548 + $0x48] sm:$0xff]
      %v556 = vld [vmem:[%s548 + $0x50] sm:$0xff]
      %v557 = vld [vmem:[%s548 + $0x60] sm:$0xff]
      %v558 = vld [vmem:[%s548 + $0x68] sm:$0xff]
      %v559 = vld [vmem:[%s548 + $0x78] sm:$0xff]
      %v560 = vld [vmem:[%s548 + $0x80] sm:$0xff]
      %v561 = vld [vmem:[%s548 + $0x90] sm:$0xff]
      %v562 = vld [vmem:[%s548 + $0x98] sm:$0xff]
      %v563 = vld [vmem:[%s548 + $0xa8] sm:$0xff]
      %v564 = vld [vmem:[%s548 + $0xb0] sm:$0xff]
      %v565 = vld [vmem:[%s548 + $0xc0] sm:$0xff]
      %v566 = vld [vmem:[%s548 + $0xc8] sm:$0xff]
      %v567 = vld [vmem:[%s548 + $0xd8] sm:$0xff]
      %v568 = vld [vmem:[%s548 + $0xe0] sm:$0xff]
      %v569 = vld [vmem:[%s548 + $0xf0] sm:$0xff]
      %v570 = vld [vmem:[%s548 + $0xf8] sm:$0xff]
      %v571 = vld [vmem:[%s548 + $0x108] sm:$0xff]
      %v572 = vld [vmem:[%s548 + $0x110] sm:$0xff]
      %v573 = vld [vmem:[%s548 + $0x120] sm:$0xff]
      %v574 = vld [vmem:[%s548 + $0x128] sm:$0xff]
      %v575 = vld [vmem:[%s548 + $0x138] sm:$0xff]
      %v576 = vld [vmem:[%s548 + $0x140] sm:$0xff]
      %v577 = vld [vmem:[%s548 + $0x150] sm:$0xff]
      %v578 = vld [vmem:[%s548 + $0x158] sm:$0xff]
      %v579 = vld [vmem:[%s548 + $0x168] sm:$0xff]
      %v580 = vld [vmem:[%s548 + $0x170] sm:$0xff]
      %v581 = vld [vmem:[%s548 + $0x1] sm:$0xff]
      %v582 = vld [vmem:[%s548 + $0x9] sm:$0xff]
      %v583 = vld [vmem:[%s548 + $0x19] sm:$0xff]
      %v584 = vld [vmem:[%s548 + $0x21] sm:$0xff]
      %v585 = vld [vmem:[%s548 + $0x31] sm:$0xff]
      %v586 = vld [vmem:[%s548 + $0x39] sm:$0xff]
      %v587 = vld [vmem:[%s548 + $0x49] sm:$0xff]
      %v588 = vld [vmem:[%s548 + $0x51] sm:$0xff]
      %v589 = vld [vmem:[%s548 + $0x61] sm:$0xff]
      %v590 = vld [vmem:[%s548 + $0x69] sm:$0xff]
      %v591 = vld [vmem:[%s548 + $0x79] sm:$0xff]
      %v592 = vld [vmem:[%s548 + $0x81] sm:$0xff]
      %v593 = vld [vmem:[%s548 + $0x91] sm:$0xff]
      %v594 = vld [vmem:[%s548 + $0x99] sm:$0xff]
      %v595 = vld [vmem:[%s548 + $0xa9] sm:$0xff]
      %v596 = vld [vmem:[%s548 + $0xb1] sm:$0xff]
      %v597 = vld [vmem:[%s548 + $0xc1] sm:$0xff]
      %v598 = vld [vmem:[%s548 + $0xc9] sm:$0xff]
      %v599 = vld [vmem:[%s548 + $0xd9] sm:$0xff]
      %v600 = vld [vmem:[%s548 + $0xe1] sm:$0xff]
      %v601 = vld [vmem:[%s548 + $0xf1] sm:$0xff]
      %v602 = vld [vmem:[%s548 + $0xf9] sm:$0xff]
      %v603 = vld [vmem:[%s548 + $0x109] sm:$0xff]
      %v604 = vld [vmem:[%s548 + $0x111] sm:$0xff]
      %v605 = vld [vmem:[%s548 + $0x121] sm:$0xff]
      %v606 = vld [vmem:[%s548 + $0x129] sm:$0xff]
      %v607 = vld [vmem:[%s548 + $0x139] sm:$0xff]
      %v608 = vld [vmem:[%s548 + $0x141] sm:$0xff]
      %v609 = vld [vmem:[%s548 + $0x151] sm:$0xff]
      %v610 = vld [vmem:[%s548 + $0x159] sm:$0xff]
      %v611 = vld [vmem:[%s548 + $0x169] sm:$0xff]
      %v612 = vld [vmem:[%s548 + $0x171] sm:$0xff]
      %v613 = vld [vmem:[%s548 + $0x2] sm:$0xff]
      %v614 = vld [vmem:[%s548 + $0xa] sm:$0xff]
      %v615 = vld [vmem:[%s548 + $0x1a] sm:$0xff]
      %v616 = vld [vmem:[%s548 + $0x22] sm:$0xff]
      %v617 = vld [vmem:[%s548 + $0x32] sm:$0xff]
      %v618 = vld [vmem:[%s548 + $0x3a] sm:$0xff]
      %v619 = vld [vmem:[%s548 + $0x4a] sm:$0xff]
      %v620 = vld [vmem:[%s548 + $0x52] sm:$0xff]
      %v621 = vld [vmem:[%s548 + $0x62] sm:$0xff]
      %v622 = vld [vmem:[%s548 + $0x6a] sm:$0xff]
      %v623 = vld [vmem:[%s548 + $0x7a] sm:$0xff]
      %v624 = vld [vmem:[%s548 + $0x82] sm:$0xff]
      %v625 = vld [vmem:[%s548 + $0x92] sm:$0xff]
      %v626 = vld [vmem:[%s548 + $0x9a] sm:$0xff]
      %v627 = vld [vmem:[%s548 + $0xaa] sm:$0xff]
      %v628 = vld [vmem:[%s548 + $0xb2] sm:$0xff]
      %v629 = vld [vmem:[%s548 + $0xc2] sm:$0xff]
      %v630 = vld [vmem:[%s548 + $0xca] sm:$0xff]
      %v631 = vld [vmem:[%s548 + $0xda] sm:$0xff]
      %v632 = vld [vmem:[%s548 + $0xe2] sm:$0xff]
      %v633 = vld [vmem:[%s548 + $0xf2] sm:$0xff]
      %v634 = vld [vmem:[%s548 + $0xfa] sm:$0xff]
      %v635 = vld [vmem:[%s548 + $0x10a] sm:$0xff]
      %v636 = vld [vmem:[%s548 + $0x112] sm:$0xff]
      %v637 = vld [vmem:[%s548 + $0x122] sm:$0xff]
      %v638 = vld [vmem:[%s548 + $0x12a] sm:$0xff]
      %v639 = vld [vmem:[%s548 + $0x13a] sm:$0xff]
      %v640 = vld [vmem:[%s548 + $0x142] sm:$0xff]
      %v641 = vld [vmem:[%s548 + $0x152] sm:$0xff]
      %v642 = vld [vmem:[%s548 + $0x15a] sm:$0xff]
      %v643 = vld [vmem:[%s548 + $0x16a] sm:$0xff]
      %v644 = vld [vmem:[%s548 + $0x172] sm:$0xff]
      %677 = vrot.lane.b32.xlu0 %v388, 4
      %v678 = vpop.permute.xlu0 %677
      %679 = vrot.lane.b32.xlu0 %v389, 4
      %v680 = vpop.permute.xlu0 %679
      %681 = vrot.lane.b32.xlu0 %v390, 4
      %v682 = vpop.permute.xlu0 %681
      %683 = vrot.lane.b32.xlu0 %v391, 4
      %v684 = vpop.permute.xlu0 %683
      %685 = vrot.lane.b32.xlu0 %v392, 4
      %v686 = vpop.permute.xlu0 %685
      %687 = vrot.lane.b32.xlu0 %v393, 4
      %v688 = vpop.permute.xlu0 %687
      %689 = vrot.lane.b32.xlu0 %v394, 4
      %v690 = vpop.permute.xlu0 %689
      %691 = vrot.lane.b32.xlu0 %v395, 4
      %v692 = vpop.permute.xlu0 %691
      %693 = vrot.lane.b32.xlu0 %v396, 4
      %v694 = vpop.permute.xlu0 %693
      %695 = vrot.lane.b32.xlu0 %v397, 4
      %v696 = vpop.permute.xlu0 %695
      %697 = vrot.lane.b32.xlu0 %v398, 4
      %v698 = vpop.permute.xlu0 %697
      %699 = vrot.lane.b32.xlu0 %v399, 4
      %v700 = vpop.permute.xlu0 %699
      %701 = vrot.lane.b32.xlu0 %v400, 4
      %v702 = vpop.permute.xlu0 %701
      %703 = vrot.lane.b32.xlu0 %v401, 4
      %v704 = vpop.permute.xlu0 %703
      %705 = vrot.lane.b32.xlu0 %v402, 4
      %v706 = vpop.permute.xlu0 %705
      %707 = vrot.lane.b32.xlu0 %v403, 4
      %v708 = vpop.permute.xlu0 %707
      %709 = vrot.lane.b32.xlu0 %v404, 4
      %v710 = vpop.permute.xlu0 %709
      %711 = vrot.lane.b32.xlu0 %v405, 4
      %v712 = vpop.permute.xlu0 %711
      %713 = vrot.lane.b32.xlu0 %v406, 4
      %v714 = vpop.permute.xlu0 %713
      %715 = vrot.lane.b32.xlu0 %v407, 4
      %v716 = vpop.permute.xlu0 %715
      %717 = vrot.lane.b32.xlu0 %v408, 4
      %v718 = vpop.permute.xlu0 %717
      %719 = vrot.lane.b32.xlu0 %v409, 4
      %v720 = vpop.permute.xlu0 %719
      %721 = vrot.lane.b32.xlu0 %v410, 4
      %v722 = vpop.permute.xlu0 %721
      %723 = vrot.lane.b32.xlu0 %v411, 4
      %v724 = vpop.permute.xlu0 %723
      %725 = vrot.lane.b32.xlu0 %v412, 4
      %v726 = vpop.permute.xlu0 %725
      %727 = vrot.lane.b32.xlu0 %v413, 4
      %v728 = vpop.permute.xlu0 %727
      %729 = vrot.lane.b32.xlu0 %v414, 4
      %v730 = vpop.permute.xlu0 %729
      %731 = vrot.lane.b32.xlu0 %v415, 4
      %v732 = vpop.permute.xlu0 %731
      %733 = vrot.lane.b32.xlu0 %v416, 4
      %v734 = vpop.permute.xlu0 %733
      %735 = vrot.lane.b32.xlu0 %v417, 4
      %v736 = vpop.permute.xlu0 %735
      %737 = vrot.lane.b32.xlu0 %v418, 4
      %v738 = vpop.permute.xlu0 %737
      %739 = vrot.lane.b32.xlu0 %v419, 4
      %v740 = vpop.permute.xlu0 %739
      %805 = vrot.lane.b32.xlu0 %v420, 8
      %v806 = vpop.permute.xlu0 %805
      %807 = vrot.lane.b32.xlu0 %v421, 8
      %v808 = vpop.permute.xlu0 %807
      %809 = vrot.lane.b32.xlu0 %v422, 8
      %v810 = vpop.permute.xlu0 %809
      %811 = vrot.lane.b32.xlu0 %v423, 8
      %v812 = vpop.permute.xlu0 %811
      %813 = vrot.lane.b32.xlu0 %v424, 8
      %v814 = vpop.permute.xlu0 %813
      %815 = vrot.lane.b32.xlu0 %v425, 8
      %v816 = vpop.permute.xlu0 %815
      %817 = vrot.lane.b32.xlu0 %v426, 8
      %v818 = vpop.permute.xlu0 %817
      %819 = vrot.lane.b32.xlu0 %v427, 8
      %v820 = vpop.permute.xlu0 %819
      %821 = vrot.lane.b32.xlu0 %v428, 8
      %v822 = vpop.permute.xlu0 %821
      %823 = vrot.lane.b32.xlu0 %v429, 8
      %v824 = vpop.permute.xlu0 %823
      %825 = vrot.lane.b32.xlu0 %v430, 8
      %v826 = vpop.permute.xlu0 %825
      %827 = vrot.lane.b32.xlu0 %v431, 8
      %v828 = vpop.permute.xlu0 %827
      %829 = vrot.lane.b32.xlu0 %v432, 8
      %v830 = vpop.permute.xlu0 %829
      %831 = vrot.lane.b32.xlu0 %v433, 8
      %v832 = vpop.permute.xlu0 %831
      %833 = vrot.lane.b32.xlu0 %v434, 8
      %v834 = vpop.permute.xlu0 %833
      %835 = vrot.lane.b32.xlu0 %v435, 8
      %v836 = vpop.permute.xlu0 %835
      %837 = vrot.lane.b32.xlu0 %v436, 8
      %v838 = vpop.permute.xlu0 %837
      %839 = vrot.lane.b32.xlu0 %v437, 8
      %v840 = vpop.permute.xlu0 %839
      %841 = vrot.lane.b32.xlu0 %v438, 8
      %v842 = vpop.permute.xlu0 %841
      %843 = vrot.lane.b32.xlu0 %v439, 8
      %v844 = vpop.permute.xlu0 %843
      %845 = vrot.lane.b32.xlu0 %v440, 8
      %v846 = vpop.permute.xlu0 %845
      %847 = vrot.lane.b32.xlu0 %v441, 8
      %v848 = vpop.permute.xlu0 %847
      %849 = vrot.lane.b32.xlu0 %v442, 8
      %v850 = vpop.permute.xlu0 %849
      %851 = vrot.lane.b32.xlu0 %v443, 8
      %v852 = vpop.permute.xlu0 %851
      %853 = vrot.lane.b32.xlu0 %v444, 8
      %v854 = vpop.permute.xlu0 %853
      %855 = vrot.lane.b32.xlu0 %v445, 8
      %v856 = vpop.permute.xlu0 %855
      %857 = vrot.lane.b32.xlu0 %v446, 8
      %v858 = vpop.permute.xlu0 %857
      %859 = vrot.lane.b32.xlu0 %v447, 8
      %v860 = vpop.permute.xlu0 %859
      %861 = vrot.lane.b32.xlu0 %v448, 8
      %v862 = vpop.permute.xlu0 %861
      %863 = vrot.lane.b32.xlu0 %v449, 8
      %v864 = vpop.permute.xlu0 %863
      %865 = vrot.lane.b32.xlu0 %v450, 8
      %v866 = vpop.permute.xlu0 %865
      %867 = vrot.lane.b32.xlu0 %v451, 8
      %v868 = vpop.permute.xlu0 %867
      %933 = vrot.lane.b32.xlu0 %v452, 12
      %v934 = vpop.permute.xlu0 %933
      %935 = vrot.lane.b32.xlu0 %v453, 12
      %v936 = vpop.permute.xlu0 %935
      %937 = vrot.lane.b32.xlu0 %v454, 12
      %v938 = vpop.permute.xlu0 %937
      %939 = vrot.lane.b32.xlu0 %v455, 12
      %v940 = vpop.permute.xlu0 %939
      %941 = vrot.lane.b32.xlu0 %v456, 12
      %v942 = vpop.permute.xlu0 %941
      %943 = vrot.lane.b32.xlu0 %v457, 12
      %v944 = vpop.permute.xlu0 %943
      %945 = vrot.lane.b32.xlu0 %v458, 12
      %v946 = vpop.permute.xlu0 %945
      %947 = vrot.lane.b32.xlu0 %v459, 12
      %v948 = vpop.permute.xlu0 %947
      %949 = vrot.lane.b32.xlu0 %v460, 12
      %v950 = vpop.permute.xlu0 %949
      %951 = vrot.lane.b32.xlu0 %v461, 12
      %v952 = vpop.permute.xlu0 %951
      %953 = vrot.lane.b32.xlu0 %v462, 12
      %v954 = vpop.permute.xlu0 %953
      %955 = vrot.lane.b32.xlu0 %v463, 12
      %v956 = vpop.permute.xlu0 %955
      %957 = vrot.lane.b32.xlu0 %v464, 12
      %v958 = vpop.permute.xlu0 %957
      %959 = vrot.lane.b32.xlu0 %v465, 12
      %v960 = vpop.permute.xlu0 %959
      %961 = vrot.lane.b32.xlu0 %v466, 12
      %v962 = vpop.permute.xlu0 %961
      %963 = vrot.lane.b32.xlu0 %v467, 12
      %v964 = vpop.permute.xlu0 %963
      %965 = vrot.lane.b32.xlu0 %v468, 12
      %v966 = vpop.permute.xlu0 %965
      %967 = vrot.lane.b32.xlu0 %v469, 12
      %v968 = vpop.permute.xlu0 %967
      %969 = vrot.lane.b32.xlu0 %v470, 12
      %v970 = vpop.permute.xlu0 %969
      %971 = vrot.lane.b32.xlu0 %v471, 12
      %v972 = vpop.permute.xlu0 %971
      %973 = vrot.lane.b32.xlu0 %v472, 12
      %v974 = vpop.permute.xlu0 %973
      %975 = vrot.lane.b32.xlu0 %v473, 12
      %v976 = vpop.permute.xlu0 %975
      %977 = vrot.lane.b32.xlu0 %v474, 12
      %v978 = vpop.permute.xlu0 %977
      %979 = vrot.lane.b32.xlu0 %v475, 12
      %v980 = vpop.permute.xlu0 %979
      %981 = vrot.lane.b32.xlu0 %v476, 12
      %v982 = vpop.permute.xlu0 %981
      %983 = vrot.lane.b32.xlu0 %v477, 12
      %v984 = vpop.permute.xlu0 %983
      %985 = vrot.lane.b32.xlu0 %v478, 12
      %v986 = vpop.permute.xlu0 %985
      %987 = vrot.lane.b32.xlu0 %v479, 12
      %v988 = vpop.permute.xlu0 %987
      %989 = vrot.lane.b32.xlu0 %v480, 12
      %v990 = vpop.permute.xlu0 %989
      %991 = vrot.lane.b32.xlu0 %v481, 12
      %v992 = vpop.permute.xlu0 %991
      %993 = vrot.lane.b32.xlu0 %v482, 12
      %v994 = vpop.permute.xlu0 %993
      %995 = vrot.lane.b32.xlu0 %v483, 12
      %v996 = vpop.permute.xlu0 %995
      %1061 = vrot.lane.b32.xlu0 %v484, 16
      %v1062 = vpop.permute.xlu0 %1061
      %1063 = vrot.lane.b32.xlu0 %v485, 16
      %v1064 = vpop.permute.xlu0 %1063
      %1065 = vrot.lane.b32.xlu0 %v486, 16
      %v1066 = vpop.permute.xlu0 %1065
      %1067 = vrot.lane.b32.xlu0 %v487, 16
      %v1068 = vpop.permute.xlu0 %1067
      %1069 = vrot.lane.b32.xlu0 %v488, 16
      %v1070 = vpop.permute.xlu0 %1069
      %1071 = vrot.lane.b32.xlu0 %v489, 16
      %v1072 = vpop.permute.xlu0 %1071
      %1073 = vrot.lane.b32.xlu0 %v490, 16
      %v1074 = vpop.permute.xlu0 %1073
      %1075 = vrot.lane.b32.xlu0 %v491, 16
      %v1076 = vpop.permute.xlu0 %1075
      %1077 = vrot.lane.b32.xlu0 %v492, 16
      %v1078 = vpop.permute.xlu0 %1077
      %1079 = vrot.lane.b32.xlu0 %v493, 16
      %v1080 = vpop.permute.xlu0 %1079
      %1081 = vrot.lane.b32.xlu0 %v494, 16
      %v1082 = vpop.permute.xlu0 %1081
      %1083 = vrot.lane.b32.xlu0 %v495, 16
      %v1084 = vpop.permute.xlu0 %1083
      %1085 = vrot.lane.b32.xlu0 %v496, 16
      %v1086 = vpop.permute.xlu0 %1085
      %1087 = vrot.lane.b32.xlu0 %v497, 16
      %v1088 = vpop.permute.xlu0 %1087
      %1089 = vrot.lane.b32.xlu0 %v498, 16
      %v1090 = vpop.permute.xlu0 %1089
      %1091 = vrot.lane.b32.xlu0 %v499, 16
      %v1092 = vpop.permute.xlu0 %1091
      %1093 = vrot.lane.b32.xlu0 %v500, 16
      %v1094 = vpop.permute.xlu0 %1093
      %1095 = vrot.lane.b32.xlu0 %v501, 16
      %v1096 = vpop.permute.xlu0 %1095
      %1097 = vrot.lane.b32.xlu0 %v502, 16
      %v1098 = vpop.permute.xlu0 %1097
      %1099 = vrot.lane.b32.xlu0 %v503, 16
      %v1100 = vpop.permute.xlu0 %1099
      %1101 = vrot.lane.b32.xlu0 %v504, 16
      %v1102 = vpop.permute.xlu0 %1101
      %1103 = vrot.lane.b32.xlu0 %v505, 16
      %v1104 = vpop.permute.xlu0 %1103
      %1105 = vrot.lane.b32.xlu0 %v506, 16
      %v1106 = vpop.permute.xlu0 %1105
      %1107 = vrot.lane.b32.xlu0 %v507, 16
      %v1108 = vpop.permute.xlu0 %1107
      %1109 = vrot.lane.b32.xlu0 %v508, 16
      %v1110 = vpop.permute.xlu0 %1109
      %1111 = vrot.lane.b32.xlu0 %v509, 16
      %v1112 = vpop.permute.xlu0 %1111
      %1113 = vrot.lane.b32.xlu0 %v510, 16
      %v1114 = vpop.permute.xlu0 %1113
      %1115 = vrot.lane.b32.xlu0 %v511, 16
      %v1116 = vpop.permute.xlu0 %1115
      %1117 = vrot.lane.b32.xlu0 %v512, 16
      %v1118 = vpop.permute.xlu0 %1117
      %1119 = vrot.lane.b32.xlu0 %v513, 16
      %v1120 = vpop.permute.xlu0 %1119
      %1121 = vrot.lane.b32.xlu0 %v514, 16
      %v1122 = vpop.permute.xlu0 %1121
      %1123 = vrot.lane.b32.xlu0 %v515, 16
      %v1124 = vpop.permute.xlu0 %1123
      %1189 = vrot.lane.b32.xlu0 %v516, 20
      %v1190 = vpop.permute.xlu0 %1189
      %1191 = vrot.lane.b32.xlu0 %v517, 20
      %v1192 = vpop.permute.xlu0 %1191
      %1193 = vrot.lane.b32.xlu0 %v518, 20
      %v1194 = vpop.permute.xlu0 %1193
      %1195 = vrot.lane.b32.xlu0 %v519, 20
      %v1196 = vpop.permute.xlu0 %1195
      %1197 = vrot.lane.b32.xlu0 %v520, 20
      %v1198 = vpop.permute.xlu0 %1197
      %1199 = vrot.lane.b32.xlu0 %v521, 20
      %v1200 = vpop.permute.xlu0 %1199
      %1201 = vrot.lane.b32.xlu0 %v522, 20
      %v1202 = vpop.permute.xlu0 %1201
      %1203 = vrot.lane.b32.xlu0 %v523, 20
      %v1204 = vpop.permute.xlu0 %1203
      %1205 = vrot.lane.b32.xlu0 %v524, 20
      %v1206 = vpop.permute.xlu0 %1205
      %1207 = vrot.lane.b32.xlu0 %v525, 20
      %v1208 = vpop.permute.xlu0 %1207
      %1209 = vrot.lane.b32.xlu0 %v526, 20
      %v1210 = vpop.permute.xlu0 %1209
      %1211 = vrot.lane.b32.xlu0 %v527, 20
      %v1212 = vpop.permute.xlu0 %1211
      %1213 = vrot.lane.b32.xlu0 %v528, 20
      %v1214 = vpop.permute.xlu0 %1213
      %1215 = vrot.lane.b32.xlu0 %v529, 20
      %v1216 = vpop.permute.xlu0 %1215
      %1217 = vrot.lane.b32.xlu0 %v530, 20
      %v1218 = vpop.permute.xlu0 %1217
      %1219 = vrot.lane.b32.xlu0 %v531, 20
      %v1220 = vpop.permute.xlu0 %1219
      %1221 = vrot.lane.b32.xlu0 %v532, 20
      %v1222 = vpop.permute.xlu0 %1221
      %1223 = vrot.lane.b32.xlu0 %v533, 20
      %v1224 = vpop.permute.xlu0 %1223
      %1225 = vrot.lane.b32.xlu0 %v534, 20
      %v1226 = vpop.permute.xlu0 %1225
      %1227 = vrot.lane.b32.xlu0 %v535, 20
      %v1228 = vpop.permute.xlu0 %1227
      %1229 = vrot.lane.b32.xlu0 %v536, 20
      %v1230 = vpop.permute.xlu0 %1229
      %1231 = vrot.lane.b32.xlu0 %v537, 20
      %v1232 = vpop.permute.xlu0 %1231
      %1233 = vrot.lane.b32.xlu0 %v538, 20
      %v1234 = vpop.permute.xlu0 %1233
      %1235 = vrot.lane.b32.xlu0 %v539, 20
      %v1236 = vpop.permute.xlu0 %1235
      %1237 = vrot.lane.b32.xlu0 %v540, 20
      %v1238 = vpop.permute.xlu0 %1237
      %1239 = vrot.lane.b32.xlu0 %v541, 20
      %v1240 = vpop.permute.xlu0 %1239
      %1241 = vrot.lane.b32.xlu0 %v542, 20
      %v1242 = vpop.permute.xlu0 %1241
      %1243 = vrot.lane.b32.xlu0 %v543, 20
      %v1244 = vpop.permute.xlu0 %1243
      %1245 = vrot.lane.b32.xlu0 %v544, 20
      %v1246 = vpop.permute.xlu0 %1245
      %1247 = vrot.lane.b32.xlu0 %v545, 20
      %v1248 = vpop.permute.xlu0 %1247
      %1249 = vrot.lane.b32.xlu0 %v546, 20
      %v1250 = vpop.permute.xlu0 %1249
      %1251 = vrot.lane.b32.xlu0 %v547, 20
      %v1252 = vpop.permute.xlu0 %1251
      %1317 = vrot.lane.b32.xlu0 %v549, 24
      %v1318 = vpop.permute.xlu0 %1317
      %1319 = vrot.lane.b32.xlu0 %v550, 24
      %v1320 = vpop.permute.xlu0 %1319
      %1321 = vrot.lane.b32.xlu0 %v551, 24
      %v1322 = vpop.permute.xlu0 %1321
      %1323 = vrot.lane.b32.xlu0 %v552, 24
      %v1324 = vpop.permute.xlu0 %1323
      %1325 = vrot.lane.b32.xlu0 %v553, 24
      %v1326 = vpop.permute.xlu0 %1325
      %1327 = vrot.lane.b32.xlu0 %v554, 24
      %v1328 = vpop.permute.xlu0 %1327
      %1329 = vrot.lane.b32.xlu0 %v555, 24
      %v1330 = vpop.permute.xlu0 %1329
      %1331 = vrot.lane.b32.xlu0 %v556, 24
      %v1332 = vpop.permute.xlu0 %1331
      %1333 = vrot.lane.b32.xlu0 %v557, 24
      %v1334 = vpop.permute.xlu0 %1333
      %1335 = vrot.lane.b32.xlu0 %v558, 24
      %v1336 = vpop.permute.xlu0 %1335
      %1337 = vrot.lane.b32.xlu0 %v559, 24
      %v1338 = vpop.permute.xlu0 %1337
      %1339 = vrot.lane.b32.xlu0 %v560, 24
      %v1340 = vpop.permute.xlu0 %1339
      %1341 = vrot.lane.b32.xlu0 %v561, 24
      %v1342 = vpop.permute.xlu0 %1341
      %1343 = vrot.lane.b32.xlu0 %v562, 24
      %v1344 = vpop.permute.xlu0 %1343
      %1345 = vrot.lane.b32.xlu0 %v563, 24
      %v1346 = vpop.permute.xlu0 %1345
      %1347 = vrot.lane.b32.xlu0 %v564, 24
      %v1348 = vpop.permute.xlu0 %1347
      %1349 = vrot.lane.b32.xlu0 %v565, 24
      %v1350 = vpop.permute.xlu0 %1349
      %1351 = vrot.lane.b32.xlu0 %v566, 24
      %v1352 = vpop.permute.xlu0 %1351
      %1353 = vrot.lane.b32.xlu0 %v567, 24
      %v1354 = vpop.permute.xlu0 %1353
      %1355 = vrot.lane.b32.xlu0 %v568, 24
      %v1356 = vpop.permute.xlu0 %1355
      %1357 = vrot.lane.b32.xlu0 %v569, 24
      %v1358 = vpop.permute.xlu0 %1357
      %1359 = vrot.lane.b32.xlu0 %v570, 24
      %v1360 = vpop.permute.xlu0 %1359
      %1361 = vrot.lane.b32.xlu0 %v571, 24
      %v1362 = vpop.permute.xlu0 %1361
      %1363 = vrot.lane.b32.xlu0 %v572, 24
      %v1364 = vpop.permute.xlu0 %1363
      %1365 = vrot.lane.b32.xlu0 %v573, 24
      %v1366 = vpop.permute.xlu0 %1365
      %1367 = vrot.lane.b32.xlu0 %v574, 24
      %v1368 = vpop.permute.xlu0 %1367
      %1369 = vrot.lane.b32.xlu0 %v575, 24
      %v1370 = vpop.permute.xlu0 %1369
      %1371 = vrot.lane.b32.xlu0 %v576, 24
      %v1372 = vpop.permute.xlu0 %1371
      %1373 = vrot.lane.b32.xlu0 %v577, 24
      %v1374 = vpop.permute.xlu0 %1373
      %1375 = vrot.lane.b32.xlu0 %v578, 24
      %v1376 = vpop.permute.xlu0 %1375
      %1377 = vrot.lane.b32.xlu0 %v579, 24
      %v1378 = vpop.permute.xlu0 %1377
      %1379 = vrot.lane.b32.xlu0 %v580, 24
      %v1380 = vpop.permute.xlu0 %1379
      %1445 = vrot.lane.b32.xlu0 %v581, 28
      %v1446 = vpop.permute.xlu0 %1445
      %1447 = vrot.lane.b32.xlu0 %v582, 28
      %v1448 = vpop.permute.xlu0 %1447
      %1449 = vrot.lane.b32.xlu0 %v583, 28
      %v1450 = vpop.permute.xlu0 %1449
      %1451 = vrot.lane.b32.xlu0 %v584, 28
      %v1452 = vpop.permute.xlu0 %1451
      %1453 = vrot.lane.b32.xlu0 %v585, 28
      %v1454 = vpop.permute.xlu0 %1453
      %1455 = vrot.lane.b32.xlu0 %v586, 28
      %v1456 = vpop.permute.xlu0 %1455
      %1457 = vrot.lane.b32.xlu0 %v587, 28
      %v1458 = vpop.permute.xlu0 %1457
      %1459 = vrot.lane.b32.xlu0 %v588, 28
      %v1460 = vpop.permute.xlu0 %1459
      %1461 = vrot.lane.b32.xlu0 %v589, 28
      %v1462 = vpop.permute.xlu0 %1461
      %1463 = vrot.lane.b32.xlu0 %v590, 28
      %v1464 = vpop.permute.xlu0 %1463
      %1465 = vrot.lane.b32.xlu0 %v591, 28
      %v1466 = vpop.permute.xlu0 %1465
      %1467 = vrot.lane.b32.xlu0 %v592, 28
      %v1468 = vpop.permute.xlu0 %1467
      %1469 = vrot.lane.b32.xlu0 %v593, 28
      %v1470 = vpop.permute.xlu0 %1469
      %1471 = vrot.lane.b32.xlu0 %v594, 28
      %v1472 = vpop.permute.xlu0 %1471
      %1473 = vrot.lane.b32.xlu0 %v595, 28
      %v1474 = vpop.permute.xlu0 %1473
      %1475 = vrot.lane.b32.xlu0 %v596, 28
      %v1476 = vpop.permute.xlu0 %1475
      %1477 = vrot.lane.b32.xlu0 %v597, 28
      %v1478 = vpop.permute.xlu0 %1477
      %1479 = vrot.lane.b32.xlu0 %v598, 28
      %v1480 = vpop.permute.xlu0 %1479
      %1481 = vrot.lane.b32.xlu0 %v599, 28
      %v1482 = vpop.permute.xlu0 %1481
      %1483 = vrot.lane.b32.xlu0 %v600, 28
      %v1484 = vpop.permute.xlu0 %1483
      %1485 = vrot.lane.b32.xlu0 %v601, 28
      %v1486 = vpop.permute.xlu0 %1485
      %1487 = vrot.lane.b32.xlu0 %v602, 28
      %v1488 = vpop.permute.xlu0 %1487
      %1489 = vrot.lane.b32.xlu0 %v603, 28
      %v1490 = vpop.permute.xlu0 %1489
      %1491 = vrot.lane.b32.xlu0 %v604, 28
      %v1492 = vpop.permute.xlu0 %1491
      %1493 = vrot.lane.b32.xlu0 %v605, 28
      %v1494 = vpop.permute.xlu0 %1493
      %1495 = vrot.lane.b32.xlu0 %v606, 28
      %v1496 = vpop.permute.xlu0 %1495
      %1497 = vrot.lane.b32.xlu0 %v607, 28
      %v1498 = vpop.permute.xlu0 %1497
      %1499 = vrot.lane.b32.xlu0 %v608, 28
      %v1500 = vpop.permute.xlu0 %1499
      %1501 = vrot.lane.b32.xlu0 %v609, 28
      %v1502 = vpop.permute.xlu0 %1501
      %1503 = vrot.lane.b32.xlu0 %v610, 28
      %v1504 = vpop.permute.xlu0 %1503
      %1505 = vrot.lane.b32.xlu0 %v611, 28
      %v1506 = vpop.permute.xlu0 %1505
      %1507 = vrot.lane.b32.xlu0 %v612, 28
      %v1508 = vpop.permute.xlu0 %1507
      %1573 = vrot.lane.b32.xlu0 %v613, 32
      %v1574 = vpop.permute.xlu0 %1573
      %1575 = vrot.lane.b32.xlu0 %v614, 32
      %v1576 = vpop.permute.xlu0 %1575
      %1577 = vrot.lane.b32.xlu0 %v615, 32
      %v1578 = vpop.permute.xlu0 %1577
      %1579 = vrot.lane.b32.xlu0 %v616, 32
      %v1580 = vpop.permute.xlu0 %1579
      %1581 = vrot.lane.b32.xlu0 %v617, 32
      %v1582 = vpop.permute.xlu0 %1581
      %1583 = vrot.lane.b32.xlu0 %v618, 32
      %v1584 = vpop.permute.xlu0 %1583
      %1585 = vrot.lane.b32.xlu0 %v619, 32
      %v1586 = vpop.permute.xlu0 %1585
      %1587 = vrot.lane.b32.xlu0 %v620, 32
      %v1588 = vpop.permute.xlu0 %1587
      %1589 = vrot.lane.b32.xlu0 %v621, 32
      %v1590 = vpop.permute.xlu0 %1589
      %1591 = vrot.lane.b32.xlu0 %v622, 32
      %v1592 = vpop.permute.xlu0 %1591
      %1593 = vrot.lane.b32.xlu0 %v623, 32
      %v1594 = vpop.permute.xlu0 %1593
      %1595 = vrot.lane.b32.xlu0 %v624, 32
      %v1596 = vpop.permute.xlu0 %1595
      %1597 = vrot.lane.b32.xlu0 %v625, 32
      %v1598 = vpop.permute.xlu0 %1597
      %1599 = vrot.lane.b32.xlu0 %v626, 32
      %v1600 = vpop.permute.xlu0 %1599
      %1601 = vrot.lane.b32.xlu0 %v627, 32
      %v1602 = vpop.permute.xlu0 %1601
      %1603 = vrot.lane.b32.xlu0 %v628, 32
      %v1604 = vpop.permute.xlu0 %1603
      %1605 = vrot.lane.b32.xlu0 %v629, 32
      %v1606 = vpop.permute.xlu0 %1605
      %1607 = vrot.lane.b32.xlu0 %v630, 32
      %v1608 = vpop.permute.xlu0 %1607
      %1609 = vrot.lane.b32.xlu0 %v631, 32
      %v1610 = vpop.permute.xlu0 %1609
      %1611 = vrot.lane.b32.xlu0 %v632, 32
      %v1612 = vpop.permute.xlu0 %1611
      %1613 = vrot.lane.b32.xlu0 %v633, 32
      %v1614 = vpop.permute.xlu0 %1613
      %1615 = vrot.lane.b32.xlu0 %v634, 32
      %v1616 = vpop.permute.xlu0 %1615
      %1617 = vrot.lane.b32.xlu0 %v635, 32
      %v1618 = vpop.permute.xlu0 %1617
      %1619 = vrot.lane.b32.xlu0 %v636, 32
      %v1620 = vpop.permute.xlu0 %1619
      %1621 = vrot.lane.b32.xlu0 %v637, 32
      %v1622 = vpop.permute.xlu0 %1621
      %1623 = vrot.lane.b32.xlu0 %v638, 32
      %v1624 = vpop.permute.xlu0 %1623
      %1625 = vrot.lane.b32.xlu0 %v639, 32
      %v1626 = vpop.permute.xlu0 %1625
      %1627 = vrot.lane.b32.xlu0 %v640, 32
      %v1628 = vpop.permute.xlu0 %1627
      %1629 = vrot.lane.b32.xlu0 %v641, 32
      %v1630 = vpop.permute.xlu0 %1629
      %1631 = vrot.lane.b32.xlu0 %v642, 32
      %v1632 = vpop.permute.xlu0 %1631
      %1633 = vrot.lane.b32.xlu0 %v643, 32
      %v1634 = vpop.permute.xlu0 %1633
      %1635 = vrot.lane.b32.xlu0 %v644, 32
      %v1636 = vpop.permute.xlu0 %1635
      %v1669 = vsel %vm230, %v356, %v678
      %v1670 = vsel %vm230, %v357, %v680
      %v1671 = vsel %vm230, %v358, %v682
      %v1672 = vsel %vm230, %v359, %v684
      %v1673 = vsel %vm230, %v360, %v686
      %v1674 = vsel %vm230, %v361, %v688
      %v1675 = vsel %vm230, %v362, %v690
      %v1676 = vsel %vm230, %v363, %v692
      %v1677 = vsel %vm230, %v364, %v694
      %v1678 = vsel %vm230, %v365, %v696
      %v1679 = vsel %vm230, %v366, %v698
      %v1680 = vsel %vm230, %v367, %v700
      %v1681 = vsel %vm230, %v368, %v702
      %v1682 = vsel %vm230, %v369, %v704
      %v1683 = vsel %vm230, %v370, %v706
      %v1684 = vsel %vm230, %v371, %v708
      %v1685 = vsel %vm230, %v372, %v710
      %v1686 = vsel %vm230, %v373, %v712
      %v1687 = vsel %vm230, %v374, %v714
      %v1688 = vsel %vm230, %v375, %v716
      %v1689 = vsel %vm230, %v376, %v718
      %v1690 = vsel %vm230, %v377, %v720
      %v1691 = vsel %vm230, %v378, %v722
      %v1692 = vsel %vm230, %v379, %v724
      %v1693 = vsel %vm230, %v380, %v726
      %v1694 = vsel %vm230, %v381, %v728
      %v1695 = vsel %vm230, %v382, %v730
      %v1696 = vsel %vm230, %v383, %v732
      %v1697 = vsel %vm230, %v384, %v734
      %v1698 = vsel %vm230, %v385, %v736
      %v1699 = vsel %vm230, %v386, %v738
      %v1700 = vsel %vm230, %v387, %v740
      %vm1701 = vcmask 64512
      %v1702 = vsel %vm1701, %v1669, %v806
      %v1703 = vsel %vm1701, %v1670, %v808
      %v1704 = vsel %vm1701, %v1671, %v810
      %v1705 = vsel %vm1701, %v1672, %v812
      %v1706 = vsel %vm1701, %v1673, %v814
      %v1707 = vsel %vm1701, %v1674, %v816
      %v1708 = vsel %vm1701, %v1675, %v818
      %v1709 = vsel %vm1701, %v1676, %v820
      %v1710 = vsel %vm1701, %v1677, %v822
      %v1711 = vsel %vm1701, %v1678, %v824
      %v1712 = vsel %vm1701, %v1679, %v826
      %v1713 = vsel %vm1701, %v1680, %v828
      %v1714 = vsel %vm1701, %v1681, %v830
      %v1715 = vsel %vm1701, %v1682, %v832
      %v1716 = vsel %vm1701, %v1683, %v834
      %v1717 = vsel %vm1701, %v1684, %v836
      %v1718 = vsel %vm1701, %v1685, %v838
      %v1719 = vsel %vm1701, %v1686, %v840
      %v1720 = vsel %vm1701, %v1687, %v842
      %v1721 = vsel %vm1701, %v1688, %v844
      %v1722 = vsel %vm1701, %v1689, %v846
      %v1723 = vsel %vm1701, %v1690, %v848
      %v1724 = vsel %vm1701, %v1691, %v850
      %v1725 = vsel %vm1701, %v1692, %v852
      %v1726 = vsel %vm1701, %v1693, %v854
      %v1727 = vsel %vm1701, %v1694, %v856
      %v1728 = vsel %vm1701, %v1695, %v858
      %v1729 = vsel %vm1701, %v1696, %v860
      %v1730 = vsel %vm1701, %v1697, %v862
      %v1731 = vsel %vm1701, %v1698, %v864
      %v1732 = vsel %vm1701, %v1699, %v866
      %v1733 = vsel %vm1701, %v1700, %v868
      %vm1734 = vcmask 97280
      %v1735 = vsel %vm1734, %v1702, %v934
      %v1736 = vsel %vm1734, %v1703, %v936
      %v1737 = vsel %vm1734, %v1704, %v938
      %v1738 = vsel %vm1734, %v1705, %v940
      %v1739 = vsel %vm1734, %v1706, %v942
      %v1740 = vsel %vm1734, %v1707, %v944
      %v1741 = vsel %vm1734, %v1708, %v946
      %v1742 = vsel %vm1734, %v1709, %v948
      %v1743 = vsel %vm1734, %v1710, %v950
      %v1744 = vsel %vm1734, %v1711, %v952
      %v1745 = vsel %vm1734, %v1712, %v954
      %v1746 = vsel %vm1734, %v1713, %v956
      %v1747 = vsel %vm1734, %v1714, %v958
      %v1748 = vsel %vm1734, %v1715, %v960
      %v1749 = vsel %vm1734, %v1716, %v962
      %v1750 = vsel %vm1734, %v1717, %v964
      %v1751 = vsel %vm1734, %v1718, %v966
      %v1752 = vsel %vm1734, %v1719, %v968
      %v1753 = vsel %vm1734, %v1720, %v970
      %v1754 = vsel %vm1734, %v1721, %v972
      %v1755 = vsel %vm1734, %v1722, %v974
      %v1756 = vsel %vm1734, %v1723, %v976
      %v1757 = vsel %vm1734, %v1724, %v978
      %v1758 = vsel %vm1734, %v1725, %v980
      %v1759 = vsel %vm1734, %v1726, %v982
      %v1760 = vsel %vm1734, %v1727, %v984
      %v1761 = vsel %vm1734, %v1728, %v986
      %v1762 = vsel %vm1734, %v1729, %v988
      %v1763 = vsel %vm1734, %v1730, %v990
      %v1764 = vsel %vm1734, %v1731, %v992
      %v1765 = vsel %vm1734, %v1732, %v994
      %v1766 = vsel %vm1734, %v1733, %v996
      %vm1767 = vcmask 130048
      %v1768 = vsel %vm1767, %v1735, %v1062
      %v1769 = vsel %vm1767, %v1736, %v1064
      %v1770 = vsel %vm1767, %v1737, %v1066
      %v1771 = vsel %vm1767, %v1738, %v1068
      %v1772 = vsel %vm1767, %v1739, %v1070
      %v1773 = vsel %vm1767, %v1740, %v1072
      %v1774 = vsel %vm1767, %v1741, %v1074
      %v1775 = vsel %vm1767, %v1742, %v1076
      %v1776 = vsel %vm1767, %v1743, %v1078
      %v1777 = vsel %vm1767, %v1744, %v1080
      %v1778 = vsel %vm1767, %v1745, %v1082
      %v1779 = vsel %vm1767, %v1746, %v1084
      %v1780 = vsel %vm1767, %v1747, %v1086
      %v1781 = vsel %vm1767, %v1748, %v1088
      %v1782 = vsel %vm1767, %v1749, %v1090
      %v1783 = vsel %vm1767, %v1750, %v1092
      %v1784 = vsel %vm1767, %v1751, %v1094
      %v1785 = vsel %vm1767, %v1752, %v1096
      %v1786 = vsel %vm1767, %v1753, %v1098
      %v1787 = vsel %vm1767, %v1754, %v1100
      %v1788 = vsel %vm1767, %v1755, %v1102
      %v1789 = vsel %vm1767, %v1756, %v1104
      %v1790 = vsel %vm1767, %v1757, %v1106
      %v1791 = vsel %vm1767, %v1758, %v1108
      %v1792 = vsel %vm1767, %v1759, %v1110
      %v1793 = vsel %vm1767, %v1760, %v1112
      %v1794 = vsel %vm1767, %v1761, %v1114
      %v1795 = vsel %vm1767, %v1762, %v1116
      %v1796 = vsel %vm1767, %v1763, %v1118
      %v1797 = vsel %vm1767, %v1764, %v1120
      %v1798 = vsel %vm1767, %v1765, %v1122
      %v1799 = vsel %vm1767, %v1766, %v1124
      %vm1800 = vcmask 162816
      %v1801 = vsel %vm1800, %v1768, %v1190
      %v1802 = vsel %vm1800, %v1769, %v1192
      %v1803 = vsel %vm1800, %v1770, %v1194
      %v1804 = vsel %vm1800, %v1771, %v1196
      %v1805 = vsel %vm1800, %v1772, %v1198
      %v1806 = vsel %vm1800, %v1773, %v1200
      %v1807 = vsel %vm1800, %v1774, %v1202
      %v1808 = vsel %vm1800, %v1775, %v1204
      %v1809 = vsel %vm1800, %v1776, %v1206
      %v1810 = vsel %vm1800, %v1777, %v1208
      %v1811 = vsel %vm1800, %v1778, %v1210
      %v1812 = vsel %vm1800, %v1779, %v1212
      %v1813 = vsel %vm1800, %v1780, %v1214
      %v1814 = vsel %vm1800, %v1781, %v1216
      %v1815 = vsel %vm1800, %v1782, %v1218
      %v1816 = vsel %vm1800, %v1783, %v1220
      %v1817 = vsel %vm1800, %v1784, %v1222
      %v1818 = vsel %vm1800, %v1785, %v1224
      %v1819 = vsel %vm1800, %v1786, %v1226
      %v1820 = vsel %vm1800, %v1787, %v1228
      %v1821 = vsel %vm1800, %v1788, %v1230
      %v1822 = vsel %vm1800, %v1789, %v1232
      %v1823 = vsel %vm1800, %v1790, %v1234
      %v1824 = vsel %vm1800, %v1791, %v1236
      %v1825 = vsel %vm1800, %v1792, %v1238
      %v1826 = vsel %vm1800, %v1793, %v1240
      %v1827 = vsel %vm1800, %v1794, %v1242
      %v1828 = vsel %vm1800, %v1795, %v1244
      %v1829 = vsel %vm1800, %v1796, %v1246
      %v1830 = vsel %vm1800, %v1797, %v1248
      %v1831 = vsel %vm1800, %v1798, %v1250
      %v1832 = vsel %vm1800, %v1799, %v1252
      %vm1833 = vcmask 195584
      %v1834 = vsel %vm1833, %v1801, %v1318
      %v1835 = vsel %vm1833, %v1802, %v1320
      %v1836 = vsel %vm1833, %v1803, %v1322
      %v1837 = vsel %vm1833, %v1804, %v1324
      %v1838 = vsel %vm1833, %v1805, %v1326
      %v1839 = vsel %vm1833, %v1806, %v1328
      %v1840 = vsel %vm1833, %v1807, %v1330
      %v1841 = vsel %vm1833, %v1808, %v1332
      %v1842 = vsel %vm1833, %v1809, %v1334
      %v1843 = vsel %vm1833, %v1810, %v1336
      %v1844 = vsel %vm1833, %v1811, %v1338
      %v1845 = vsel %vm1833, %v1812, %v1340
      %v1846 = vsel %vm1833, %v1813, %v1342
      %v1847 = vsel %vm1833, %v1814, %v1344
      %v1848 = vsel %vm1833, %v1815, %v1346
      %v1849 = vsel %vm1833, %v1816, %v1348
      %v1850 = vsel %vm1833, %v1817, %v1350
      %v1851 = vsel %vm1833, %v1818, %v1352
      %v1852 = vsel %vm1833, %v1819, %v1354
      %v1853 = vsel %vm1833, %v1820, %v1356
      %v1854 = vsel %vm1833, %v1821, %v1358
      %v1855 = vsel %vm1833, %v1822, %v1360
      %v1856 = vsel %vm1833, %v1823, %v1362
      %v1857 = vsel %vm1833, %v1824, %v1364
      %v1858 = vsel %vm1833, %v1825, %v1366
      %v1859 = vsel %vm1833, %v1826, %v1368
      %v1860 = vsel %vm1833, %v1827, %v1370
      %v1861 = vsel %vm1833, %v1828, %v1372
      %v1862 = vsel %vm1833, %v1829, %v1374
      %v1863 = vsel %vm1833, %v1830, %v1376
      %v1864 = vsel %vm1833, %v1831, %v1378
      %v1865 = vsel %vm1833, %v1832, %v1380
      %vm1866 = vcmask 228352
      %v1867 = vsel %vm1866, %v1834, %v1446
      %v1868 = vsel %vm1866, %v1835, %v1448
      %v1869 = vsel %vm1866, %v1836, %v1450
      %v1870 = vsel %vm1866, %v1837, %v1452
      %v1871 = vsel %vm1866, %v1838, %v1454
      %v1872 = vsel %vm1866, %v1839, %v1456
      %v1873 = vsel %vm1866, %v1840, %v1458
      %v1874 = vsel %vm1866, %v1841, %v1460
      %v1875 = vsel %vm1866, %v1842, %v1462
      %v1876 = vsel %vm1866, %v1843, %v1464
      %v1877 = vsel %vm1866, %v1844, %v1466
      %v1878 = vsel %vm1866, %v1845, %v1468
      %v1879 = vsel %vm1866, %v1846, %v1470
      %v1880 = vsel %vm1866, %v1847, %v1472
      %v1881 = vsel %vm1866, %v1848, %v1474
      %v1882 = vsel %vm1866, %v1849, %v1476
      %v1883 = vsel %vm1866, %v1850, %v1478
      %v1884 = vsel %vm1866, %v1851, %v1480
      %v1885 = vsel %vm1866, %v1852, %v1482
      %v1886 = vsel %vm1866, %v1853, %v1484
      %v1887 = vsel %vm1866, %v1854, %v1486
      %v1888 = vsel %vm1866, %v1855, %v1488
      %v1889 = vsel %vm1866, %v1856, %v1490
      %v1890 = vsel %vm1866, %v1857, %v1492
      %v1891 = vsel %vm1866, %v1858, %v1494
      %v1892 = vsel %vm1866, %v1859, %v1496
      %v1893 = vsel %vm1866, %v1860, %v1498
      %v1894 = vsel %vm1866, %v1861, %v1500
      %v1895 = vsel %vm1866, %v1862, %v1502
      %v1896 = vsel %vm1866, %v1863, %v1504
      %v1897 = vsel %vm1866, %v1864, %v1506
      %v1898 = vsel %vm1866, %v1865, %v1508
      %vm1899 = vcmask 261120
      %v1900 = vsel %vm1899, %v1867, %v1574
      %v1901 = vsel %vm1899, %v1868, %v1576
      %v1902 = vsel %vm1899, %v1869, %v1578
      %v1903 = vsel %vm1899, %v1870, %v1580
      %v1904 = vsel %vm1899, %v1871, %v1582
      %v1905 = vsel %vm1899, %v1872, %v1584
      %v1906 = vsel %vm1899, %v1873, %v1586
      %v1907 = vsel %vm1899, %v1874, %v1588
      %v1908 = vsel %vm1899, %v1875, %v1590
      %v1909 = vsel %vm1899, %v1876, %v1592
      %v1910 = vsel %vm1899, %v1877, %v1594
      %v1911 = vsel %vm1899, %v1878, %v1596
      %v1912 = vsel %vm1899, %v1879, %v1598
      %v1913 = vsel %vm1899, %v1880, %v1600
      %v1914 = vsel %vm1899, %v1881, %v1602
      %v1915 = vsel %vm1899, %v1882, %v1604
      %v1916 = vsel %vm1899, %v1883, %v1606
      %v1917 = vsel %vm1899, %v1884, %v1608
      %v1918 = vsel %vm1899, %v1885, %v1610
      %v1919 = vsel %vm1899, %v1886, %v1612
      %v1920 = vsel %vm1899, %v1887, %v1614
      %v1921 = vsel %vm1899, %v1888, %v1616
      %v1922 = vsel %vm1899, %v1889, %v1618
      %v1923 = vsel %vm1899, %v1890, %v1620
      %v1924 = vsel %vm1899, %v1891, %v1622
      %v1925 = vsel %vm1899, %v1892, %v1624
      %v1926 = vsel %vm1899, %v1893, %v1626
      %v1927 = vsel %vm1899, %v1894, %v1628
      %v1928 = vsel %vm1899, %v1895, %v1630
      %v1929 = vsel %vm1899, %v1896, %v1632
      %v1930 = vsel %vm1899, %v1897, %v1634
      %v1931 = vsel %vm1899, %v1898, %v1636
      %v1932 = vld [vmem:[%s1] sm:$0xff]
      %v1933 = vld [vmem:[%s1 + $0x8] sm:$0xff]
      %v1934 = vld [vmem:[%s1 + $0x10] sm:$0xff]
      %v1935 = vld [vmem:[%s1 + $0x18] sm:$0xff]
      %v1936 = vld [vmem:[%s1 + $0x20] sm:$0xf]
      %vm1937 = vcmask 293888
      %v1939 = vsel %vm1937, %v1900, 0
      %v1942 = vsel %vm1937, %v1901, 0
      %v1945 = vsel %vm1937, %v1902, 0
      %v1948 = vsel %vm1937, %v1903, 0
      %v1951 = vsel %vm1937, %v1904, 0
      %v1954 = vsel %vm1937, %v1905, 0
      %v1957 = vsel %vm1937, %v1906, 0
      %v1960 = vsel %vm1937, %v1907, 0
      %v1963 = vsel %vm1937, %v1908, 0
      %v1966 = vsel %vm1937, %v1909, 0
      %v1969 = vsel %vm1937, %v1910, 0
      %v1972 = vsel %vm1937, %v1911, 0
      %v1975 = vsel %vm1937, %v1912, 0
      %v1978 = vsel %vm1937, %v1913, 0
      %v1981 = vsel %vm1937, %v1914, 0
      %v1984 = vsel %vm1937, %v1915, 0
      %v1987 = vsel %vm1937, %v1916, 0
      %v1990 = vsel %vm1937, %v1917, 0
      %v1993 = vsel %vm1937, %v1918, 0
      %v1996 = vsel %vm1937, %v1919, 0
      %v1999 = vsel %vm1937, %v1920, 0
      %v2002 = vsel %vm1937, %v1921, 0
      %v2005 = vsel %vm1937, %v1922, 0
      %v2008 = vsel %vm1937, %v1923, 0
      %v2011 = vsel %vm1937, %v1924, 0
      %v2014 = vsel %vm1937, %v1925, 0
      %v2017 = vsel %vm1937, %v1926, 0
      %v2020 = vsel %vm1937, %v1927, 0
      %v2023 = vsel %vm1937, %v1928, 0
      %v2026 = vsel %vm1937, %v1929, 0
      %v2029 = vsel %vm1937, %v1930, 0
      %v2032 = vsel %vm1937, %v1931, 0
      %vm2034 = vcmask 1043456
      %v2036 = vsel %vm2034, %v1936, 0
      %2038 = vmatpush.msra.mxu0 0.0
      %2039 = vmatpush.msra.mxu0 0.0
      %2040 = vmatpush.msra.mxu0 0.0
      %2041 = vmatpush.msra.mxu0 0.0
      %2042 = vmatpush.msra.mxu0 0.0
      %2043 = vmatpush.msra.mxu0 0.0
      %2044 = vmatpush.msra.mxu0 0.0
      %2045 = vmatpush.msra.mxu0 0.0
      %2046 = vmatpush.msra.mxu0 0.0
      %2047 = vmatpush.msra.mxu0 0.0
      %2048 = vmatpush.msra.mxu0 0.0
      %2049 = vmatpush.msra.mxu0 %v2036
      %2050 = vmatpush.msra.mxu0 %v1935
      %2051 = vmatpush.msra.mxu0 %v1934
      %2052 = vmatpush.msra.mxu0 %v1933
      %2053 = vmatpush.msra.mxu0 %v1932
      %2054 = vmatmul.f32.gmra.mxu0 %v1939
      %v2055 = vpop.f32.mrf.mxu0
      %v2056 = vadd.f32 0.0, %v2055
      %2057 = vmatmul.f32.gmra.mxu0 %v1942
      %v2058 = vpop.f32.mrf.mxu0
      %v2059 = vadd.f32 0.0, %v2058
      %2060 = vmatmul.f32.gmra.mxu0 %v1945
      %v2061 = vpop.f32.mrf.mxu0
      %v2062 = vadd.f32 0.0, %v2061
      %2063 = vmatmul.f32.gmra.mxu0 %v1948
      %v2064 = vpop.f32.mrf.mxu0
      %v2065 = vadd.f32 0.0, %v2064
      %2066 = vmatmul.f32.gmra.mxu0 %v1951
      %v2067 = vpop.f32.mrf.mxu0
      %v2068 = vadd.f32 0.0, %v2067
      %2069 = vmatmul.f32.gmra.mxu0 %v1954
      %v2070 = vpop.f32.mrf.mxu0
      %v2071 = vadd.f32 0.0, %v2070
      %2072 = vmatmul.f32.gmra.mxu0 %v1957
      %v2073 = vpop.f32.mrf.mxu0
      %v2074 = vadd.f32 0.0, %v2073
      %2075 = vmatmul.f32.gmra.mxu0 %v1960
      %v2076 = vpop.f32.mrf.mxu0
      %v2077 = vadd.f32 0.0, %v2076
      %2078 = vmatmul.f32.gmra.mxu0 %v1963
      %v2079 = vpop.f32.mrf.mxu0
      %v2080 = vadd.f32 0.0, %v2079
      %2081 = vmatmul.f32.gmra.mxu0 %v1966
      %v2082 = vpop.f32.mrf.mxu0
      %v2083 = vadd.f32 0.0, %v2082
      %2084 = vmatmul.f32.gmra.mxu0 %v1969
      %v2085 = vpop.f32.mrf.mxu0
      %v2086 = vadd.f32 0.0, %v2085
      %2087 = vmatmul.f32.gmra.mxu0 %v1972
      %v2088 = vpop.f32.mrf.mxu0
      %v2089 = vadd.f32 0.0, %v2088
      %2090 = vmatmul.f32.gmra.mxu0 %v1975
      %v2091 = vpop.f32.mrf.mxu0
      %v2092 = vadd.f32 0.0, %v2091
      %2093 = vmatmul.f32.gmra.mxu0 %v1978
      %v2094 = vpop.f32.mrf.mxu0
      %v2095 = vadd.f32 0.0, %v2094
      %2096 = vmatmul.f32.gmra.mxu0 %v1981
      %v2097 = vpop.f32.mrf.mxu0
      %v2098 = vadd.f32 0.0, %v2097
      %2099 = vmatmul.f32.gmra.mxu0 %v1984
      %v2100 = vpop.f32.mrf.mxu0
      %v2101 = vadd.f32 0.0, %v2100
      %2102 = vmatmul.f32.gmra.mxu0 %v1987
      %v2103 = vpop.f32.mrf.mxu0
      %v2104 = vadd.f32 0.0, %v2103
      %2105 = vmatmul.f32.gmra.mxu0 %v1990
      %v2106 = vpop.f32.mrf.mxu0
      %v2107 = vadd.f32 0.0, %v2106
      %2108 = vmatmul.f32.gmra.mxu0 %v1993
      %v2109 = vpop.f32.mrf.mxu0
      %v2110 = vadd.f32 0.0, %v2109
      %2111 = vmatmul.f32.gmra.mxu0 %v1996
      %v2112 = vpop.f32.mrf.mxu0
      %v2113 = vadd.f32 0.0, %v2112
      %2114 = vmatmul.f32.gmra.mxu0 %v1999
      %v2115 = vpop.f32.mrf.mxu0
      %v2116 = vadd.f32 0.0, %v2115
      %2117 = vmatmul.f32.gmra.mxu0 %v2002
      %v2118 = vpop.f32.mrf.mxu0
      %v2119 = vadd.f32 0.0, %v2118
      %2120 = vmatmul.f32.gmra.mxu0 %v2005
      %v2121 = vpop.f32.mrf.mxu0
      %v2122 = vadd.f32 0.0, %v2121
      %2123 = vmatmul.f32.gmra.mxu0 %v2008
      %v2124 = vpop.f32.mrf.mxu0
      %v2125 = vadd.f32 0.0, %v2124
      %2126 = vmatmul.f32.gmra.mxu0 %v2011
      %v2127 = vpop.f32.mrf.mxu0
      %v2128 = vadd.f32 0.0, %v2127
      %2129 = vmatmul.f32.gmra.mxu0 %v2014
      %v2130 = vpop.f32.mrf.mxu0
      %v2131 = vadd.f32 0.0, %v2130
      %2132 = vmatmul.f32.gmra.mxu0 %v2017
      %v2133 = vpop.f32.mrf.mxu0
      %v2134 = vadd.f32 0.0, %v2133
      %2135 = vmatmul.f32.gmra.mxu0 %v2020
      %v2136 = vpop.f32.mrf.mxu0
      %v2137 = vadd.f32 0.0, %v2136
      %2138 = vmatmul.f32.gmra.mxu0 %v2023
      %v2139 = vpop.f32.mrf.mxu0
      %v2140 = vadd.f32 0.0, %v2139
      %2141 = vmatmul.f32.gmra.mxu0 %v2026
      %v2142 = vpop.f32.mrf.mxu0
      %v2143 = vadd.f32 0.0, %v2142
      %2144 = vmatmul.f32.gmra.mxu0 %v2029
      %v2145 = vpop.f32.mrf.mxu0
      %v2146 = vadd.f32 0.0, %v2145
      %2147 = vmatmul.f32.gmra.mxu0 %v2032
      %v2148 = vpop.f32.mrf.mxu0
      %v2149 = vadd.f32 0.0, %v2148
      %2150 = vdwg.mxu0
      %v2151 = vperm.slane %v352, 0
      %v2152 = vmul.f32 %v2056, %v2151
      %v2153 = vmul.f32 %v2059, %v2151
      %v2154 = vmul.f32 %v2062, %v2151
      %v2155 = vmul.f32 %v2065, %v2151
      %v2156 = vmul.f32 %v2068, %v2151
      %v2157 = vmul.f32 %v2071, %v2151
      %v2158 = vmul.f32 %v2074, %v2151
      %v2159 = vmul.f32 %v2077, %v2151
      %v2160 = vmul.f32 %v2080, %v2151
      %v2161 = vmul.f32 %v2083, %v2151
      %v2162 = vmul.f32 %v2086, %v2151
      %v2163 = vmul.f32 %v2089, %v2151
      %v2164 = vmul.f32 %v2092, %v2151
      %v2165 = vmul.f32 %v2095, %v2151
      %v2166 = vmul.f32 %v2098, %v2151
      %v2167 = vmul.f32 %v2101, %v2151
      %v2168 = vmul.f32 %v2104, %v2151
      %v2169 = vmul.f32 %v2107, %v2151
      %v2170 = vmul.f32 %v2110, %v2151
      %v2171 = vmul.f32 %v2113, %v2151
      %v2172 = vmul.f32 %v2116, %v2151
      %v2173 = vmul.f32 %v2119, %v2151
      %v2174 = vmul.f32 %v2122, %v2151
      %v2175 = vmul.f32 %v2125, %v2151
      %v2176 = vmul.f32 %v2128, %v2151
      %v2177 = vmul.f32 %v2131, %v2151
      %v2178 = vmul.f32 %v2134, %v2151
      %v2179 = vmul.f32 %v2137, %v2151
      %v2180 = vmul.f32 %v2140, %v2151
      %v2181 = vmul.f32 %v2143, %v2151
      %v2182 = vmul.f32 %v2146, %v2151
      %v2183 = vmul.f32 %v2149, %v2151
      %v2184 = vperm.slane %v353, 0
      %v2185 = vadd.f32 %v2152, %v2184
      %v2186 = vadd.f32 %v2153, %v2184
      %v2187 = vadd.f32 %v2154, %v2184
      %v2188 = vadd.f32 %v2155, %v2184
      %v2189 = vadd.f32 %v2156, %v2184
      %v2190 = vadd.f32 %v2157, %v2184
      %v2191 = vadd.f32 %v2158, %v2184
      %v2192 = vadd.f32 %v2159, %v2184
      %v2193 = vadd.f32 %v2160, %v2184
      %v2194 = vadd.f32 %v2161, %v2184
      %v2195 = vadd.f32 %v2162, %v2184
      %v2196 = vadd.f32 %v2163, %v2184
      %v2197 = vadd.f32 %v2164, %v2184
      %v2198 = vadd.f32 %v2165, %v2184
      %v2199 = vadd.f32 %v2166, %v2184
      %v2200 = vadd.f32 %v2167, %v2184
      %v2201 = vadd.f32 %v2168, %v2184
      %v2202 = vadd.f32 %v2169, %v2184
      %v2203 = vadd.f32 %v2170, %v2184
      %v2204 = vadd.f32 %v2171, %v2184
      %v2205 = vadd.f32 %v2172, %v2184
      %v2206 = vadd.f32 %v2173, %v2184
      %v2207 = vadd.f32 %v2174, %v2184
      %v2208 = vadd.f32 %v2175, %v2184
      %v2209 = vadd.f32 %v2176, %v2184
      %v2210 = vadd.f32 %v2177, %v2184
      %v2211 = vadd.f32 %v2178, %v2184
      %v2212 = vadd.f32 %v2179, %v2184
      %v2213 = vadd.f32 %v2180, %v2184
      %v2214 = vadd.f32 %v2181, %v2184
      %v2215 = vadd.f32 %v2182, %v2184
      %v2216 = vadd.f32 %v2183, %v2184
      %v2217 = vmax.f32 %v2185, 0.0
      %v2218 = vmax.f32 %v2186, 0.0
      %v2219 = vmax.f32 %v2187, 0.0
      %v2220 = vmax.f32 %v2188, 0.0
      %v2221 = vmax.f32 %v2189, 0.0
      %v2222 = vmax.f32 %v2190, 0.0
      %v2223 = vmax.f32 %v2191, 0.0
      %v2224 = vmax.f32 %v2192, 0.0
      %v2225 = vmax.f32 %v2193, 0.0
      %v2226 = vmax.f32 %v2194, 0.0
      %v2227 = vmax.f32 %v2195, 0.0
      %v2228 = vmax.f32 %v2196, 0.0
      %v2229 = vmax.f32 %v2197, 0.0
      %v2230 = vmax.f32 %v2198, 0.0
      %v2231 = vmax.f32 %v2199, 0.0
      %v2232 = vmax.f32 %v2200, 0.0
      %v2233 = vmax.f32 %v2201, 0.0
      %v2234 = vmax.f32 %v2202, 0.0
      %v2235 = vmax.f32 %v2203, 0.0
      %v2236 = vmax.f32 %v2204, 0.0
      %v2237 = vmax.f32 %v2205, 0.0
      %v2238 = vmax.f32 %v2206, 0.0
      %v2239 = vmax.f32 %v2207, 0.0
      %v2240 = vmax.f32 %v2208, 0.0
      %v2241 = vmax.f32 %v2209, 0.0
      %v2242 = vmax.f32 %v2210, 0.0
      %v2243 = vmax.f32 %v2211, 0.0
      %v2244 = vmax.f32 %v2212, 0.0
      %v2245 = vmax.f32 %v2213, 0.0
      %v2246 = vmax.f32 %v2214, 0.0
      %v2247 = vmax.f32 %v2215, 0.0
      %v2248 = vmax.f32 %v2216, 0.0
      %s2249 = scalar_lea.vmem [#allocation3], 24
      %2250 = vst.msk [vmem:[%s2249 + $0x1] sm:$0xff] %vm230, %v2217
      %2251 = vst.msk [vmem:[%s2249 + $0x9] sm:$0xff] %vm230, %v2218
      %2252 = vst.msk [vmem:[%s2249 + $0x19] sm:$0xff] %vm230, %v2219
      %2253 = vst.msk [vmem:[%s2249 + $0x21] sm:$0xff] %vm230, %v2220
      %2254 = vst.msk [vmem:[%s2249 + $0x31] sm:$0xff] %vm230, %v2221
      %2255 = vst.msk [vmem:[%s2249 + $0x39] sm:$0xff] %vm230, %v2222
      %2256 = vst.msk [vmem:[%s2249 + $0x49] sm:$0xff] %vm230, %v2223
      %2257 = vst.msk [vmem:[%s2249 + $0x51] sm:$0xff] %vm230, %v2224
      %2258 = vst.msk [vmem:[%s2249 + $0x61] sm:$0xff] %vm230, %v2225
      %2259 = vst.msk [vmem:[%s2249 + $0x69] sm:$0xff] %vm230, %v2226
      %2260 = vst.msk [vmem:[%s2249 + $0x79] sm:$0xff] %vm230, %v2227
      %2261 = vst.msk [vmem:[%s2249 + $0x81] sm:$0xff] %vm230, %v2228
      %2262 = vst.msk [vmem:[%s2249 + $0x91] sm:$0xff] %vm230, %v2229
      %2263 = vst.msk [vmem:[%s2249 + $0x99] sm:$0xff] %vm230, %v2230
      %2264 = vst.msk [vmem:[%s2249 + $0xa9] sm:$0xff] %vm230, %v2231
      %2265 = vst.msk [vmem:[%s2249 + $0xb1] sm:$0xff] %vm230, %v2232
      %2266 = vst.msk [vmem:[%s2249 + $0xc1] sm:$0xff] %vm230, %v2233
      %2267 = vst.msk [vmem:[%s2249 + $0xc9] sm:$0xff] %vm230, %v2234
      %2268 = vst.msk [vmem:[%s2249 + $0xd9] sm:$0xff] %vm230, %v2235
      %2269 = vst.msk [vmem:[%s2249 + $0xe1] sm:$0xff] %vm230, %v2236
      %2270 = vst.msk [vmem:[%s2249 + $0xf1] sm:$0xff] %vm230, %v2237
      %2271 = vst.msk [vmem:[%s2249 + $0xf9] sm:$0xff] %vm230, %v2238
      %2272 = vst.msk [vmem:[%s2249 + $0x109] sm:$0xff] %vm230, %v2239
      %2273 = vst.msk [vmem:[%s2249 + $0x111] sm:$0xff] %vm230, %v2240
      %2274 = vst.msk [vmem:[%s2249 + $0x121] sm:$0xff] %vm230, %v2241
      %2275 = vst.msk [vmem:[%s2249 + $0x129] sm:$0xff] %vm230, %v2242
      %2276 = vst.msk [vmem:[%s2249 + $0x139] sm:$0xff] %vm230, %v2243
      %2277 = vst.msk [vmem:[%s2249 + $0x141] sm:$0xff] %vm230, %v2244
      %2278 = vst.msk [vmem:[%s2249 + $0x151] sm:$0xff] %vm230, %v2245
      %2279 = vst.msk [vmem:[%s2249 + $0x159] sm:$0xff] %vm230, %v2246
      %2280 = vst.msk [vmem:[%s2249 + $0x169] sm:$0xff] %vm230, %v2247
      %2281 = vst.msk [vmem:[%s2249 + $0x171] sm:$0xff] %vm230, %v2248
      %v2282 = vld [vmem:[#allocation3] sm:$0xff]
      %v2283 = vld [vmem:[#allocation3 + $0x8] sm:$0xff]
      %v2284 = vld [vmem:[#allocation3 + $0x18] sm:$0xff]
      %v2285 = vld [vmem:[#allocation3 + $0x20] sm:$0xff]
      %v2286 = vld [vmem:[#allocation3 + $0x30] sm:$0xff]
      %v2287 = vld [vmem:[#allocation3 + $0x38] sm:$0xff]
      %v2288 = vld [vmem:[#allocation3 + $0x48] sm:$0xff]
      %v2289 = vld [vmem:[#allocation3 + $0x50] sm:$0xff]
      %v2290 = vld [vmem:[#allocation3 + $0x60] sm:$0xff]
      %v2291 = vld [vmem:[#allocation3 + $0x68] sm:$0xff]
      %v2292 = vld [vmem:[#allocation3 + $0x78] sm:$0xff]
      %v2293 = vld [vmem:[#allocation3 + $0x80] sm:$0xff]
      %v2294 = vld [vmem:[#allocation3 + $0x90] sm:$0xff]
      %v2295 = vld [vmem:[#allocation3 + $0x98] sm:$0xff]
      %v2296 = vld [vmem:[#allocation3 + $0xa8] sm:$0xff]
      %v2297 = vld [vmem:[#allocation3 + $0xb0] sm:$0xff]
      %v2298 = vld [vmem:[#allocation3 + $0xc0] sm:$0xff]
      %v2299 = vld [vmem:[#allocation3 + $0xc8] sm:$0xff]
      %v2300 = vld [vmem:[#allocation3 + $0xd8] sm:$0xff]
      %v2301 = vld [vmem:[#allocation3 + $0xe0] sm:$0xff]
      %v2302 = vld [vmem:[#allocation3 + $0xf0] sm:$0xff]
      %v2303 = vld [vmem:[#allocation3 + $0xf8] sm:$0xff]
      %v2304 = vld [vmem:[#allocation3 + $0x108] sm:$0xff]
      %v2305 = vld [vmem:[#allocation3 + $0x110] sm:$0xff]
      %v2306 = vld [vmem:[#allocation3 + $0x120] sm:$0xff]
      %v2307 = vld [vmem:[#allocation3 + $0x128] sm:$0xff]
      %v2308 = vld [vmem:[#allocation3 + $0x138] sm:$0xff]
      %v2309 = vld [vmem:[#allocation3 + $0x140] sm:$0xff]
      %v2310 = vld [vmem:[#allocation3 + $0x150] sm:$0xff]
      %v2311 = vld [vmem:[#allocation3 + $0x158] sm:$0xff]
      %v2312 = vld [vmem:[#allocation3 + $0x168] sm:$0xff]
      %v2313 = vld [vmem:[#allocation3 + $0x170] sm:$0xff]
      %v2314 = vld [vmem:[#allocation3 + $0x1] sm:$0xff]
      %v2315 = vld [vmem:[#allocation3 + $0x9] sm:$0xff]
      %v2316 = vld [vmem:[#allocation3 + $0x19] sm:$0xff]
      %v2317 = vld [vmem:[#allocation3 + $0x21] sm:$0xff]
      %v2318 = vld [vmem:[#allocation3 + $0x31] sm:$0xff]
      %v2319 = vld [vmem:[#allocation3 + $0x39] sm:$0xff]
      %v2320 = vld [vmem:[#allocation3 + $0x49] sm:$0xff]
      %v2321 = vld [vmem:[#allocation3 + $0x51] sm:$0xff]
      %v2322 = vld [vmem:[#allocation3 + $0x61] sm:$0xff]
      %v2323 = vld [vmem:[#allocation3 + $0x69] sm:$0xff]
      %v2324 = vld [vmem:[#allocation3 + $0x79] sm:$0xff]
      %v2325 = vld [vmem:[#allocation3 + $0x81] sm:$0xff]
      %v2326 = vld [vmem:[#allocation3 + $0x91] sm:$0xff]
      %v2327 = vld [vmem:[#allocation3 + $0x99] sm:$0xff]
      %v2328 = vld [vmem:[#allocation3 + $0xa9] sm:$0xff]
      %v2329 = vld [vmem:[#allocation3 + $0xb1] sm:$0xff]
      %v2330 = vld [vmem:[#allocation3 + $0xc1] sm:$0xff]
      %v2331 = vld [vmem:[#allocation3 + $0xc9] sm:$0xff]
      %v2332 = vld [vmem:[#allocation3 + $0xd9] sm:$0xff]
      %v2333 = vld [vmem:[#allocation3 + $0xe1] sm:$0xff]
      %v2334 = vld [vmem:[#allocation3 + $0xf1] sm:$0xff]
      %v2335 = vld [vmem:[#allocation3 + $0xf9] sm:$0xff]
      %v2336 = vld [vmem:[#allocation3 + $0x109] sm:$0xff]
      %v2337 = vld [vmem:[#allocation3 + $0x111] sm:$0xff]
      %v2338 = vld [vmem:[#allocation3 + $0x121] sm:$0xff]
      %v2339 = vld [vmem:[#allocation3 + $0x129] sm:$0xff]
      %v2340 = vld [vmem:[#allocation3 + $0x139] sm:$0xff]
      %v2341 = vld [vmem:[#allocation3 + $0x141] sm:$0xff]
      %v2342 = vld [vmem:[#allocation3 + $0x151] sm:$0xff]
      %v2343 = vld [vmem:[#allocation3 + $0x159] sm:$0xff]
      %v2344 = vld [vmem:[#allocation3 + $0x169] sm:$0xff]
      %v2345 = vld [vmem:[#allocation3 + $0x171] sm:$0xff]
      %v2346 = vld [vmem:[#allocation3 + $0x2] sm:$0xff]
      %v2347 = vld [vmem:[#allocation3 + $0xa] sm:$0xff]
      %v2348 = vld [vmem:[#allocation3 + $0x1a] sm:$0xff]
      %v2349 = vld [vmem:[#allocation3 + $0x22] sm:$0xff]
      %v2350 = vld [vmem:[#allocation3 + $0x32] sm:$0xff]
      %v2351 = vld [vmem:[#allocation3 + $0x3a] sm:$0xff]
      %v2352 = vld [vmem:[#allocation3 + $0x4a] sm:$0xff]
      %v2353 = vld [vmem:[#allocation3 + $0x52] sm:$0xff]
      %v2354 = vld [vmem:[#allocation3 + $0x62] sm:$0xff]
      %v2355 = vld [vmem:[#allocation3 + $0x6a] sm:$0xff]
      %v2356 = vld [vmem:[#allocation3 + $0x7a] sm:$0xff]
      %v2357 = vld [vmem:[#allocation3 + $0x82] sm:$0xff]
      %v2358 = vld [vmem:[#allocation3 + $0x92] sm:$0xff]
      %v2359 = vld [vmem:[#allocation3 + $0x9a] sm:$0xff]
      %v2360 = vld [vmem:[#allocation3 + $0xaa] sm:$0xff]
      %v2361 = vld [vmem:[#allocation3 + $0xb2] sm:$0xff]
      %v2362 = vld [vmem:[#allocation3 + $0xc2] sm:$0xff]
      %v2363 = vld [vmem:[#allocation3 + $0xca] sm:$0xff]
      %v2364 = vld [vmem:[#allocation3 + $0xda] sm:$0xff]
      %v2365 = vld [vmem:[#allocation3 + $0xe2] sm:$0xff]
      %v2366 = vld [vmem:[#allocation3 + $0xf2] sm:$0xff]
      %v2367 = vld [vmem:[#allocation3 + $0xfa] sm:$0xff]
      %v2368 = vld [vmem:[#allocation3 + $0x10a] sm:$0xff]
      %v2369 = vld [vmem:[#allocation3 + $0x112] sm:$0xff]
      %v2370 = vld [vmem:[#allocation3 + $0x122] sm:$0xff]
      %v2371 = vld [vmem:[#allocation3 + $0x12a] sm:$0xff]
      %v2372 = vld [vmem:[#allocation3 + $0x13a] sm:$0xff]
      %v2373 = vld [vmem:[#allocation3 + $0x142] sm:$0xff]
      %v2374 = vld [vmem:[#allocation3 + $0x152] sm:$0xff]
      %v2375 = vld [vmem:[#allocation3 + $0x15a] sm:$0xff]
      %v2376 = vld [vmem:[#allocation3 + $0x16a] sm:$0xff]
      %v2377 = vld [vmem:[#allocation3 + $0x172] sm:$0xff]
      %v2378 = vld [vmem:[%s2249] sm:$0xff]
      %v2379 = vld [vmem:[%s2249 + $0x8] sm:$0xff]
      %v2380 = vld [vmem:[%s2249 + $0x18] sm:$0xff]
      %v2381 = vld [vmem:[%s2249 + $0x20] sm:$0xff]
      %v2382 = vld [vmem:[%s2249 + $0x30] sm:$0xff]
      %v2383 = vld [vmem:[%s2249 + $0x38] sm:$0xff]
      %v2384 = vld [vmem:[%s2249 + $0x48] sm:$0xff]
      %v2385 = vld [vmem:[%s2249 + $0x50] sm:$0xff]
      %v2386 = vld [vmem:[%s2249 + $0x60] sm:$0xff]
      %v2387 = vld [vmem:[%s2249 + $0x68] sm:$0xff]
      %v2388 = vld [vmem:[%s2249 + $0x78] sm:$0xff]
      %v2389 = vld [vmem:[%s2249 + $0x80] sm:$0xff]
      %v2390 = vld [vmem:[%s2249 + $0x90] sm:$0xff]
      %v2391 = vld [vmem:[%s2249 + $0x98] sm:$0xff]
      %v2392 = vld [vmem:[%s2249 + $0xa8] sm:$0xff]
      %v2393 = vld [vmem:[%s2249 + $0xb0] sm:$0xff]
      %v2394 = vld [vmem:[%s2249 + $0xc0] sm:$0xff]
      %v2395 = vld [vmem:[%s2249 + $0xc8] sm:$0xff]
      %v2396 = vld [vmem:[%s2249 + $0xd8] sm:$0xff]
      %v2397 = vld [vmem:[%s2249 + $0xe0] sm:$0xff]
      %v2398 = vld [vmem:[%s2249 + $0xf0] sm:$0xff]
      %v2399 = vld [vmem:[%s2249 + $0xf8] sm:$0xff]
      %v2400 = vld [vmem:[%s2249 + $0x108] sm:$0xff]
      %v2401 = vld [vmem:[%s2249 + $0x110] sm:$0xff]
      %v2402 = vld [vmem:[%s2249 + $0x120] sm:$0xff]
      %v2403 = vld [vmem:[%s2249 + $0x128] sm:$0xff]
      %v2404 = vld [vmem:[%s2249 + $0x138] sm:$0xff]
      %v2405 = vld [vmem:[%s2249 + $0x140] sm:$0xff]
      %v2406 = vld [vmem:[%s2249 + $0x150] sm:$0xff]
      %v2407 = vld [vmem:[%s2249 + $0x158] sm:$0xff]
      %v2408 = vld [vmem:[%s2249 + $0x168] sm:$0xff]
      %v2409 = vld [vmem:[%s2249 + $0x170] sm:$0xff]
      %v2410 = vld [vmem:[%s2249 + $0x1] sm:$0xff]
      %v2411 = vld [vmem:[%s2249 + $0x9] sm:$0xff]
      %v2412 = vld [vmem:[%s2249 + $0x19] sm:$0xff]
      %v2413 = vld [vmem:[%s2249 + $0x21] sm:$0xff]
      %v2414 = vld [vmem:[%s2249 + $0x31] sm:$0xff]
      %v2415 = vld [vmem:[%s2249 + $0x39] sm:$0xff]
      %v2416 = vld [vmem:[%s2249 + $0x49] sm:$0xff]
      %v2417 = vld [vmem:[%s2249 + $0x51] sm:$0xff]
      %v2418 = vld [vmem:[%s2249 + $0x61] sm:$0xff]
      %v2419 = vld [vmem:[%s2249 + $0x69] sm:$0xff]
      %v2420 = vld [vmem:[%s2249 + $0x79] sm:$0xff]
      %v2421 = vld [vmem:[%s2249 + $0x81] sm:$0xff]
      %v2422 = vld [vmem:[%s2249 + $0x91] sm:$0xff]
      %v2423 = vld [vmem:[%s2249 + $0x99] sm:$0xff]
      %v2424 = vld [vmem:[%s2249 + $0xa9] sm:$0xff]
      %v2425 = vld [vmem:[%s2249 + $0xb1] sm:$0xff]
      %v2426 = vld [vmem:[%s2249 + $0xc1] sm:$0xff]
      %v2427 = vld [vmem:[%s2249 + $0xc9] sm:$0xff]
      %v2428 = vld [vmem:[%s2249 + $0xd9] sm:$0xff]
      %v2429 = vld [vmem:[%s2249 + $0xe1] sm:$0xff]
      %v2430 = vld [vmem:[%s2249 + $0xf1] sm:$0xff]
      %v2431 = vld [vmem:[%s2249 + $0xf9] sm:$0xff]
      %v2432 = vld [vmem:[%s2249 + $0x109] sm:$0xff]
      %v2433 = vld [vmem:[%s2249 + $0x111] sm:$0xff]
      %v2434 = vld [vmem:[%s2249 + $0x121] sm:$0xff]
      %v2435 = vld [vmem:[%s2249 + $0x129] sm:$0xff]
      %v2436 = vld [vmem:[%s2249 + $0x139] sm:$0xff]
      %v2437 = vld [vmem:[%s2249 + $0x141] sm:$0xff]
      %v2438 = vld [vmem:[%s2249 + $0x151] sm:$0xff]
      %v2439 = vld [vmem:[%s2249 + $0x159] sm:$0xff]
      %v2440 = vld [vmem:[%s2249 + $0x169] sm:$0xff]
      %v2441 = vld [vmem:[%s2249 + $0x171] sm:$0xff]
      %v2442 = vld [vmem:[%s2249 + $0x2] sm:$0xff]
      %v2443 = vld [vmem:[%s2249 + $0xa] sm:$0xff]
      %v2444 = vld [vmem:[%s2249 + $0x1a] sm:$0xff]
      %v2445 = vld [vmem:[%s2249 + $0x22] sm:$0xff]
      %v2446 = vld [vmem:[%s2249 + $0x32] sm:$0xff]
      %v2447 = vld [vmem:[%s2249 + $0x3a] sm:$0xff]
      %v2448 = vld [vmem:[%s2249 + $0x4a] sm:$0xff]
      %v2449 = vld [vmem:[%s2249 + $0x52] sm:$0xff]
      %v2450 = vld [vmem:[%s2249 + $0x62] sm:$0xff]
      %v2451 = vld [vmem:[%s2249 + $0x6a] sm:$0xff]
      %v2452 = vld [vmem:[%s2249 + $0x7a] sm:$0xff]
      %v2453 = vld [vmem:[%s2249 + $0x82] sm:$0xff]
      %v2454 = vld [vmem:[%s2249 + $0x92] sm:$0xff]
      %v2455 = vld [vmem:[%s2249 + $0x9a] sm:$0xff]
      %v2456 = vld [vmem:[%s2249 + $0xaa] sm:$0xff]
      %v2457 = vld [vmem:[%s2249 + $0xb2] sm:$0xff]
      %v2458 = vld [vmem:[%s2249 + $0xc2] sm:$0xff]
      %v2459 = vld [vmem:[%s2249 + $0xca] sm:$0xff]
      %v2460 = vld [vmem:[%s2249 + $0xda] sm:$0xff]
      %v2461 = vld [vmem:[%s2249 + $0xe2] sm:$0xff]
      %v2462 = vld [vmem:[%s2249 + $0xf2] sm:$0xff]
      %v2463 = vld [vmem:[%s2249 + $0xfa] sm:$0xff]
      %v2464 = vld [vmem:[%s2249 + $0x10a] sm:$0xff]
      %v2465 = vld [vmem:[%s2249 + $0x112] sm:$0xff]
      %v2466 = vld [vmem:[%s2249 + $0x122] sm:$0xff]
      %v2467 = vld [vmem:[%s2249 + $0x12a] sm:$0xff]
      %v2468 = vld [vmem:[%s2249 + $0x13a] sm:$0xff]
      %v2469 = vld [vmem:[%s2249 + $0x142] sm:$0xff]
      %v2470 = vld [vmem:[%s2249 + $0x152] sm:$0xff]
      %v2471 = vld [vmem:[%s2249 + $0x15a] sm:$0xff]
      %v2472 = vld [vmem:[%s2249 + $0x16a] sm:$0xff]
      %v2473 = vld [vmem:[%s2249 + $0x172] sm:$0xff]
      %s2474 = scalar_lea.vmem [#allocation3], 48
      %v2475 = vld [vmem:[%s2474] sm:$0xff]
      %v2476 = vld [vmem:[%s2474 + $0x8] sm:$0xff]
      %v2477 = vld [vmem:[%s2474 + $0x18] sm:$0xff]
      %v2478 = vld [vmem:[%s2474 + $0x20] sm:$0xff]
      %v2479 = vld [vmem:[%s2474 + $0x30] sm:$0xff]
      %v2480 = vld [vmem:[%s2474 + $0x38] sm:$0xff]
      %v2481 = vld [vmem:[%s2474 + $0x48] sm:$0xff]
      %v2482 = vld [vmem:[%s2474 + $0x50] sm:$0xff]
      %v2483 = vld [vmem:[%s2474 + $0x60] sm:$0xff]
      %v2484 = vld [vmem:[%s2474 + $0x68] sm:$0xff]
      %v2485 = vld [vmem:[%s2474 + $0x78] sm:$0xff]
      %v2486 = vld [vmem:[%s2474 + $0x80] sm:$0xff]
      %v2487 = vld [vmem:[%s2474 + $0x90] sm:$0xff]
      %v2488 = vld [vmem:[%s2474 + $0x98] sm:$0xff]
      %v2489 = vld [vmem:[%s2474 + $0xa8] sm:$0xff]
      %v2490 = vld [vmem:[%s2474 + $0xb0] sm:$0xff]
      %v2491 = vld [vmem:[%s2474 + $0xc0] sm:$0xff]
      %v2492 = vld [vmem:[%s2474 + $0xc8] sm:$0xff]
      %v2493 = vld [vmem:[%s2474 + $0xd8] sm:$0xff]
      %v2494 = vld [vmem:[%s2474 + $0xe0] sm:$0xff]
      %v2495 = vld [vmem:[%s2474 + $0xf0] sm:$0xff]
      %v2496 = vld [vmem:[%s2474 + $0xf8] sm:$0xff]
      %v2497 = vld [vmem:[%s2474 + $0x108] sm:$0xff]
      %v2498 = vld [vmem:[%s2474 + $0x110] sm:$0xff]
      %v2499 = vld [vmem:[%s2474 + $0x120] sm:$0xff]
      %v2500 = vld [vmem:[%s2474 + $0x128] sm:$0xff]
      %v2501 = vld [vmem:[%s2474 + $0x138] sm:$0xff]
      %v2502 = vld [vmem:[%s2474 + $0x140] sm:$0xff]
      %v2503 = vld [vmem:[%s2474 + $0x150] sm:$0xff]
      %v2504 = vld [vmem:[%s2474 + $0x158] sm:$0xff]
      %v2505 = vld [vmem:[%s2474 + $0x168] sm:$0xff]
      %v2506 = vld [vmem:[%s2474 + $0x170] sm:$0xff]
      %v2507 = vld [vmem:[%s2474 + $0x1] sm:$0xff]
      %v2508 = vld [vmem:[%s2474 + $0x9] sm:$0xff]
      %v2509 = vld [vmem:[%s2474 + $0x19] sm:$0xff]
      %v2510 = vld [vmem:[%s2474 + $0x21] sm:$0xff]
      %v2511 = vld [vmem:[%s2474 + $0x31] sm:$0xff]
      %v2512 = vld [vmem:[%s2474 + $0x39] sm:$0xff]
      %v2513 = vld [vmem:[%s2474 + $0x49] sm:$0xff]
      %v2514 = vld [vmem:[%s2474 + $0x51] sm:$0xff]
      %v2515 = vld [vmem:[%s2474 + $0x61] sm:$0xff]
      %v2516 = vld [vmem:[%s2474 + $0x69] sm:$0xff]
      %v2517 = vld [vmem:[%s2474 + $0x79] sm:$0xff]
      %v2518 = vld [vmem:[%s2474 + $0x81] sm:$0xff]
      %v2519 = vld [vmem:[%s2474 + $0x91] sm:$0xff]
      %v2520 = vld [vmem:[%s2474 + $0x99] sm:$0xff]
      %v2521 = vld [vmem:[%s2474 + $0xa9] sm:$0xff]
      %v2522 = vld [vmem:[%s2474 + $0xb1] sm:$0xff]
      %v2523 = vld [vmem:[%s2474 + $0xc1] sm:$0xff]
      %v2524 = vld [vmem:[%s2474 + $0xc9] sm:$0xff]
      %v2525 = vld [vmem:[%s2474 + $0xd9] sm:$0xff]
      %v2526 = vld [vmem:[%s2474 + $0xe1] sm:$0xff]
      %v2527 = vld [vmem:[%s2474 + $0xf1] sm:$0xff]
      %v2528 = vld [vmem:[%s2474 + $0xf9] sm:$0xff]
      %v2529 = vld [vmem:[%s2474 + $0x109] sm:$0xff]
      %v2530 = vld [vmem:[%s2474 + $0x111] sm:$0xff]
      %v2531 = vld [vmem:[%s2474 + $0x121] sm:$0xff]
      %v2532 = vld [vmem:[%s2474 + $0x129] sm:$0xff]
      %v2533 = vld [vmem:[%s2474 + $0x139] sm:$0xff]
      %v2534 = vld [vmem:[%s2474 + $0x141] sm:$0xff]
      %v2535 = vld [vmem:[%s2474 + $0x151] sm:$0xff]
      %v2536 = vld [vmem:[%s2474 + $0x159] sm:$0xff]
      %v2537 = vld [vmem:[%s2474 + $0x169] sm:$0xff]
      %v2538 = vld [vmem:[%s2474 + $0x171] sm:$0xff]
      %v2539 = vld [vmem:[%s2474 + $0x2] sm:$0xff]
      %v2540 = vld [vmem:[%s2474 + $0xa] sm:$0xff]
      %v2541 = vld [vmem:[%s2474 + $0x1a] sm:$0xff]
      %v2542 = vld [vmem:[%s2474 + $0x22] sm:$0xff]
      %v2543 = vld [vmem:[%s2474 + $0x32] sm:$0xff]
      %v2544 = vld [vmem:[%s2474 + $0x3a] sm:$0xff]
      %v2545 = vld [vmem:[%s2474 + $0x4a] sm:$0xff]
      %v2546 = vld [vmem:[%s2474 + $0x52] sm:$0xff]
      %v2547 = vld [vmem:[%s2474 + $0x62] sm:$0xff]
      %v2548 = vld [vmem:[%s2474 + $0x6a] sm:$0xff]
      %v2549 = vld [vmem:[%s2474 + $0x7a] sm:$0xff]
      %v2550 = vld [vmem:[%s2474 + $0x82] sm:$0xff]
      %v2551 = vld [vmem:[%s2474 + $0x92] sm:$0xff]
      %v2552 = vld [vmem:[%s2474 + $0x9a] sm:$0xff]
      %v2553 = vld [vmem:[%s2474 + $0xaa] sm:$0xff]
      %v2554 = vld [vmem:[%s2474 + $0xb2] sm:$0xff]
      %v2555 = vld [vmem:[%s2474 + $0xc2] sm:$0xff]
      %v2556 = vld [vmem:[%s2474 + $0xca] sm:$0xff]
      %v2557 = vld [vmem:[%s2474 + $0xda] sm:$0xff]
      %v2558 = vld [vmem:[%s2474 + $0xe2] sm:$0xff]
      %v2559 = vld [vmem:[%s2474 + $0xf2] sm:$0xff]
      %v2560 = vld [vmem:[%s2474 + $0xfa] sm:$0xff]
      %v2561 = vld [vmem:[%s2474 + $0x10a] sm:$0xff]
      %v2562 = vld [vmem:[%s2474 + $0x112] sm:$0xff]
      %v2563 = vld [vmem:[%s2474 + $0x122] sm:$0xff]
      %v2564 = vld [vmem:[%s2474 + $0x12a] sm:$0xff]
      %v2565 = vld [vmem:[%s2474 + $0x13a] sm:$0xff]
      %v2566 = vld [vmem:[%s2474 + $0x142] sm:$0xff]
      %v2567 = vld [vmem:[%s2474 + $0x152] sm:$0xff]
      %v2568 = vld [vmem:[%s2474 + $0x15a] sm:$0xff]
      %v2569 = vld [vmem:[%s2474 + $0x16a] sm:$0xff]
      %v2570 = vld [vmem:[%s2474 + $0x172] sm:$0xff]
      %2603 = vrot.lane.b32.xlu0 %v2314, 4
      %v2604 = vpop.permute.xlu0 %2603
      %2605 = vrot.lane.b32.xlu0 %v2315, 4
      %v2606 = vpop.permute.xlu0 %2605
      %2607 = vrot.lane.b32.xlu0 %v2316, 4
      %v2608 = vpop.permute.xlu0 %2607
      %2609 = vrot.lane.b32.xlu0 %v2317, 4
      %v2610 = vpop.permute.xlu0 %2609
      %2611 = vrot.lane.b32.xlu0 %v2318, 4
      %v2612 = vpop.permute.xlu0 %2611
      %2613 = vrot.lane.b32.xlu0 %v2319, 4
      %v2614 = vpop.permute.xlu0 %2613
      %2615 = vrot.lane.b32.xlu0 %v2320, 4
      %v2616 = vpop.permute.xlu0 %2615
      %2617 = vrot.lane.b32.xlu0 %v2321, 4
      %v2618 = vpop.permute.xlu0 %2617
      %2619 = vrot.lane.b32.xlu0 %v2322, 4
      %v2620 = vpop.permute.xlu0 %2619
      %2621 = vrot.lane.b32.xlu0 %v2323, 4
      %v2622 = vpop.permute.xlu0 %2621
      %2623 = vrot.lane.b32.xlu0 %v2324, 4
      %v2624 = vpop.permute.xlu0 %2623
      %2625 = vrot.lane.b32.xlu0 %v2325, 4
      %v2626 = vpop.permute.xlu0 %2625
      %2627 = vrot.lane.b32.xlu0 %v2326, 4
      %v2628 = vpop.permute.xlu0 %2627
      %2629 = vrot.lane.b32.xlu0 %v2327, 4
      %v2630 = vpop.permute.xlu0 %2629
      %2631 = vrot.lane.b32.xlu0 %v2328, 4
      %v2632 = vpop.permute.xlu0 %2631
      %2633 = vrot.lane.b32.xlu0 %v2329, 4
      %v2634 = vpop.permute.xlu0 %2633
      %2635 = vrot.lane.b32.xlu0 %v2330, 4
      %v2636 = vpop.permute.xlu0 %2635
      %2637 = vrot.lane.b32.xlu0 %v2331, 4
      %v2638 = vpop.permute.xlu0 %2637
      %2639 = vrot.lane.b32.xlu0 %v2332, 4
      %v2640 = vpop.permute.xlu0 %2639
      %2641 = vrot.lane.b32.xlu0 %v2333, 4
      %v2642 = vpop.permute.xlu0 %2641
      %2643 = vrot.lane.b32.xlu0 %v2334, 4
      %v2644 = vpop.permute.xlu0 %2643
      %2645 = vrot.lane.b32.xlu0 %v2335, 4
      %v2646 = vpop.permute.xlu0 %2645
      %2647 = vrot.lane.b32.xlu0 %v2336, 4
      %v2648 = vpop.permute.xlu0 %2647
      %2649 = vrot.lane.b32.xlu0 %v2337, 4
      %v2650 = vpop.permute.xlu0 %2649
      %2651 = vrot.lane.b32.xlu0 %v2338, 4
      %v2652 = vpop.permute.xlu0 %2651
      %2653 = vrot.lane.b32.xlu0 %v2339, 4
      %v2654 = vpop.permute.xlu0 %2653
      %2655 = vrot.lane.b32.xlu0 %v2340, 4
      %v2656 = vpop.permute.xlu0 %2655
      %2657 = vrot.lane.b32.xlu0 %v2341, 4
      %v2658 = vpop.permute.xlu0 %2657
      %2659 = vrot.lane.b32.xlu0 %v2342, 4
      %v2660 = vpop.permute.xlu0 %2659
      %2661 = vrot.lane.b32.xlu0 %v2343, 4
      %v2662 = vpop.permute.xlu0 %2661
      %2663 = vrot.lane.b32.xlu0 %v2344, 4
      %v2664 = vpop.permute.xlu0 %2663
      %2665 = vrot.lane.b32.xlu0 %v2345, 4
      %v2666 = vpop.permute.xlu0 %2665
      %2731 = vrot.lane.b32.xlu0 %v2346, 8
      %v2732 = vpop.permute.xlu0 %2731
      %2733 = vrot.lane.b32.xlu0 %v2347, 8
      %v2734 = vpop.permute.xlu0 %2733
      %2735 = vrot.lane.b32.xlu0 %v2348, 8
      %v2736 = vpop.permute.xlu0 %2735
      %2737 = vrot.lane.b32.xlu0 %v2349, 8
      %v2738 = vpop.permute.xlu0 %2737
      %2739 = vrot.lane.b32.xlu0 %v2350, 8
      %v2740 = vpop.permute.xlu0 %2739
      %2741 = vrot.lane.b32.xlu0 %v2351, 8
      %v2742 = vpop.permute.xlu0 %2741
      %2743 = vrot.lane.b32.xlu0 %v2352, 8
      %v2744 = vpop.permute.xlu0 %2743
      %2745 = vrot.lane.b32.xlu0 %v2353, 8
      %v2746 = vpop.permute.xlu0 %2745
      %2747 = vrot.lane.b32.xlu0 %v2354, 8
      %v2748 = vpop.permute.xlu0 %2747
      %2749 = vrot.lane.b32.xlu0 %v2355, 8
      %v2750 = vpop.permute.xlu0 %2749
      %2751 = vrot.lane.b32.xlu0 %v2356, 8
      %v2752 = vpop.permute.xlu0 %2751
      %2753 = vrot.lane.b32.xlu0 %v2357, 8
      %v2754 = vpop.permute.xlu0 %2753
      %2755 = vrot.lane.b32.xlu0 %v2358, 8
      %v2756 = vpop.permute.xlu0 %2755
      %2757 = vrot.lane.b32.xlu0 %v2359, 8
      %v2758 = vpop.permute.xlu0 %2757
      %2759 = vrot.lane.b32.xlu0 %v2360, 8
      %v2760 = vpop.permute.xlu0 %2759
      %2761 = vrot.lane.b32.xlu0 %v2361, 8
      %v2762 = vpop.permute.xlu0 %2761
      %2763 = vrot.lane.b32.xlu0 %v2362, 8
      %v2764 = vpop.permute.xlu0 %2763
      %2765 = vrot.lane.b32.xlu0 %v2363, 8
      %v2766 = vpop.permute.xlu0 %2765
      %2767 = vrot.lane.b32.xlu0 %v2364, 8
      %v2768 = vpop.permute.xlu0 %2767
      %2769 = vrot.lane.b32.xlu0 %v2365, 8
      %v2770 = vpop.permute.xlu0 %2769
      %2771 = vrot.lane.b32.xlu0 %v2366, 8
      %v2772 = vpop.permute.xlu0 %2771
      %2773 = vrot.lane.b32.xlu0 %v2367, 8
      %v2774 = vpop.permute.xlu0 %2773
      %2775 = vrot.lane.b32.xlu0 %v2368, 8
      %v2776 = vpop.permute.xlu0 %2775
      %2777 = vrot.lane.b32.xlu0 %v2369, 8
      %v2778 = vpop.permute.xlu0 %2777
      %2779 = vrot.lane.b32.xlu0 %v2370, 8
      %v2780 = vpop.permute.xlu0 %2779
      %2781 = vrot.lane.b32.xlu0 %v2371, 8
      %v2782 = vpop.permute.xlu0 %2781
      %2783 = vrot.lane.b32.xlu0 %v2372, 8
      %v2784 = vpop.permute.xlu0 %2783
      %2785 = vrot.lane.b32.xlu0 %v2373, 8
      %v2786 = vpop.permute.xlu0 %2785
      %2787 = vrot.lane.b32.xlu0 %v2374, 8
      %v2788 = vpop.permute.xlu0 %2787
      %2789 = vrot.lane.b32.xlu0 %v2375, 8
      %v2790 = vpop.permute.xlu0 %2789
      %2791 = vrot.lane.b32.xlu0 %v2376, 8
      %v2792 = vpop.permute.xlu0 %2791
      %2793 = vrot.lane.b32.xlu0 %v2377, 8
      %v2794 = vpop.permute.xlu0 %2793
      %2859 = vrot.lane.b32.xlu0 %v2378, 12
      %v2860 = vpop.permute.xlu0 %2859
      %2861 = vrot.lane.b32.xlu0 %v2379, 12
      %v2862 = vpop.permute.xlu0 %2861
      %2863 = vrot.lane.b32.xlu0 %v2380, 12
      %v2864 = vpop.permute.xlu0 %2863
      %2865 = vrot.lane.b32.xlu0 %v2381, 12
      %v2866 = vpop.permute.xlu0 %2865
      %2867 = vrot.lane.b32.xlu0 %v2382, 12
      %v2868 = vpop.permute.xlu0 %2867
      %2869 = vrot.lane.b32.xlu0 %v2383, 12
      %v2870 = vpop.permute.xlu0 %2869
      %2871 = vrot.lane.b32.xlu0 %v2384, 12
      %v2872 = vpop.permute.xlu0 %2871
      %2873 = vrot.lane.b32.xlu0 %v2385, 12
      %v2874 = vpop.permute.xlu0 %2873
      %2875 = vrot.lane.b32.xlu0 %v2386, 12
      %v2876 = vpop.permute.xlu0 %2875
      %2877 = vrot.lane.b32.xlu0 %v2387, 12
      %v2878 = vpop.permute.xlu0 %2877
      %2879 = vrot.lane.b32.xlu0 %v2388, 12
      %v2880 = vpop.permute.xlu0 %2879
      %2881 = vrot.lane.b32.xlu0 %v2389, 12
      %v2882 = vpop.permute.xlu0 %2881
      %2883 = vrot.lane.b32.xlu0 %v2390, 12
      %v2884 = vpop.permute.xlu0 %2883
      %2885 = vrot.lane.b32.xlu0 %v2391, 12
      %v2886 = vpop.permute.xlu0 %2885
      %2887 = vrot.lane.b32.xlu0 %v2392, 12
      %v2888 = vpop.permute.xlu0 %2887
      %2889 = vrot.lane.b32.xlu0 %v2393, 12
      %v2890 = vpop.permute.xlu0 %2889
      %2891 = vrot.lane.b32.xlu0 %v2394, 12
      %v2892 = vpop.permute.xlu0 %2891
      %2893 = vrot.lane.b32.xlu0 %v2395, 12
      %v2894 = vpop.permute.xlu0 %2893
      %2895 = vrot.lane.b32.xlu0 %v2396, 12
      %v2896 = vpop.permute.xlu0 %2895
      %2897 = vrot.lane.b32.xlu0 %v2397, 12
      %v2898 = vpop.permute.xlu0 %2897
      %2899 = vrot.lane.b32.xlu0 %v2398, 12
      %v2900 = vpop.permute.xlu0 %2899
      %2901 = vrot.lane.b32.xlu0 %v2399, 12
      %v2902 = vpop.permute.xlu0 %2901
      %2903 = vrot.lane.b32.xlu0 %v2400, 12
      %v2904 = vpop.permute.xlu0 %2903
      %2905 = vrot.lane.b32.xlu0 %v2401, 12
      %v2906 = vpop.permute.xlu0 %2905
      %2907 = vrot.lane.b32.xlu0 %v2402, 12
      %v2908 = vpop.permute.xlu0 %2907
      %2909 = vrot.lane.b32.xlu0 %v2403, 12
      %v2910 = vpop.permute.xlu0 %2909
      %2911 = vrot.lane.b32.xlu0 %v2404, 12
      %v2912 = vpop.permute.xlu0 %2911
      %2913 = vrot.lane.b32.xlu0 %v2405, 12
      %v2914 = vpop.permute.xlu0 %2913
      %2915 = vrot.lane.b32.xlu0 %v2406, 12
      %v2916 = vpop.permute.xlu0 %2915
      %2917 = vrot.lane.b32.xlu0 %v2407, 12
      %v2918 = vpop.permute.xlu0 %2917
      %2919 = vrot.lane.b32.xlu0 %v2408, 12
      %v2920 = vpop.permute.xlu0 %2919
      %2921 = vrot.lane.b32.xlu0 %v2409, 12
      %v2922 = vpop.permute.xlu0 %2921
      %2987 = vrot.lane.b32.xlu0 %v2410, 16
      %v2988 = vpop.permute.xlu0 %2987
      %2989 = vrot.lane.b32.xlu0 %v2411, 16
      %v2990 = vpop.permute.xlu0 %2989
      %2991 = vrot.lane.b32.xlu0 %v2412, 16
      %v2992 = vpop.permute.xlu0 %2991
      %2993 = vrot.lane.b32.xlu0 %v2413, 16
      %v2994 = vpop.permute.xlu0 %2993
      %2995 = vrot.lane.b32.xlu0 %v2414, 16
      %v2996 = vpop.permute.xlu0 %2995
      %2997 = vrot.lane.b32.xlu0 %v2415, 16
      %v2998 = vpop.permute.xlu0 %2997
      %2999 = vrot.lane.b32.xlu0 %v2416, 16
      %v3000 = vpop.permute.xlu0 %2999
      %3001 = vrot.lane.b32.xlu0 %v2417, 16
      %v3002 = vpop.permute.xlu0 %3001
      %3003 = vrot.lane.b32.xlu0 %v2418, 16
      %v3004 = vpop.permute.xlu0 %3003
      %3005 = vrot.lane.b32.xlu0 %v2419, 16
      %v3006 = vpop.permute.xlu0 %3005
      %3007 = vrot.lane.b32.xlu0 %v2420, 16
      %v3008 = vpop.permute.xlu0 %3007
      %3009 = vrot.lane.b32.xlu0 %v2421, 16
      %v3010 = vpop.permute.xlu0 %3009
      %3011 = vrot.lane.b32.xlu0 %v2422, 16
      %v3012 = vpop.permute.xlu0 %3011
      %3013 = vrot.lane.b32.xlu0 %v2423, 16
      %v3014 = vpop.permute.xlu0 %3013
      %3015 = vrot.lane.b32.xlu0 %v2424, 16
      %v3016 = vpop.permute.xlu0 %3015
      %3017 = vrot.lane.b32.xlu0 %v2425, 16
      %v3018 = vpop.permute.xlu0 %3017
      %3019 = vrot.lane.b32.xlu0 %v2426, 16
      %v3020 = vpop.permute.xlu0 %3019
      %3021 = vrot.lane.b32.xlu0 %v2427, 16
      %v3022 = vpop.permute.xlu0 %3021
      %3023 = vrot.lane.b32.xlu0 %v2428, 16
      %v3024 = vpop.permute.xlu0 %3023
      %3025 = vrot.lane.b32.xlu0 %v2429, 16
      %v3026 = vpop.permute.xlu0 %3025
      %3027 = vrot.lane.b32.xlu0 %v2430, 16
      %v3028 = vpop.permute.xlu0 %3027
      %3029 = vrot.lane.b32.xlu0 %v2431, 16
      %v3030 = vpop.permute.xlu0 %3029
      %3031 = vrot.lane.b32.xlu0 %v2432, 16
      %v3032 = vpop.permute.xlu0 %3031
      %3033 = vrot.lane.b32.xlu0 %v2433, 16
      %v3034 = vpop.permute.xlu0 %3033
      %3035 = vrot.lane.b32.xlu0 %v2434, 16
      %v3036 = vpop.permute.xlu0 %3035
      %3037 = vrot.lane.b32.xlu0 %v2435, 16
      %v3038 = vpop.permute.xlu0 %3037
      %3039 = vrot.lane.b32.xlu0 %v2436, 16
      %v3040 = vpop.permute.xlu0 %3039
      %3041 = vrot.lane.b32.xlu0 %v2437, 16
      %v3042 = vpop.permute.xlu0 %3041
      %3043 = vrot.lane.b32.xlu0 %v2438, 16
      %v3044 = vpop.permute.xlu0 %3043
      %3045 = vrot.lane.b32.xlu0 %v2439, 16
      %v3046 = vpop.permute.xlu0 %3045
      %3047 = vrot.lane.b32.xlu0 %v2440, 16
      %v3048 = vpop.permute.xlu0 %3047
      %3049 = vrot.lane.b32.xlu0 %v2441, 16
      %v3050 = vpop.permute.xlu0 %3049
      %3115 = vrot.lane.b32.xlu0 %v2442, 20
      %v3116 = vpop.permute.xlu0 %3115
      %3117 = vrot.lane.b32.xlu0 %v2443, 20
      %v3118 = vpop.permute.xlu0 %3117
      %3119 = vrot.lane.b32.xlu0 %v2444, 20
      %v3120 = vpop.permute.xlu0 %3119
      %3121 = vrot.lane.b32.xlu0 %v2445, 20
      %v3122 = vpop.permute.xlu0 %3121
      %3123 = vrot.lane.b32.xlu0 %v2446, 20
      %v3124 = vpop.permute.xlu0 %3123
      %3125 = vrot.lane.b32.xlu0 %v2447, 20
      %v3126 = vpop.permute.xlu0 %3125
      %3127 = vrot.lane.b32.xlu0 %v2448, 20
      %v3128 = vpop.permute.xlu0 %3127
      %3129 = vrot.lane.b32.xlu0 %v2449, 20
      %v3130 = vpop.permute.xlu0 %3129
      %3131 = vrot.lane.b32.xlu0 %v2450, 20
      %v3132 = vpop.permute.xlu0 %3131
      %3133 = vrot.lane.b32.xlu0 %v2451, 20
      %v3134 = vpop.permute.xlu0 %3133
      %3135 = vrot.lane.b32.xlu0 %v2452, 20
      %v3136 = vpop.permute.xlu0 %3135
      %3137 = vrot.lane.b32.xlu0 %v2453, 20
      %v3138 = vpop.permute.xlu0 %3137
      %3139 = vrot.lane.b32.xlu0 %v2454, 20
      %v3140 = vpop.permute.xlu0 %3139
      %3141 = vrot.lane.b32.xlu0 %v2455, 20
      %v3142 = vpop.permute.xlu0 %3141
      %3143 = vrot.lane.b32.xlu0 %v2456, 20
      %v3144 = vpop.permute.xlu0 %3143
      %3145 = vrot.lane.b32.xlu0 %v2457, 20
      %v3146 = vpop.permute.xlu0 %3145
      %3147 = vrot.lane.b32.xlu0 %v2458, 20
      %v3148 = vpop.permute.xlu0 %3147
      %3149 = vrot.lane.b32.xlu0 %v2459, 20
      %v3150 = vpop.permute.xlu0 %3149
      %3151 = vrot.lane.b32.xlu0 %v2460, 20
      %v3152 = vpop.permute.xlu0 %3151
      %3153 = vrot.lane.b32.xlu0 %v2461, 20
      %v3154 = vpop.permute.xlu0 %3153
      %3155 = vrot.lane.b32.xlu0 %v2462, 20
      %v3156 = vpop.permute.xlu0 %3155
      %3157 = vrot.lane.b32.xlu0 %v2463, 20
      %v3158 = vpop.permute.xlu0 %3157
      %3159 = vrot.lane.b32.xlu0 %v2464, 20
      %v3160 = vpop.permute.xlu0 %3159
      %3161 = vrot.lane.b32.xlu0 %v2465, 20
      %v3162 = vpop.permute.xlu0 %3161
      %3163 = vrot.lane.b32.xlu0 %v2466, 20
      %v3164 = vpop.permute.xlu0 %3163
      %3165 = vrot.lane.b32.xlu0 %v2467, 20
      %v3166 = vpop.permute.xlu0 %3165
      %3167 = vrot.lane.b32.xlu0 %v2468, 20
      %v3168 = vpop.permute.xlu0 %3167
      %3169 = vrot.lane.b32.xlu0 %v2469, 20
      %v3170 = vpop.permute.xlu0 %3169
      %3171 = vrot.lane.b32.xlu0 %v2470, 20
      %v3172 = vpop.permute.xlu0 %3171
      %3173 = vrot.lane.b32.xlu0 %v2471, 20
      %v3174 = vpop.permute.xlu0 %3173
      %3175 = vrot.lane.b32.xlu0 %v2472, 20
      %v3176 = vpop.permute.xlu0 %3175
      %3177 = vrot.lane.b32.xlu0 %v2473, 20
      %v3178 = vpop.permute.xlu0 %3177
      %3243 = vrot.lane.b32.xlu0 %v2475, 24
      %v3244 = vpop.permute.xlu0 %3243
      %3245 = vrot.lane.b32.xlu0 %v2476, 24
      %v3246 = vpop.permute.xlu0 %3245
      %3247 = vrot.lane.b32.xlu0 %v2477, 24
      %v3248 = vpop.permute.xlu0 %3247
      %3249 = vrot.lane.b32.xlu0 %v2478, 24
      %v3250 = vpop.permute.xlu0 %3249
      %3251 = vrot.lane.b32.xlu0 %v2479, 24
      %v3252 = vpop.permute.xlu0 %3251
      %3253 = vrot.lane.b32.xlu0 %v2480, 24
      %v3254 = vpop.permute.xlu0 %3253
      %3255 = vrot.lane.b32.xlu0 %v2481, 24
      %v3256 = vpop.permute.xlu0 %3255
      %3257 = vrot.lane.b32.xlu0 %v2482, 24
      %v3258 = vpop.permute.xlu0 %3257
      %3259 = vrot.lane.b32.xlu0 %v2483, 24
      %v3260 = vpop.permute.xlu0 %3259
      %3261 = vrot.lane.b32.xlu0 %v2484, 24
      %v3262 = vpop.permute.xlu0 %3261
      %3263 = vrot.lane.b32.xlu0 %v2485, 24
      %v3264 = vpop.permute.xlu0 %3263
      %3265 = vrot.lane.b32.xlu0 %v2486, 24
      %v3266 = vpop.permute.xlu0 %3265
      %3267 = vrot.lane.b32.xlu0 %v2487, 24
      %v3268 = vpop.permute.xlu0 %3267
      %3269 = vrot.lane.b32.xlu0 %v2488, 24
      %v3270 = vpop.permute.xlu0 %3269
      %3271 = vrot.lane.b32.xlu0 %v2489, 24
      %v3272 = vpop.permute.xlu0 %3271
      %3273 = vrot.lane.b32.xlu0 %v2490, 24
      %v3274 = vpop.permute.xlu0 %3273
      %3275 = vrot.lane.b32.xlu0 %v2491, 24
      %v3276 = vpop.permute.xlu0 %3275
      %3277 = vrot.lane.b32.xlu0 %v2492, 24
      %v3278 = vpop.permute.xlu0 %3277
      %3279 = vrot.lane.b32.xlu0 %v2493, 24
      %v3280 = vpop.permute.xlu0 %3279
      %3281 = vrot.lane.b32.xlu0 %v2494, 24
      %v3282 = vpop.permute.xlu0 %3281
      %3283 = vrot.lane.b32.xlu0 %v2495, 24
      %v3284 = vpop.permute.xlu0 %3283
      %3285 = vrot.lane.b32.xlu0 %v2496, 24
      %v3286 = vpop.permute.xlu0 %3285
      %3287 = vrot.lane.b32.xlu0 %v2497, 24
      %v3288 = vpop.permute.xlu0 %3287
      %3289 = vrot.lane.b32.xlu0 %v2498, 24
      %v3290 = vpop.permute.xlu0 %3289
      %3291 = vrot.lane.b32.xlu0 %v2499, 24
      %v3292 = vpop.permute.xlu0 %3291
      %3293 = vrot.lane.b32.xlu0 %v2500, 24
      %v3294 = vpop.permute.xlu0 %3293
      %3295 = vrot.lane.b32.xlu0 %v2501, 24
      %v3296 = vpop.permute.xlu0 %3295
      %3297 = vrot.lane.b32.xlu0 %v2502, 24
      %v3298 = vpop.permute.xlu0 %3297
      %3299 = vrot.lane.b32.xlu0 %v2503, 24
      %v3300 = vpop.permute.xlu0 %3299
      %3301 = vrot.lane.b32.xlu0 %v2504, 24
      %v3302 = vpop.permute.xlu0 %3301
      %3303 = vrot.lane.b32.xlu0 %v2505, 24
      %v3304 = vpop.permute.xlu0 %3303
      %3305 = vrot.lane.b32.xlu0 %v2506, 24
      %v3306 = vpop.permute.xlu0 %3305
      %3371 = vrot.lane.b32.xlu0 %v2507, 28
      %v3372 = vpop.permute.xlu0 %3371
      %3373 = vrot.lane.b32.xlu0 %v2508, 28
      %v3374 = vpop.permute.xlu0 %3373
      %3375 = vrot.lane.b32.xlu0 %v2509, 28
      %v3376 = vpop.permute.xlu0 %3375
      %3377 = vrot.lane.b32.xlu0 %v2510, 28
      %v3378 = vpop.permute.xlu0 %3377
      %3379 = vrot.lane.b32.xlu0 %v2511, 28
      %v3380 = vpop.permute.xlu0 %3379
      %3381 = vrot.lane.b32.xlu0 %v2512, 28
      %v3382 = vpop.permute.xlu0 %3381
      %3383 = vrot.lane.b32.xlu0 %v2513, 28
      %v3384 = vpop.permute.xlu0 %3383
      %3385 = vrot.lane.b32.xlu0 %v2514, 28
      %v3386 = vpop.permute.xlu0 %3385
      %3387 = vrot.lane.b32.xlu0 %v2515, 28
      %v3388 = vpop.permute.xlu0 %3387
      %3389 = vrot.lane.b32.xlu0 %v2516, 28
      %v3390 = vpop.permute.xlu0 %3389
      %3391 = vrot.lane.b32.xlu0 %v2517, 28
      %v3392 = vpop.permute.xlu0 %3391
      %3393 = vrot.lane.b32.xlu0 %v2518, 28
      %v3394 = vpop.permute.xlu0 %3393
      %3395 = vrot.lane.b32.xlu0 %v2519, 28
      %v3396 = vpop.permute.xlu0 %3395
      %3397 = vrot.lane.b32.xlu0 %v2520, 28
      %v3398 = vpop.permute.xlu0 %3397
      %3399 = vrot.lane.b32.xlu0 %v2521, 28
      %v3400 = vpop.permute.xlu0 %3399
      %3401 = vrot.lane.b32.xlu0 %v2522, 28
      %v3402 = vpop.permute.xlu0 %3401
      %3403 = vrot.lane.b32.xlu0 %v2523, 28
      %v3404 = vpop.permute.xlu0 %3403
      %3405 = vrot.lane.b32.xlu0 %v2524, 28
      %v3406 = vpop.permute.xlu0 %3405
      %3407 = vrot.lane.b32.xlu0 %v2525, 28
      %v3408 = vpop.permute.xlu0 %3407
      %3409 = vrot.lane.b32.xlu0 %v2526, 28
      %v3410 = vpop.permute.xlu0 %3409
      %3411 = vrot.lane.b32.xlu0 %v2527, 28
      %v3412 = vpop.permute.xlu0 %3411
      %3413 = vrot.lane.b32.xlu0 %v2528, 28
      %v3414 = vpop.permute.xlu0 %3413
      %3415 = vrot.lane.b32.xlu0 %v2529, 28
      %v3416 = vpop.permute.xlu0 %3415
      %3417 = vrot.lane.b32.xlu0 %v2530, 28
      %v3418 = vpop.permute.xlu0 %3417
      %3419 = vrot.lane.b32.xlu0 %v2531, 28
      %v3420 = vpop.permute.xlu0 %3419
      %3421 = vrot.lane.b32.xlu0 %v2532, 28
      %v3422 = vpop.permute.xlu0 %3421
      %3423 = vrot.lane.b32.xlu0 %v2533, 28
      %v3424 = vpop.permute.xlu0 %3423
      %3425 = vrot.lane.b32.xlu0 %v2534, 28
      %v3426 = vpop.permute.xlu0 %3425
      %3427 = vrot.lane.b32.xlu0 %v2535, 28
      %v3428 = vpop.permute.xlu0 %3427
      %3429 = vrot.lane.b32.xlu0 %v2536, 28
      %v3430 = vpop.permute.xlu0 %3429
      %3431 = vrot.lane.b32.xlu0 %v2537, 28
      %v3432 = vpop.permute.xlu0 %3431
      %3433 = vrot.lane.b32.xlu0 %v2538, 28
      %v3434 = vpop.permute.xlu0 %3433
      %3499 = vrot.lane.b32.xlu0 %v2539, 32
      %v3500 = vpop.permute.xlu0 %3499
      %3501 = vrot.lane.b32.xlu0 %v2540, 32
      %v3502 = vpop.permute.xlu0 %3501
      %3503 = vrot.lane.b32.xlu0 %v2541, 32
      %v3504 = vpop.permute.xlu0 %3503
      %3505 = vrot.lane.b32.xlu0 %v2542, 32
      %v3506 = vpop.permute.xlu0 %3505
      %3507 = vrot.lane.b32.xlu0 %v2543, 32
      %v3508 = vpop.permute.xlu0 %3507
      %3509 = vrot.lane.b32.xlu0 %v2544, 32
      %v3510 = vpop.permute.xlu0 %3509
      %3511 = vrot.lane.b32.xlu0 %v2545, 32
      %v3512 = vpop.permute.xlu0 %3511
      %3513 = vrot.lane.b32.xlu0 %v2546, 32
      %v3514 = vpop.permute.xlu0 %3513
      %3515 = vrot.lane.b32.xlu0 %v2547, 32
      %v3516 = vpop.permute.xlu0 %3515
      %3517 = vrot.lane.b32.xlu0 %v2548, 32
      %v3518 = vpop.permute.xlu0 %3517
      %3519 = vrot.lane.b32.xlu0 %v2549, 32
      %v3520 = vpop.permute.xlu0 %3519
      %3521 = vrot.lane.b32.xlu0 %v2550, 32
      %v3522 = vpop.permute.xlu0 %3521
      %3523 = vrot.lane.b32.xlu0 %v2551, 32
      %v3524 = vpop.permute.xlu0 %3523
      %3525 = vrot.lane.b32.xlu0 %v2552, 32
      %v3526 = vpop.permute.xlu0 %3525
      %3527 = vrot.lane.b32.xlu0 %v2553, 32
      %v3528 = vpop.permute.xlu0 %3527
      %3529 = vrot.lane.b32.xlu0 %v2554, 32
      %v3530 = vpop.permute.xlu0 %3529
      %3531 = vrot.lane.b32.xlu0 %v2555, 32
      %v3532 = vpop.permute.xlu0 %3531
      %3533 = vrot.lane.b32.xlu0 %v2556, 32
      %v3534 = vpop.permute.xlu0 %3533
      %3535 = vrot.lane.b32.xlu0 %v2557, 32
      %v3536 = vpop.permute.xlu0 %3535
      %3537 = vrot.lane.b32.xlu0 %v2558, 32
      %v3538 = vpop.permute.xlu0 %3537
      %3539 = vrot.lane.b32.xlu0 %v2559, 32
      %v3540 = vpop.permute.xlu0 %3539
      %3541 = vrot.lane.b32.xlu0 %v2560, 32
      %v3542 = vpop.permute.xlu0 %3541
      %3543 = vrot.lane.b32.xlu0 %v2561, 32
      %v3544 = vpop.permute.xlu0 %3543
      %3545 = vrot.lane.b32.xlu0 %v2562, 32
      %v3546 = vpop.permute.xlu0 %3545
      %3547 = vrot.lane.b32.xlu0 %v2563, 32
      %v3548 = vpop.permute.xlu0 %3547
      %3549 = vrot.lane.b32.xlu0 %v2564, 32
      %v3550 = vpop.permute.xlu0 %3549
      %3551 = vrot.lane.b32.xlu0 %v2565, 32
      %v3552 = vpop.permute.xlu0 %3551
      %3553 = vrot.lane.b32.xlu0 %v2566, 32
      %v3554 = vpop.permute.xlu0 %3553
      %3555 = vrot.lane.b32.xlu0 %v2567, 32
      %v3556 = vpop.permute.xlu0 %3555
      %3557 = vrot.lane.b32.xlu0 %v2568, 32
      %v3558 = vpop.permute.xlu0 %3557
      %3559 = vrot.lane.b32.xlu0 %v2569, 32
      %v3560 = vpop.permute.xlu0 %3559
      %3561 = vrot.lane.b32.xlu0 %v2570, 32
      %v3562 = vpop.permute.xlu0 %3561
      %v3595 = vsel %vm230, %v2282, %v2604
      %v3596 = vsel %vm230, %v2283, %v2606
      %v3597 = vsel %vm230, %v2284, %v2608
      %v3598 = vsel %vm230, %v2285, %v2610
      %v3599 = vsel %vm230, %v2286, %v2612
      %v3600 = vsel %vm230, %v2287, %v2614
      %v3601 = vsel %vm230, %v2288, %v2616
      %v3602 = vsel %vm230, %v2289, %v2618
      %v3603 = vsel %vm230, %v2290, %v2620
      %v3604 = vsel %vm230, %v2291, %v2622
      %v3605 = vsel %vm230, %v2292, %v2624
      %v3606 = vsel %vm230, %v2293, %v2626
      %v3607 = vsel %vm230, %v2294, %v2628
      %v3608 = vsel %vm230, %v2295, %v2630
      %v3609 = vsel %vm230, %v2296, %v2632
      %v3610 = vsel %vm230, %v2297, %v2634
      %v3611 = vsel %vm230, %v2298, %v2636
      %v3612 = vsel %vm230, %v2299, %v2638
      %v3613 = vsel %vm230, %v2300, %v2640
      %v3614 = vsel %vm230, %v2301, %v2642
      %v3615 = vsel %vm230, %v2302, %v2644
      %v3616 = vsel %vm230, %v2303, %v2646
      %v3617 = vsel %vm230, %v2304, %v2648
      %v3618 = vsel %vm230, %v2305, %v2650
      %v3619 = vsel %vm230, %v2306, %v2652
      %v3620 = vsel %vm230, %v2307, %v2654
      %v3621 = vsel %vm230, %v2308, %v2656
      %v3622 = vsel %vm230, %v2309, %v2658
      %v3623 = vsel %vm230, %v2310, %v2660
      %v3624 = vsel %vm230, %v2311, %v2662
      %v3625 = vsel %vm230, %v2312, %v2664
      %v3626 = vsel %vm230, %v2313, %v2666
      %v3627 = vsel %vm1701, %v3595, %v2732
      %v3628 = vsel %vm1701, %v3596, %v2734
      %v3629 = vsel %vm1701, %v3597, %v2736
      %v3630 = vsel %vm1701, %v3598, %v2738
      %v3631 = vsel %vm1701, %v3599, %v2740
      %v3632 = vsel %vm1701, %v3600, %v2742
      %v3633 = vsel %vm1701, %v3601, %v2744
      %v3634 = vsel %vm1701, %v3602, %v2746
      %v3635 = vsel %vm1701, %v3603, %v2748
      %v3636 = vsel %vm1701, %v3604, %v2750
      %v3637 = vsel %vm1701, %v3605, %v2752
      %v3638 = vsel %vm1701, %v3606, %v2754
      %v3639 = vsel %vm1701, %v3607, %v2756
      %v3640 = vsel %vm1701, %v3608, %v2758
      %v3641 = vsel %vm1701, %v3609, %v2760
      %v3642 = vsel %vm1701, %v3610, %v2762
      %v3643 = vsel %vm1701, %v3611, %v2764
      %v3644 = vsel %vm1701, %v3612, %v2766
      %v3645 = vsel %vm1701, %v3613, %v2768
      %v3646 = vsel %vm1701, %v3614, %v2770
      %v3647 = vsel %vm1701, %v3615, %v2772
      %v3648 = vsel %vm1701, %v3616, %v2774
      %v3649 = vsel %vm1701, %v3617, %v2776
      %v3650 = vsel %vm1701, %v3618, %v2778
      %v3651 = vsel %vm1701, %v3619, %v2780
      %v3652 = vsel %vm1701, %v3620, %v2782
      %v3653 = vsel %vm1701, %v3621, %v2784
      %v3654 = vsel %vm1701, %v3622, %v2786
      %v3655 = vsel %vm1701, %v3623, %v2788
      %v3656 = vsel %vm1701, %v3624, %v2790
      %v3657 = vsel %vm1701, %v3625, %v2792
      %v3658 = vsel %vm1701, %v3626, %v2794
      %v3659 = vsel %vm1734, %v3627, %v2860
      %v3660 = vsel %vm1734, %v3628, %v2862
      %v3661 = vsel %vm1734, %v3629, %v2864
      %v3662 = vsel %vm1734, %v3630, %v2866
      %v3663 = vsel %vm1734, %v3631, %v2868
      %v3664 = vsel %vm1734, %v3632, %v2870
      %v3665 = vsel %vm1734, %v3633, %v2872
      %v3666 = vsel %vm1734, %v3634, %v2874
      %v3667 = vsel %vm1734, %v3635, %v2876
      %v3668 = vsel %vm1734, %v3636, %v2878
      %v3669 = vsel %vm1734, %v3637, %v2880
      %v3670 = vsel %vm1734, %v3638, %v2882
      %v3671 = vsel %vm1734, %v3639, %v2884
      %v3672 = vsel %vm1734, %v3640, %v2886
      %v3673 = vsel %vm1734, %v3641, %v2888
      %v3674 = vsel %vm1734, %v3642, %v2890
      %v3675 = vsel %vm1734, %v3643, %v2892
      %v3676 = vsel %vm1734, %v3644, %v2894
      %v3677 = vsel %vm1734, %v3645, %v2896
      %v3678 = vsel %vm1734, %v3646, %v2898
      %v3679 = vsel %vm1734, %v3647, %v2900
      %v3680 = vsel %vm1734, %v3648, %v2902
      %v3681 = vsel %vm1734, %v3649, %v2904
      %v3682 = vsel %vm1734, %v3650, %v2906
      %v3683 = vsel %vm1734, %v3651, %v2908
      %v3684 = vsel %vm1734, %v3652, %v2910
      %v3685 = vsel %vm1734, %v3653, %v2912
      %v3686 = vsel %vm1734, %v3654, %v2914
      %v3687 = vsel %vm1734, %v3655, %v2916
      %v3688 = vsel %vm1734, %v3656, %v2918
      %v3689 = vsel %vm1734, %v3657, %v2920
      %v3690 = vsel %vm1734, %v3658, %v2922
      %v3691 = vsel %vm1767, %v3659, %v2988
      %v3692 = vsel %vm1767, %v3660, %v2990
      %v3693 = vsel %vm1767, %v3661, %v2992
      %v3694 = vsel %vm1767, %v3662, %v2994
      %v3695 = vsel %vm1767, %v3663, %v2996
      %v3696 = vsel %vm1767, %v3664, %v2998
      %v3697 = vsel %vm1767, %v3665, %v3000
      %v3698 = vsel %vm1767, %v3666, %v3002
      %v3699 = vsel %vm1767, %v3667, %v3004
      %v3700 = vsel %vm1767, %v3668, %v3006
      %v3701 = vsel %vm1767, %v3669, %v3008
      %v3702 = vsel %vm1767, %v3670, %v3010
      %v3703 = vsel %vm1767, %v3671, %v3012
      %v3704 = vsel %vm1767, %v3672, %v3014
      %v3705 = vsel %vm1767, %v3673, %v3016
      %v3706 = vsel %vm1767, %v3674, %v3018
      %v3707 = vsel %vm1767, %v3675, %v3020
      %v3708 = vsel %vm1767, %v3676, %v3022
      %v3709 = vsel %vm1767, %v3677, %v3024
      %v3710 = vsel %vm1767, %v3678, %v3026
      %v3711 = vsel %vm1767, %v3679, %v3028
      %v3712 = vsel %vm1767, %v3680, %v3030
      %v3713 = vsel %vm1767, %v3681, %v3032
      %v3714 = vsel %vm1767, %v3682, %v3034
      %v3715 = vsel %vm1767, %v3683, %v3036
      %v3716 = vsel %vm1767, %v3684, %v3038
      %v3717 = vsel %vm1767, %v3685, %v3040
      %v3718 = vsel %vm1767, %v3686, %v3042
      %v3719 = vsel %vm1767, %v3687, %v3044
      %v3720 = vsel %vm1767, %v3688, %v3046
      %v3721 = vsel %vm1767, %v3689, %v3048
      %v3722 = vsel %vm1767, %v3690, %v3050
      %v3723 = vsel %vm1800, %v3691, %v3116
      %v3724 = vsel %vm1800, %v3692, %v3118
      %v3725 = vsel %vm1800, %v3693, %v3120
      %v3726 = vsel %vm1800, %v3694, %v3122
      %v3727 = vsel %vm1800, %v3695, %v3124
      %v3728 = vsel %vm1800, %v3696, %v3126
      %v3729 = vsel %vm1800, %v3697, %v3128
      %v3730 = vsel %vm1800, %v3698, %v3130
      %v3731 = vsel %vm1800, %v3699, %v3132
      %v3732 = vsel %vm1800, %v3700, %v3134
      %v3733 = vsel %vm1800, %v3701, %v3136
      %v3734 = vsel %vm1800, %v3702, %v3138
      %v3735 = vsel %vm1800, %v3703, %v3140
      %v3736 = vsel %vm1800, %v3704, %v3142
      %v3737 = vsel %vm1800, %v3705, %v3144
      %v3738 = vsel %vm1800, %v3706, %v3146
      %v3739 = vsel %vm1800, %v3707, %v3148
      %v3740 = vsel %vm1800, %v3708, %v3150
      %v3741 = vsel %vm1800, %v3709, %v3152
      %v3742 = vsel %vm1800, %v3710, %v3154
      %v3743 = vsel %vm1800, %v3711, %v3156
      %v3744 = vsel %vm1800, %v3712, %v3158
      %v3745 = vsel %vm1800, %v3713, %v3160
      %v3746 = vsel %vm1800, %v3714, %v3162
      %v3747 = vsel %vm1800, %v3715, %v3164
      %v3748 = vsel %vm1800, %v3716, %v3166
      %v3749 = vsel %vm1800, %v3717, %v3168
      %v3750 = vsel %vm1800, %v3718, %v3170
      %v3751 = vsel %vm1800, %v3719, %v3172
      %v3752 = vsel %vm1800, %v3720, %v3174
      %v3753 = vsel %vm1800, %v3721, %v3176
      %v3754 = vsel %vm1800, %v3722, %v3178
      %v3755 = vsel %vm1833, %v3723, %v3244
      %v3756 = vsel %vm1833, %v3724, %v3246
      %v3757 = vsel %vm1833, %v3725, %v3248
      %v3758 = vsel %vm1833, %v3726, %v3250
      %v3759 = vsel %vm1833, %v3727, %v3252
      %v3760 = vsel %vm1833, %v3728, %v3254
      %v3761 = vsel %vm1833, %v3729, %v3256
      %v3762 = vsel %vm1833, %v3730, %v3258
      %v3763 = vsel %vm1833, %v3731, %v3260
      %v3764 = vsel %vm1833, %v3732, %v3262
      %v3765 = vsel %vm1833, %v3733, %v3264
      %v3766 = vsel %vm1833, %v3734, %v3266
      %v3767 = vsel %vm1833, %v3735, %v3268
      %v3768 = vsel %vm1833, %v3736, %v3270
      %v3769 = vsel %vm1833, %v3737, %v3272
      %v3770 = vsel %vm1833, %v3738, %v3274
      %v3771 = vsel %vm1833, %v3739, %v3276
      %v3772 = vsel %vm1833, %v3740, %v3278
      %v3773 = vsel %vm1833, %v3741, %v3280
      %v3774 = vsel %vm1833, %v3742, %v3282
      %v3775 = vsel %vm1833, %v3743, %v3284
      %v3776 = vsel %vm1833, %v3744, %v3286
      %v3777 = vsel %vm1833, %v3745, %v3288
      %v3778 = vsel %vm1833, %v3746, %v3290
      %v3779 = vsel %vm1833, %v3747, %v3292
      %v3780 = vsel %vm1833, %v3748, %v3294
      %v3781 = vsel %vm1833, %v3749, %v3296
      %v3782 = vsel %vm1833, %v3750, %v3298
      %v3783 = vsel %vm1833, %v3751, %v3300
      %v3784 = vsel %vm1833, %v3752, %v3302
      %v3785 = vsel %vm1833, %v3753, %v3304
      %v3786 = vsel %vm1833, %v3754, %v3306
      %v3787 = vsel %vm1866, %v3755, %v3372
      %v3788 = vsel %vm1866, %v3756, %v3374
      %v3789 = vsel %vm1866, %v3757, %v3376
      %v3790 = vsel %vm1866, %v3758, %v3378
      %v3791 = vsel %vm1866, %v3759, %v3380
      %v3792 = vsel %vm1866, %v3760, %v3382
      %v3793 = vsel %vm1866, %v3761, %v3384
      %v3794 = vsel %vm1866, %v3762, %v3386
      %v3795 = vsel %vm1866, %v3763, %v3388
      %v3796 = vsel %vm1866, %v3764, %v3390
      %v3797 = vsel %vm1866, %v3765, %v3392
      %v3798 = vsel %vm1866, %v3766, %v3394
      %v3799 = vsel %vm1866, %v3767, %v3396
      %v3800 = vsel %vm1866, %v3768, %v3398
      %v3801 = vsel %vm1866, %v3769, %v3400
      %v3802 = vsel %vm1866, %v3770, %v3402
      %v3803 = vsel %vm1866, %v3771, %v3404
      %v3804 = vsel %vm1866, %v3772, %v3406
      %v3805 = vsel %vm1866, %v3773, %v3408
      %v3806 = vsel %vm1866, %v3774, %v3410
      %v3807 = vsel %vm1866, %v3775, %v3412
      %v3808 = vsel %vm1866, %v3776, %v3414
      %v3809 = vsel %vm1866, %v3777, %v3416
      %v3810 = vsel %vm1866, %v3778, %v3418
      %v3811 = vsel %vm1866, %v3779, %v3420
      %v3812 = vsel %vm1866, %v3780, %v3422
      %v3813 = vsel %vm1866, %v3781, %v3424
      %v3814 = vsel %vm1866, %v3782, %v3426
      %v3815 = vsel %vm1866, %v3783, %v3428
      %v3816 = vsel %vm1866, %v3784, %v3430
      %v3817 = vsel %vm1866, %v3785, %v3432
      %v3818 = vsel %vm1866, %v3786, %v3434
      %v3819 = vsel %vm1899, %v3787, %v3500
      %v3820 = vsel %vm1899, %v3788, %v3502
      %v3821 = vsel %vm1899, %v3789, %v3504
      %v3822 = vsel %vm1899, %v3790, %v3506
      %v3823 = vsel %vm1899, %v3791, %v3508
      %v3824 = vsel %vm1899, %v3792, %v3510
      %v3825 = vsel %vm1899, %v3793, %v3512
      %v3826 = vsel %vm1899, %v3794, %v3514
      %v3827 = vsel %vm1899, %v3795, %v3516
      %v3828 = vsel %vm1899, %v3796, %v3518
      %v3829 = vsel %vm1899, %v3797, %v3520
      %v3830 = vsel %vm1899, %v3798, %v3522
      %v3831 = vsel %vm1899, %v3799, %v3524
      %v3832 = vsel %vm1899, %v3800, %v3526
      %v3833 = vsel %vm1899, %v3801, %v3528
      %v3834 = vsel %vm1899, %v3802, %v3530
      %v3835 = vsel %vm1899, %v3803, %v3532
      %v3836 = vsel %vm1899, %v3804, %v3534
      %v3837 = vsel %vm1899, %v3805, %v3536
      %v3838 = vsel %vm1899, %v3806, %v3538
      %v3839 = vsel %vm1899, %v3807, %v3540
      %v3840 = vsel %vm1899, %v3808, %v3542
      %v3841 = vsel %vm1899, %v3809, %v3544
      %v3842 = vsel %vm1899, %v3810, %v3546
      %v3843 = vsel %vm1899, %v3811, %v3548
      %v3844 = vsel %vm1899, %v3812, %v3550
      %v3845 = vsel %vm1899, %v3813, %v3552
      %v3846 = vsel %vm1899, %v3814, %v3554
      %v3847 = vsel %vm1899, %v3815, %v3556
      %v3848 = vsel %vm1899, %v3816, %v3558
      %v3849 = vsel %vm1899, %v3817, %v3560
      %v3850 = vsel %vm1899, %v3818, %v3562
      %v3851 = vld [vmem:[%s2] sm:$0xff]
      %v3852 = vld [vmem:[%s2 + $0x8] sm:$0xff]
      %v3853 = vld [vmem:[%s2 + $0x10] sm:$0xff]
      %v3854 = vld [vmem:[%s2 + $0x18] sm:$0xff]
      %v3855 = vld [vmem:[%s2 + $0x20] sm:$0xf]
      %v3857 = vsel %vm1937, %v3819, 0
      %v3860 = vsel %vm1937, %v3820, 0
      %v3863 = vsel %vm1937, %v3821, 0
      %v3866 = vsel %vm1937, %v3822, 0
      %v3869 = vsel %vm1937, %v3823, 0
      %v3872 = vsel %vm1937, %v3824, 0
      %v3875 = vsel %vm1937, %v3825, 0
      %v3878 = vsel %vm1937, %v3826, 0
      %v3881 = vsel %vm1937, %v3827, 0
      %v3884 = vsel %vm1937, %v3828, 0
      %v3887 = vsel %vm1937, %v3829, 0
      %v3890 = vsel %vm1937, %v3830, 0
      %v3893 = vsel %vm1937, %v3831, 0
      %v3896 = vsel %vm1937, %v3832, 0
      %v3899 = vsel %vm1937, %v3833, 0
      %v3902 = vsel %vm1937, %v3834, 0
      %v3905 = vsel %vm1937, %v3835, 0
      %v3908 = vsel %vm1937, %v3836, 0
      %v3911 = vsel %vm1937, %v3837, 0
      %v3914 = vsel %vm1937, %v3838, 0
      %v3917 = vsel %vm1937, %v3839, 0
      %v3920 = vsel %vm1937, %v3840, 0
      %v3923 = vsel %vm1937, %v3841, 0
      %v3926 = vsel %vm1937, %v3842, 0
      %v3929 = vsel %vm1937, %v3843, 0
      %v3932 = vsel %vm1937, %v3844, 0
      %v3935 = vsel %vm1937, %v3845, 0
      %v3938 = vsel %vm1937, %v3846, 0
      %v3941 = vsel %vm1937, %v3847, 0
      %v3944 = vsel %vm1937, %v3848, 0
      %v3947 = vsel %vm1937, %v3849, 0
      %v3950 = vsel %vm1937, %v3850, 0
      %v3953 = vsel %vm2034, %v3855, 0
      %3955 = vmatpush.msra.mxu0 0.0
      %3956 = vmatpush.msra.mxu0 0.0
      %3957 = vmatpush.msra.mxu0 0.0
      %3958 = vmatpush.msra.mxu0 0.0
      %3959 = vmatpush.msra.mxu0 0.0
      %3960 = vmatpush.msra.mxu0 0.0
      %3961 = vmatpush.msra.mxu0 0.0
      %3962 = vmatpush.msra.mxu0 0.0
      %3963 = vmatpush.msra.mxu0 0.0
      %3964 = vmatpush.msra.mxu0 0.0
      %3965 = vmatpush.msra.mxu0 0.0
      %3966 = vmatpush.msra.mxu0 %v3953
      %3967 = vmatpush.msra.mxu0 %v3854
      %3968 = vmatpush.msra.mxu0 %v3853
      %3969 = vmatpush.msra.mxu0 %v3852
      %3970 = vmatpush.msra.mxu0 %v3851
      %3971 = vmatmul.f32.gmra.mxu0 %v3857
      %v3972 = vpop.f32.mrf.mxu0
      %v3973 = vadd.f32 0.0, %v3972
      %3974 = vmatmul.f32.gmra.mxu0 %v3860
      %v3975 = vpop.f32.mrf.mxu0
      %v3976 = vadd.f32 0.0, %v3975
      %3977 = vmatmul.f32.gmra.mxu0 %v3863
      %v3978 = vpop.f32.mrf.mxu0
      %v3979 = vadd.f32 0.0, %v3978
      %3980 = vmatmul.f32.gmra.mxu0 %v3866
      %v3981 = vpop.f32.mrf.mxu0
      %v3982 = vadd.f32 0.0, %v3981
      %3983 = vmatmul.f32.gmra.mxu0 %v3869
      %v3984 = vpop.f32.mrf.mxu0
      %v3985 = vadd.f32 0.0, %v3984
      %3986 = vmatmul.f32.gmra.mxu0 %v3872
      %v3987 = vpop.f32.mrf.mxu0
      %v3988 = vadd.f32 0.0, %v3987
      %3989 = vmatmul.f32.gmra.mxu0 %v3875
      %v3990 = vpop.f32.mrf.mxu0
      %v3991 = vadd.f32 0.0, %v3990
      %3992 = vmatmul.f32.gmra.mxu0 %v3878
      %v3993 = vpop.f32.mrf.mxu0
      %v3994 = vadd.f32 0.0, %v3993
      %3995 = vmatmul.f32.gmra.mxu0 %v3881
      %v3996 = vpop.f32.mrf.mxu0
      %v3997 = vadd.f32 0.0, %v3996
      %3998 = vmatmul.f32.gmra.mxu0 %v3884
      %v3999 = vpop.f32.mrf.mxu0
      %v4000 = vadd.f32 0.0, %v3999
      %4001 = vmatmul.f32.gmra.mxu0 %v3887
      %v4002 = vpop.f32.mrf.mxu0
      %v4003 = vadd.f32 0.0, %v4002
      %4004 = vmatmul.f32.gmra.mxu0 %v3890
      %v4005 = vpop.f32.mrf.mxu0
      %v4006 = vadd.f32 0.0, %v4005
      %4007 = vmatmul.f32.gmra.mxu0 %v3893
      %v4008 = vpop.f32.mrf.mxu0
      %v4009 = vadd.f32 0.0, %v4008
      %4010 = vmatmul.f32.gmra.mxu0 %v3896
      %v4011 = vpop.f32.mrf.mxu0
      %v4012 = vadd.f32 0.0, %v4011
      %4013 = vmatmul.f32.gmra.mxu0 %v3899
      %v4014 = vpop.f32.mrf.mxu0
      %v4015 = vadd.f32 0.0, %v4014
      %4016 = vmatmul.f32.gmra.mxu0 %v3902
      %v4017 = vpop.f32.mrf.mxu0
      %v4018 = vadd.f32 0.0, %v4017
      %4019 = vmatmul.f32.gmra.mxu0 %v3905
      %v4020 = vpop.f32.mrf.mxu0
      %v4021 = vadd.f32 0.0, %v4020
      %4022 = vmatmul.f32.gmra.mxu0 %v3908
      %v4023 = vpop.f32.mrf.mxu0
      %v4024 = vadd.f32 0.0, %v4023
      %4025 = vmatmul.f32.gmra.mxu0 %v3911
      %v4026 = vpop.f32.mrf.mxu0
      %v4027 = vadd.f32 0.0, %v4026
      %4028 = vmatmul.f32.gmra.mxu0 %v3914
      %v4029 = vpop.f32.mrf.mxu0
      %v4030 = vadd.f32 0.0, %v4029
      %4031 = vmatmul.f32.gmra.mxu0 %v3917
      %v4032 = vpop.f32.mrf.mxu0
      %v4033 = vadd.f32 0.0, %v4032
      %4034 = vmatmul.f32.gmra.mxu0 %v3920
      %v4035 = vpop.f32.mrf.mxu0
      %v4036 = vadd.f32 0.0, %v4035
      %4037 = vmatmul.f32.gmra.mxu0 %v3923
      %v4038 = vpop.f32.mrf.mxu0
      %v4039 = vadd.f32 0.0, %v4038
      %4040 = vmatmul.f32.gmra.mxu0 %v3926
      %v4041 = vpop.f32.mrf.mxu0
      %v4042 = vadd.f32 0.0, %v4041
      %4043 = vmatmul.f32.gmra.mxu0 %v3929
      %v4044 = vpop.f32.mrf.mxu0
      %v4045 = vadd.f32 0.0, %v4044
      %4046 = vmatmul.f32.gmra.mxu0 %v3932
      %v4047 = vpop.f32.mrf.mxu0
      %v4048 = vadd.f32 0.0, %v4047
      %4049 = vmatmul.f32.gmra.mxu0 %v3935
      %v4050 = vpop.f32.mrf.mxu0
      %v4051 = vadd.f32 0.0, %v4050
      %4052 = vmatmul.f32.gmra.mxu0 %v3938
      %v4053 = vpop.f32.mrf.mxu0
      %v4054 = vadd.f32 0.0, %v4053
      %4055 = vmatmul.f32.gmra.mxu0 %v3941
      %v4056 = vpop.f32.mrf.mxu0
      %v4057 = vadd.f32 0.0, %v4056
      %4058 = vmatmul.f32.gmra.mxu0 %v3944
      %v4059 = vpop.f32.mrf.mxu0
      %v4060 = vadd.f32 0.0, %v4059
      %4061 = vmatmul.f32.gmra.mxu0 %v3947
      %v4062 = vpop.f32.mrf.mxu0
      %v4063 = vadd.f32 0.0, %v4062
      %4064 = vmatmul.f32.gmra.mxu0 %v3950
      %v4065 = vpop.f32.mrf.mxu0
      %v4066 = vadd.f32 0.0, %v4065
      %4067 = vdwg.mxu0
      %v4068 = vperm.slane %v354, 0
      %v4069 = vmul.f32 %v3973, %v4068
      %v4070 = vmul.f32 %v3976, %v4068
      %v4071 = vmul.f32 %v3979, %v4068
      %v4072 = vmul.f32 %v3982, %v4068
      %v4073 = vmul.f32 %v3985, %v4068
      %v4074 = vmul.f32 %v3988, %v4068
      %v4075 = vmul.f32 %v3991, %v4068
      %v4076 = vmul.f32 %v3994, %v4068
      %v4077 = vmul.f32 %v3997, %v4068
      %v4078 = vmul.f32 %v4000, %v4068
      %v4079 = vmul.f32 %v4003, %v4068
      %v4080 = vmul.f32 %v4006, %v4068
      %v4081 = vmul.f32 %v4009, %v4068
      %v4082 = vmul.f32 %v4012, %v4068
      %v4083 = vmul.f32 %v4015, %v4068
      %v4084 = vmul.f32 %v4018, %v4068
      %v4085 = vmul.f32 %v4021, %v4068
      %v4086 = vmul.f32 %v4024, %v4068
      %v4087 = vmul.f32 %v4027, %v4068
      %v4088 = vmul.f32 %v4030, %v4068
      %v4089 = vmul.f32 %v4033, %v4068
      %v4090 = vmul.f32 %v4036, %v4068
      %v4091 = vmul.f32 %v4039, %v4068
      %v4092 = vmul.f32 %v4042, %v4068
      %v4093 = vmul.f32 %v4045, %v4068
      %v4094 = vmul.f32 %v4048, %v4068
      %v4095 = vmul.f32 %v4051, %v4068
      %v4096 = vmul.f32 %v4054, %v4068
      %v4097 = vmul.f32 %v4057, %v4068
      %v4098 = vmul.f32 %v4060, %v4068
      %v4099 = vmul.f32 %v4063, %v4068
      %v4100 = vmul.f32 %v4066, %v4068
      %v4101 = vperm.slane %v355, 0
      %v4102 = vadd.f32 %v4069, %v4101
      %v4103 = vadd.f32 %v4070, %v4101
      %v4104 = vadd.f32 %v4071, %v4101
      %v4105 = vadd.f32 %v4072, %v4101
      %v4106 = vadd.f32 %v4073, %v4101
      %v4107 = vadd.f32 %v4074, %v4101
      %v4108 = vadd.f32 %v4075, %v4101
      %v4109 = vadd.f32 %v4076, %v4101
      %v4110 = vadd.f32 %v4077, %v4101
      %v4111 = vadd.f32 %v4078, %v4101
      %v4112 = vadd.f32 %v4079, %v4101
      %v4113 = vadd.f32 %v4080, %v4101
      %v4114 = vadd.f32 %v4081, %v4101
      %v4115 = vadd.f32 %v4082, %v4101
      %v4116 = vadd.f32 %v4083, %v4101
      %v4117 = vadd.f32 %v4084, %v4101
      %v4118 = vadd.f32 %v4085, %v4101
      %v4119 = vadd.f32 %v4086, %v4101
      %v4120 = vadd.f32 %v4087, %v4101
      %v4121 = vadd.f32 %v4088, %v4101
      %v4122 = vadd.f32 %v4089, %v4101
      %v4123 = vadd.f32 %v4090, %v4101
      %v4124 = vadd.f32 %v4091, %v4101
      %v4125 = vadd.f32 %v4092, %v4101
      %v4126 = vadd.f32 %v4093, %v4101
      %v4127 = vadd.f32 %v4094, %v4101
      %v4128 = vadd.f32 %v4095, %v4101
      %v4129 = vadd.f32 %v4096, %v4101
      %v4130 = vadd.f32 %v4097, %v4101
      %v4131 = vadd.f32 %v4098, %v4101
      %v4132 = vadd.f32 %v4099, %v4101
      %v4133 = vadd.f32 %v4100, %v4101
      %v4134 = vadd.f32 %v4102, %v198
      %v4135 = vadd.f32 %v4103, %v199
      %v4136 = vadd.f32 %v4104, %v200
      %v4137 = vadd.f32 %v4105, %v201
      %v4138 = vadd.f32 %v4106, %v202
      %v4139 = vadd.f32 %v4107, %v203
      %v4140 = vadd.f32 %v4108, %v204
      %v4141 = vadd.f32 %v4109, %v205
      %v4142 = vadd.f32 %v4110, %v206
      %v4143 = vadd.f32 %v4111, %v207
      %v4144 = vadd.f32 %v4112, %v208
      %v4145 = vadd.f32 %v4113, %v209
      %v4146 = vadd.f32 %v4114, %v210
      %v4147 = vadd.f32 %v4115, %v211
      %v4148 = vadd.f32 %v4116, %v212
      %v4149 = vadd.f32 %v4117, %v213
      %v4150 = vadd.f32 %v4118, %v214
      %v4151 = vadd.f32 %v4119, %v215
      %v4152 = vadd.f32 %v4120, %v216
      %v4153 = vadd.f32 %v4121, %v217
      %v4154 = vadd.f32 %v4122, %v218
      %v4155 = vadd.f32 %v4123, %v219
      %v4156 = vadd.f32 %v4124, %v220
      %v4157 = vadd.f32 %v4125, %v221
      %v4158 = vadd.f32 %v4126, %v222
      %v4159 = vadd.f32 %v4127, %v223
      %v4160 = vadd.f32 %v4128, %v224
      %v4161 = vadd.f32 %v4129, %v225
      %v4162 = vadd.f32 %v4130, %v226
      %v4163 = vadd.f32 %v4131, %v227
      %v4164 = vadd.f32 %v4132, %v228
      %v4165 = vadd.f32 %v4133, %v229
      %v4166 = vmax.f32 %v4134, 0.0
      %v4167 = vmax.f32 %v4135, 0.0
      %v4168 = vmax.f32 %v4136, 0.0
      %v4169 = vmax.f32 %v4137, 0.0
      %v4170 = vmax.f32 %v4138, 0.0
      %v4171 = vmax.f32 %v4139, 0.0
      %v4172 = vmax.f32 %v4140, 0.0
      %v4173 = vmax.f32 %v4141, 0.0
      %v4174 = vmax.f32 %v4142, 0.0
      %v4175 = vmax.f32 %v4143, 0.0
      %v4176 = vmax.f32 %v4144, 0.0
      %v4177 = vmax.f32 %v4145, 0.0
      %v4178 = vmax.f32 %v4146, 0.0
      %v4179 = vmax.f32 %v4147, 0.0
      %v4180 = vmax.f32 %v4148, 0.0
      %v4181 = vmax.f32 %v4149, 0.0
      %v4182 = vmax.f32 %v4150, 0.0
      %v4183 = vmax.f32 %v4151, 0.0
      %v4184 = vmax.f32 %v4152, 0.0
      %v4185 = vmax.f32 %v4153, 0.0
      %v4186 = vmax.f32 %v4154, 0.0
      %v4187 = vmax.f32 %v4155, 0.0
      %v4188 = vmax.f32 %v4156, 0.0
      %v4189 = vmax.f32 %v4157, 0.0
      %v4190 = vmax.f32 %v4158, 0.0
      %v4191 = vmax.f32 %v4159, 0.0
      %v4192 = vmax.f32 %v4160, 0.0
      %v4193 = vmax.f32 %v4161, 0.0
      %v4194 = vmax.f32 %v4162, 0.0
      %v4195 = vmax.f32 %v4163, 0.0
      %v4196 = vmax.f32 %v4164, 0.0
      %v4197 = vmax.f32 %v4165, 0.0
      %4198 = vst.msk [vmem:[%s197] sm:$0xff] %vm230, %v4166
      %4199 = vst.msk [vmem:[%s197 + $0x8] sm:$0xff] %vm230, %v4167
      %4200 = vst.msk [vmem:[%s197 + $0x10] sm:$0xff] %vm230, %v4168
      %4201 = vst.msk [vmem:[%s197 + $0x18] sm:$0xff] %vm230, %v4169
      %4202 = vst.msk [vmem:[%s197 + $0x20] sm:$0xff] %vm230, %v4170
      %4203 = vst.msk [vmem:[%s197 + $0x28] sm:$0xff] %vm230, %v4171
      %4204 = vst.msk [vmem:[%s197 + $0x30] sm:$0xff] %vm230, %v4172
      %4205 = vst.msk [vmem:[%s197 + $0x38] sm:$0xff] %vm230, %v4173
      %4206 = vst.msk [vmem:[%s197 + $0x40] sm:$0xff] %vm230, %v4174
      %4207 = vst.msk [vmem:[%s197 + $0x48] sm:$0xff] %vm230, %v4175
      %4208 = vst.msk [vmem:[%s197 + $0x50] sm:$0xff] %vm230, %v4176
      %4209 = vst.msk [vmem:[%s197 + $0x58] sm:$0xff] %vm230, %v4177
      %4210 = vst.msk [vmem:[%s197 + $0x60] sm:$0xff] %vm230, %v4178
      %4211 = vst.msk [vmem:[%s197 + $0x68] sm:$0xff] %vm230, %v4179
      %4212 = vst.msk [vmem:[%s197 + $0x70] sm:$0xff] %vm230, %v4180
      %4213 = vst.msk [vmem:[%s197 + $0x78] sm:$0xff] %vm230, %v4181
      %4214 = vst.msk [vmem:[%s197 + $0x80] sm:$0xff] %vm230, %v4182
      %4215 = vst.msk [vmem:[%s197 + $0x88] sm:$0xff] %vm230, %v4183
      %4216 = vst.msk [vmem:[%s197 + $0x90] sm:$0xff] %vm230, %v4184
      %4217 = vst.msk [vmem:[%s197 + $0x98] sm:$0xff] %vm230, %v4185
      %4218 = vst.msk [vmem:[%s197 + $0xa0] sm:$0xff] %vm230, %v4186
      %4219 = vst.msk [vmem:[%s197 + $0xa8] sm:$0xff] %vm230, %v4187
      %4220 = vst.msk [vmem:[%s197 + $0xb0] sm:$0xff] %vm230, %v4188
      %4221 = vst.msk [vmem:[%s197 + $0xb8] sm:$0xff] %vm230, %v4189
      %4222 = vst.msk [vmem:[%s197 + $0xc0] sm:$0xff] %vm230, %v4190
      %4223 = vst.msk [vmem:[%s197 + $0xc8] sm:$0xff] %vm230, %v4191
      %4224 = vst.msk [vmem:[%s197 + $0xd0] sm:$0xff] %vm230, %v4192
      %4225 = vst.msk [vmem:[%s197 + $0xd8] sm:$0xff] %vm230, %v4193
      %4226 = vst.msk [vmem:[%s197 + $0xe0] sm:$0xff] %vm230, %v4194
      %4227 = vst.msk [vmem:[%s197 + $0xe8] sm:$0xff] %vm230, %v4195
      %4228 = vst.msk [vmem:[%s197 + $0xf0] sm:$0xff] %vm230, %v4196
      %4229 = vst.msk [vmem:[%s197 + $0xf8] sm:$0xff] %vm230, %v4197
      %p4230 = scmp.lt.s32.totalorder %s15, 1
      %s4231 = scalar_select %p4230, %s15, 1
      %s4232 = smul.addr %s4231, 32
      %s4233 = smul.addr %s4232, 8
      %s4234 = scalar_lea.vmem %s4, %s4233
      // Predicated region
      $region37: #{tpu_custom_call.1} parent=35 // pred_check
        %p4235 = pneg %p122
      $region38: #{tpu_custom_call.1} parent=35 // pred_check_branch
        %4237 = sbr.rel (%p4235) target = $region40
      $region39: #{tpu_custom_call.1} parent=35 // pred_region
        _
      $region40: #{tpu_custom_call.1} parent=35 // pred_fallthru
        _
    $region36: #{tpu_custom_call.1} parent=5 // pred_fallthru
      _
    %p4238 = scmp.le.s32.totalorder 2, %s10
    // Predicated region
    $region41: #{tpu_custom_call.1} parent=5 // pred_check
      %p4239 = pneg %p4238
    $region42: #{tpu_custom_call.1} parent=5 // pred_check_branch
      %4241 = sbr.rel (%p4239) target = $region44
    $region43: #{tpu_custom_call.1} parent=5 // pred_region
      %s4242 = ssub.s32 %s10, 2
      // Predicated region
      $region45: #{tpu_custom_call.1} parent=43 // pred_check
        %p4243 = pneg %p128
      $region46: #{tpu_custom_call.1} parent=43 // pred_check_branch
        %4245 = sbr.rel (%p4243) target = $region48
      $region47: #{tpu_custom_call.1} parent=43 // pred_region
        %p4246 = scmp.lt.s32.totalorder %s16, 1
        %s4247 = scalar_select %p4246, %s16, 1
        %s4248 = smul.addr %s4247, 32
        %s4249 = smul.addr %s4248, 8
        %s4250 = scalar_lea.vmem %s4, %s4249
      $region48: #{tpu_custom_call.1} parent=43 // pred_fallthru
        _
    $region44: #{tpu_custom_call.1} parent=5 // pred_fallthru
      _
  $region6: #{tpu_custom_call.1} parent=0 // loop_footer
    %s14 = sadd.s32 1, %s10
  $region7: #{tpu_custom_call.1} parent=0 // loop_footer_branch
    %9 = sbr.rel target = $region3
  $region8: #{tpu_custom_call.1} parent=0 // loop_exit
    _

</llo_original>
